<compile_context>
chip_gen: v7x
topology: tpu7x:2x2x1
jax: 0.10.0
libtpu: 0.0.40
codegen_flags: <defaults>
</compile_context>

<pallas_src>
import jax
import jax.numpy as jnp
import numpy as np
from jax.experimental import pallas as pl
from jax.experimental.pallas import tpu as pltpu

LEAKY_SLOPE = 0.01  # torch.nn.functional.leaky_relu default
OUT_ROWS = 8        # sublane-aligned transposed-output rows (real logits: 0:2)


def _leaky(v):
    return jnp.where(v >= 0, v, LEAKY_SLOPE * v)


def reinforce_baseline_net_kernel(
    x_ref,      # [1, M, F]    bf16  packed node features (GB graphs)
    ah_ref,     # [1, M, M]    bf16  block-diag A_hat = A + I (0/1, exact)
    dinv_ref,   # [1, M, 1]    f32   per-node deg(A_hat)^{-1/2}
    wgcn_ref,   # [F, H]       bf16  GCNConv weight
    bgcn_ref,   # [1, H]       f32   GCNConv bias
    wcat_ref,   # [L, H, 6H]   bf16  per-layer [Wggc[l]@Wih | Whh]
    brz_ref,    # [1, 2H]      f32   b_ih[:2H] + b_hh[:2H]  (r|z gates)
    bin_ref,    # [1, H]       f32   b_ih[2H:]              (n gate, input)
    bhn_ref,    # [1, H]       f32   b_hh[2H:]              (n gate, hidden)
    w1_ref,     # [H, H]       bf16  lin1
    b1_ref,     # [1, H]       f32
    w2t_ref,    # [8, H]       bf16  lin2 transposed, rows 0:2 real
    b2_ref,     # [8, 1]       f32
    out_ref,    # [1, 8, M]    f32   transposed logits, rows 0:2 real
):
    bf16 = jnp.bfloat16
    f32 = jnp.float32
    H = b1_ref.shape[1]
    H3 = 3 * H

    x = x_ref[0]          # bf16 [M, F]
    a_hat = ah_ref[0]     # bf16 [M, M]
    dinv = dinv_ref[0]    # f32  [M, 1]

    # Hoisted gate biases (shared by every unrolled GatedGraphConv layer).
    b_rz = brz_ref[...]   # [1, 2H]
    b_in = bin_ref[...]   # [1, H]
    b_hn = bhn_ref[...]   # [1, H]

    # --- GCNConv + leaky_relu, normalization applied in-kernel ---
    #   h0 = leaky( D^-1/2 (A+I) D^-1/2 (X W) + b )
    xw = jnp.dot(x, wgcn_ref[...], preferred_element_type=f32)          # [M, H]
    xw_s = (dinv * xw).astype(bf16)
    h0 = _leaky(dinv * jnp.dot(a_hat, xw_s, preferred_element_type=f32)
                + bgcn_ref[...])

    # --- GatedGraphConv: L rounds of (fused projection, sum-aggregate, GRU) ---
    h = h0
    L = wcat_ref.shape[0]
    # NOTE: static unroll is fine at small L; switch to lax.fori_loop with a
    # dynamic wcat_ref[l] index if num_layers grows (vreg pressure).
    for l in range(L):
        # single h-side matmul: [M,H] @ [H,6H] -> (h@Wggc@Wih) | (h@Whh)
        p = jnp.dot(h.astype(bf16), wcat_ref[l], preferred_element_type=f32)
        pf = p[:, :H3].astype(bf16)
        # sum aggregation over raw A (= A_hat - I):  A @ pf = A_hat @ pf - pf
        gi = jnp.dot(a_hat, pf, preferred_element_type=f32) - pf.astype(f32)
        gh = p[:, H3:]                      # h @ Whh (biases added per-slice)

        # r|z in one fused sigmoid slab so gi/gh retire except the n-slices.
        rz = jax.nn.sigmoid(gi[:, :2 * H] + gh[:, :2 * H] + b_rz)
        r = rz[:, :H]
        z = rz[:, H:]
        n = jnp.tanh(gi[:, 2 * H:] + b_in + r * (gh[:, 2 * H:] + b_hn))
        h = (1.0 - z) * n + z * h

    # --- residual + MLP head ---
    xr = _leaky(h) + h0
    y = _leaky(jnp.dot(xr.astype(bf16), w1_ref[...],
                       preferred_element_type=f32) + b1_ref[...])
    # lin2 computed transposed: store dense 128-lane rows instead of a
    # 128-lane-padded [M,128] slab (64 KB -> 4 KB writeback per grid step).
    yt = jnp.transpose(y).astype(bf16)                                  # [H, M]
    out = jnp.dot(w2t_ref[...], yt, preferred_element_type=f32) + b2_ref[...]
    out_ref[0] = out.astype(out_ref.dtype)                              # [8, M]


def _block_diag(mats, gb):
    """[B, N, N] per-graph matrices -> [B//gb, gb*N, gb*N] block-diagonal."""
    B, N, _ = mats.shape
    nb = B // gb
    m4 = mats.reshape(nb, gb, N, N)
    eye = jnp.eye(gb, dtype=mats.dtype)
    out = jnp.einsum("bgij,gh->bgihj", m4, eye)
    return out.reshape(nb, gb * N, gb * N)


def _full_spec(arr):
    nd = arr.ndim
    return pl.BlockSpec(arr.shape, lambda b: (0,) * nd)


def reinforce_baseline_net(x, a, params, *, graphs_per_block=8):
    """Batched forward.

    x: [B, N, F] node features.  a: [B, N, N] raw symmetric 0/1 adjacency
    (no self loops).  Returns [B, N, 2] f32 logits.
    """
    B, N, Fi = x.shape
    GB = graphs_per_block
    assert B % GB == 0, "batch must be a multiple of graphs_per_block"
    NB = B // GB
    M = GB * N                      # rows per grid step (128 for the demo)
    H = params["w1"].shape[0]
    L = params["w_ggc"].shape[0]
    H3 = 3 * H

    bf16 = jnp.bfloat16
    f32 = jnp.float32

    # --- single adjacency stream: A_hat = A + I (bf16-exact) + f32 dinv ---
    eye = jnp.eye(N, dtype=f32)[None]
    a_hat = a.astype(f32) + eye
    deg = jnp.sum(a_hat, axis=-1)                              # [B, N]
    dinv = (1.0 / jnp.sqrt(jnp.maximum(deg, 1e-12))).reshape(NB, M, 1)

    xb = x.reshape(NB, M, Fi).astype(bf16)
    ah_b = _block_diag(a_hat, GB).astype(bf16)                 # [NB, M, M]
    # TODO(synk): replace the dense block-diag A_hat with a batched [GB,N,N]
    # layout + batch-dim dot_general once N/GB grow (quadratic bytes, 87.5%
    # structural zeros at GB=8; re-derive against v7x's 64 MiB VMEM).

    # --- algebraic weight fusion (exact up to fp rounding) ---
    # Valid because torch_geometric's GatedGraphConv shares ONE GRUCell
    # across layers; Whh duplication is trivial at this H/L.
    w_fused = jnp.einsum("lhk,kg->lhg", params["w_ggc"], params["w_ih"])  # [L,H,3H]
    w_cat = jnp.concatenate(
        [w_fused, jnp.broadcast_to(params["w_hh"][None], (L, H, H3))], axis=-1
    ).astype(bf16)                                                        # [L,H,6H]

    # GRU gate biases: r|z biases pre-combined; n-gate biases kept separate
    # (r multiplies the hidden-side term).
    b_rz = (params["b_ih"][:, :2 * H] + params["b_hh"][:, :2 * H]).astype(f32)
    b_in = params["b_ih"][:, 2 * H:].astype(f32)
    b_hn = params["b_hh"][:, 2 * H:].astype(f32)

    # lin2 transposed + sublane-padded to 8 rows (rows 0:2 real).
    w2t = jnp.zeros((OUT_ROWS, H), f32).at[:2].set(params["w2"].T).astype(bf16)
    b2c = jnp.zeros((OUT_ROWS, 1), f32).at[:2, 0].set(params["b2"][0])

    args = (
        xb, ah_b, dinv,
        params["w_gcn"].astype(bf16), params["b_gcn"].astype(f32),
        w_cat, b_rz, b_in, b_hn,
        params["w1"].astype(bf16), params["b1"].astype(f32),
        w2t, b2c,
    )

    in_specs = [
        pl.BlockSpec((1, M, Fi), lambda b: (b, 0, 0)),
        pl.BlockSpec((1, M, M), lambda b: (b, 0, 0)),
        pl.BlockSpec((1, M, 1), lambda b: (b, 0, 0)),
    ] + [_full_spec(w) for w in args[3:]]

    flops_per_block = (
        2 * M * Fi * H + 2 * M * M * H                    # GCN
        + L * (2 * M * H * (6 * H) + 2 * M * M * H3)      # GatedGraphConv
        + 2 * M * H * H + 2 * M * H * OUT_ROWS            # MLP head
    )
    bytes_accessed = int(
        sum(int(np.prod(v.shape)) * v.dtype.itemsize for v in args)
        + NB * OUT_ROWS * M * 4
    )
    cost = pl.CostEstimate(
        flops=int(NB * flops_per_block),
        # sigmoid ~ exp + reciprocal (2 EUP ops/elem), tanh ~ 1
        transcendentals=int(NB * L * M * (2 * 2 * H + H)),
        bytes_accessed=bytes_accessed,
    )

    out = pl.pallas_call(
        reinforce_baseline_net_kernel,
        out_shape=jax.ShapeDtypeStruct((NB, OUT_ROWS, M), f32),
        grid=(NB,),
        in_specs=in_specs,
        out_specs=pl.BlockSpec((1, OUT_ROWS, M), lambda b: (b, 0, 0)),
        compiler_params=pltpu.CompilerParams(
            dimension_semantics=("parallel",),
        ),
        cost_estimate=cost,
    )(*args)

    # [NB, 8, M] -> take the 2 real logit rows -> [B, N, 2]
    return jnp.swapaxes(out[:, :2, :], 1, 2).reshape(B, N, 2)


def reference_forward(x, a_norm, a, params):
    """Pure-JAX f32 reference for ONE graph, mirroring the PyTorch forward."""
    h0 = _leaky(a_norm @ (x @ params["w_gcn"]) + params["b_gcn"])
    H = h0.shape[1]
    h = h0
    for l in range(params["w_ggc"].shape[0]):
        m = a @ (h @ params["w_ggc"][l])
        gi = m @ params["w_ih"] + params["b_ih"]
        gh = h @ params["w_hh"] + params["b_hh"]
        r = jax.nn.sigmoid(gi[:, :H] + gh[:, :H])
        z = jax.nn.sigmoid(gi[:, H:2 * H] + gh[:, H:2 * H])
        n = jnp.tanh(gi[:, 2 * H:] + r * gh[:, 2 * H:])
        h = (1.0 - z) * n + z * h
    xr = _leaky(h) + h0
    y = _leaky(xr @ params["w1"] + params["b1"])
    return y @ params["w2"] + params["b2"]


def make_params(key, f_in, hidden, num_layers):
    keys = jax.random.split(key, 10)

    def glorot(k, shape):
        fan_in, fan_out = shape[-2], shape[-1]
        s = jnp.sqrt(6.0 / (fan_in + fan_out))
        return jax.random.uniform(k, shape, jnp.float32, -s, s)

    return {
        "w_gcn": glorot(keys[0], (f_in, hidden)),
        "b_gcn": jnp.zeros((1, hidden), jnp.float32),
        "w_ggc": glorot(keys[1], (num_layers, hidden, hidden)),
        "w_ih": glorot(keys[2], (hidden, 3 * hidden)),
        "w_hh": glorot(keys[3], (hidden, 3 * hidden)),
        "b_ih": 0.01 * jax.random.normal(keys[4], (1, 3 * hidden), jnp.float32),
        "b_hh": 0.01 * jax.random.normal(keys[5], (1, 3 * hidden), jnp.float32),
        "w1": glorot(keys[6], (hidden, hidden)),
        "b1": 0.01 * jax.random.normal(keys[7], (1, hidden), jnp.float32),
        "w2": glorot(keys[8], (hidden, 2)),
        "b2": 0.01 * jax.random.normal(keys[9], (1, 2), jnp.float32),
    }


if __name__ == "__main__":
    # NOTE: demo size is overhead-bound (~0.35 us/grid step >> per-step
    # compute); tune GB / tiles at production B, N before trusting timings.
    B, N, F_IN, HIDDEN, NUM_LAYERS = 16, 16, 8, 32, 2
    GRAPHS_PER_BLOCK = 8   # M = 128 rows/step (v5e MXU depth); 16 on v6e/v7x

    key = jax.random.PRNGKey(0)
    k_x, k_adj, k_par = jax.random.split(key, 3)

    # Node features per graph: [B, N, input_feat_dim]
    x = jax.random.normal(k_x, (B, N, F_IN), jnp.float32)

    # Deterministic random undirected graphs, no self loops.
    upper = (jax.random.uniform(k_adj, (B, N, N)) < 0.3).astype(jnp.float32)
    upper = jnp.triu(upper, k=1)
    a = upper + jnp.swapaxes(upper, -1, -2)                # symmetric adjacency

    params = make_params(k_par, F_IN, HIDDEN, NUM_LAYERS)

    out = reinforce_baseline_net(x, a, params,
                                 graphs_per_block=GRAPHS_PER_BLOCK)
    out = jax.block_until_ready(out)

    # f32 reference (GCN normalization built here for the reference only).
    a_hat = a + jnp.eye(N, dtype=jnp.float32)[None]
    deg = jnp.sum(a_hat, axis=-1)
    d_inv_sqrt = 1.0 / jnp.sqrt(jnp.maximum(deg, 1e-12))
    a_norm = a_hat * d_inv_sqrt[:, :, None] * d_inv_sqrt[:, None, :]
    ref = jax.vmap(reference_forward, in_axes=(0, 0, 0, None))(x, a_norm, a, params)

    # bf16 matmul operands (f32 accumulate) -> looser tolerance vs f32 reference.
    np.testing.assert_allclose(np.asarray(out), np.asarray(ref), rtol=5e-2, atol=5e-2)

    print("KERNEL_OK")
</pallas_src>

<mosaic_0001>
module attributes {stable_mosaic.version = 11 : i64} {
  func.func @reinforce_baseline_net_kernel(%arg0: i32, %arg1: memref<1x128x8xbf16, #tpu.memory_space<vmem>>, %arg2: memref<1x128x128xbf16, #tpu.memory_space<vmem>>, %arg3: memref<1x128x1xf32, #tpu.memory_space<vmem>>, %arg4: memref<8x32xbf16, #tpu.memory_space<vmem>>, %arg5: memref<1x32xf32, #tpu.memory_space<vmem>>, %arg6: memref<2x32x192xbf16, #tpu.memory_space<vmem>>, %arg7: memref<1x64xf32, #tpu.memory_space<vmem>>, %arg8: memref<1x32xf32, #tpu.memory_space<vmem>>, %arg9: memref<1x32xf32, #tpu.memory_space<vmem>>, %arg10: memref<32x32xbf16, #tpu.memory_space<vmem>>, %arg11: memref<1x32xf32, #tpu.memory_space<vmem>>, %arg12: memref<8x32xbf16, #tpu.memory_space<vmem>>, %arg13: memref<8x1xf32, #tpu.memory_space<vmem>>, %arg14: memref<1x8x128xf32, #tpu.memory_space<vmem>>) attributes {dimension_semantics = [#tpu.dimension_semantics<parallel>], iteration_bounds = array<i64: 2>, scalar_prefetch = 0 : i64, scratch_operands = 0 : i64, tpu.core_type = #tpu.core_type<tc>, window_params = [{transform_indices = @transform_0, window_bounds = array<i64: 1, 128, 8>}, {transform_indices = @transform_1, window_bounds = array<i64: 1, 128, 128>}, {transform_indices = @transform_2, window_bounds = array<i64: 1, 128, 1>}, {pipeline_mode = #tpu.pipeline_mode<synchronous>, transform_indices = @transform_3, window_bounds = array<i64: 8, 32>}, {pipeline_mode = #tpu.pipeline_mode<synchronous>, transform_indices = @transform_4, window_bounds = array<i64: 1, 32>}, {pipeline_mode = #tpu.pipeline_mode<synchronous>, transform_indices = @transform_5, window_bounds = array<i64: 2, 32, 192>}, {pipeline_mode = #tpu.pipeline_mode<synchronous>, transform_indices = @transform_6, window_bounds = array<i64: 1, 64>}, {pipeline_mode = #tpu.pipeline_mode<synchronous>, transform_indices = @transform_7, window_bounds = array<i64: 1, 32>}, {pipeline_mode = #tpu.pipeline_mode<synchronous>, transform_indices = @transform_8, window_bounds = array<i64: 1, 32>}, {pipeline_mode = #tpu.pipeline_mode<synchronous>, transform_indices = @transform_9, window_bounds = array<i64: 32, 32>}, {pipeline_mode = #tpu.pipeline_mode<synchronous>, transform_indices = @transform_10, window_bounds = array<i64: 1, 32>}, {pipeline_mode = #tpu.pipeline_mode<synchronous>, transform_indices = @transform_11, window_bounds = array<i64: 8, 32>}, {pipeline_mode = #tpu.pipeline_mode<synchronous>, transform_indices = @transform_12, window_bounds = array<i64: 8, 1>}, {transform_indices = @transform_13, window_bounds = array<i64: 1, 8, 128>}]} {
    %c0 = arith.constant 0 : index
    %c0_0 = arith.constant 0 : index
    %c0_1 = arith.constant 0 : index
    %0 = vector.load %arg1[%c0, %c0_0, %c0_1] : memref<1x128x8xbf16, #tpu.memory_space<vmem>>, vector<1x128x8xbf16>
    %1 = vector.shape_cast %0 : vector<1x128x8xbf16> to vector<128x8xbf16>
    %c0_2 = arith.constant 0 : index
    %c0_3 = arith.constant 0 : index
    %c0_4 = arith.constant 0 : index
    %2 = vector.load %arg2[%c0_2, %c0_3, %c0_4] : memref<1x128x128xbf16, #tpu.memory_space<vmem>>, vector<1x128x128xbf16>
    %3 = vector.shape_cast %2 : vector<1x128x128xbf16> to vector<128x128xbf16>
    %c0_5 = arith.constant 0 : index
    %c0_6 = arith.constant 0 : index
    %c0_7 = arith.constant 0 : index
    %4 = vector.load %arg3[%c0_5, %c0_6, %c0_7] : memref<1x128x1xf32, #tpu.memory_space<vmem>>, vector<1x128x1xf32>
    %5 = vector.shape_cast %4 : vector<1x128x1xf32> to vector<128x1xf32>
    %c0_8 = arith.constant 0 : index
    %c0_9 = arith.constant 0 : index
    %6 = vector.load %arg7[%c0_8, %c0_9] : memref<1x64xf32, #tpu.memory_space<vmem>>, vector<1x64xf32>
    %c0_10 = arith.constant 0 : index
    %c0_11 = arith.constant 0 : index
    %7 = vector.load %arg8[%c0_10, %c0_11] : memref<1x32xf32, #tpu.memory_space<vmem>>, vector<1x32xf32>
    %c0_12 = arith.constant 0 : index
    %c0_13 = arith.constant 0 : index
    %8 = vector.load %arg9[%c0_12, %c0_13] : memref<1x32xf32, #tpu.memory_space<vmem>>, vector<1x32xf32>
    %c0_14 = arith.constant 0 : index
    %c0_15 = arith.constant 0 : index
    %9 = vector.load %arg4[%c0_14, %c0_15] : memref<8x32xbf16, #tpu.memory_space<vmem>>, vector<8x32xbf16>
    %cst = arith.constant dense<0.000000e+00> : vector<128x32xf32>
    %10 = tpu.matmul %1, %9, %cst {dimension_numbers = #tpu.dot_dimension_numbers<[1], [0], [0], [1], [0, 0, 1, 1], [], []>} : vector<128x8xbf16>, vector<8x32xbf16>, vector<128x32xf32> -> vector<128x32xf32>
    %11 = vector.broadcast %5 : vector<128x1xf32> to vector<128x32xf32>
    %12 = arith.mulf %11, %10 : vector<128x32xf32>
    %13 = arith.truncf %12 : vector<128x32xf32> to vector<128x32xbf16>
    %cst_16 = arith.constant dense<0.000000e+00> : vector<128x32xf32>
    %14 = tpu.matmul %3, %13, %cst_16 {dimension_numbers = #tpu.dot_dimension_numbers<[1], [0], [0], [1], [0, 0, 1, 1], [], []>} : vector<128x128xbf16>, vector<128x32xbf16>, vector<128x32xf32> -> vector<128x32xf32>
    %15 = vector.broadcast %5 : vector<128x1xf32> to vector<128x32xf32>
    %16 = arith.mulf %15, %14 : vector<128x32xf32>
    %c0_17 = arith.constant 0 : index
    %c0_18 = arith.constant 0 : index
    %17 = vector.load %arg5[%c0_17, %c0_18] : memref<1x32xf32, #tpu.memory_space<vmem>>, vector<1x32xf32>
    %18 = vector.broadcast %17 : vector<1x32xf32> to vector<128x32xf32>
    %19 = arith.addf %16, %18 : vector<128x32xf32>
    %cst_19 = arith.constant 0.000000e+00 : f32
    %20 = vector.broadcast %cst_19 : f32 to vector<128x32xf32>
    %21 = arith.cmpf oge, %19, %20 : vector<128x32xf32>
    %cst_20 = arith.constant 0.00999999977 : f32
    %22 = vector.broadcast %cst_20 : f32 to vector<128x32xf32>
    %23 = arith.mulf %22, %19 : vector<128x32xf32>
    %24 = arith.select %21, %19, %23 : vector<128x32xi1>, vector<128x32xf32>
    %25 = arith.truncf %24 : vector<128x32xf32> to vector<128x32xbf16>
    %c0_21 = arith.constant 0 : index
    %c0_22 = arith.constant 0 : index
    %c0_23 = arith.constant 0 : index
    %26 = vector.load %arg6[%c0_21, %c0_22, %c0_23] : memref<2x32x192xbf16, #tpu.memory_space<vmem>>, vector<1x32x192xbf16>
    %27 = vector.shape_cast %26 : vector<1x32x192xbf16> to vector<32x192xbf16>
    %cst_24 = arith.constant dense<0.000000e+00> : vector<128x192xf32>
    %28 = tpu.matmul %25, %27, %cst_24 {dimension_numbers = #tpu.dot_dimension_numbers<[1], [0], [0], [1], [0, 0, 1, 1], [], []>} : vector<128x32xbf16>, vector<32x192xbf16>, vector<128x192xf32> -> vector<128x192xf32>
    %29 = vector.extract_strided_slice %28 {offsets = [0, 0], sizes = [128, 96], strides = [1, 1]} : vector<128x192xf32> to vector<128x96xf32>
    %30 = arith.truncf %29 : vector<128x96xf32> to vector<128x96xbf16>
    %cst_25 = arith.constant dense<0.000000e+00> : vector<128x96xf32>
    %31 = tpu.matmul %3, %30, %cst_25 {dimension_numbers = #tpu.dot_dimension_numbers<[1], [0], [0], [1], [0, 0, 1, 1], [], []>} : vector<128x128xbf16>, vector<128x96xbf16>, vector<128x96xf32> -> vector<128x96xf32>
    %32 = arith.extf %30 : vector<128x96xbf16> to vector<128x96xf32>
    %33 = arith.subf %31, %32 : vector<128x96xf32>
    %34 = vector.extract_strided_slice %28 {offsets = [0, 96], sizes = [128, 96], strides = [1, 1]} : vector<128x192xf32> to vector<128x96xf32>
    %35 = vector.extract_strided_slice %33 {offsets = [0, 0], sizes = [128, 64], strides = [1, 1]} : vector<128x96xf32> to vector<128x64xf32>
    %36 = vector.extract_strided_slice %34 {offsets = [0, 0], sizes = [128, 64], strides = [1, 1]} : vector<128x96xf32> to vector<128x64xf32>
    %37 = arith.addf %35, %36 : vector<128x64xf32>
    %38 = vector.broadcast %6 : vector<1x64xf32> to vector<128x64xf32>
    %39 = arith.addf %37, %38 : vector<128x64xf32>
    %40 = arith.negf %39 : vector<128x64xf32>
    %41 = math.exp %40 : vector<128x64xf32>
    %cst_26 = arith.constant 1.000000e+00 : f32
    %42 = vector.broadcast %cst_26 : f32 to vector<128x64xf32>
    %43 = arith.addf %42, %41 : vector<128x64xf32>
    %44 = arith.divf %42, %43 : vector<128x64xf32>
    %45 = vector.extract_strided_slice %44 {offsets = [0, 0], sizes = [128, 32], strides = [1, 1]} : vector<128x64xf32> to vector<128x32xf32>
    %46 = vector.extract_strided_slice %44 {offsets = [0, 32], sizes = [128, 32], strides = [1, 1]} : vector<128x64xf32> to vector<128x32xf32>
    %47 = vector.extract_strided_slice %33 {offsets = [0, 64], sizes = [128, 32], strides = [1, 1]} : vector<128x96xf32> to vector<128x32xf32>
    %48 = vector.broadcast %7 : vector<1x32xf32> to vector<128x32xf32>
    %49 = arith.addf %47, %48 : vector<128x32xf32>
    %50 = vector.extract_strided_slice %34 {offsets = [0, 64], sizes = [128, 32], strides = [1, 1]} : vector<128x96xf32> to vector<128x32xf32>
    %51 = vector.broadcast %8 : vector<1x32xf32> to vector<128x32xf32>
    %52 = arith.addf %50, %51 : vector<128x32xf32>
    %53 = arith.mulf %45, %52 : vector<128x32xf32>
    %54 = arith.addf %49, %53 : vector<128x32xf32>
    %55 = math.tanh %54 : vector<128x32xf32>
    %cst_27 = arith.constant 1.000000e+00 : f32
    %56 = vector.broadcast %cst_27 : f32 to vector<128x32xf32>
    %57 = arith.subf %56, %46 : vector<128x32xf32>
    %58 = arith.mulf %57, %55 : vector<128x32xf32>
    %59 = arith.mulf %46, %24 : vector<128x32xf32>
    %60 = arith.addf %58, %59 : vector<128x32xf32>
    %61 = arith.truncf %60 : vector<128x32xf32> to vector<128x32xbf16>
    %c1 = arith.constant 1 : index
    %c0_28 = arith.constant 0 : index
    %c0_29 = arith.constant 0 : index
    %62 = vector.load %arg6[%c1, %c0_28, %c0_29] : memref<2x32x192xbf16, #tpu.memory_space<vmem>>, vector<1x32x192xbf16>
    %63 = vector.shape_cast %62 : vector<1x32x192xbf16> to vector<32x192xbf16>
    %cst_30 = arith.constant dense<0.000000e+00> : vector<128x192xf32>
    %64 = tpu.matmul %61, %63, %cst_30 {dimension_numbers = #tpu.dot_dimension_numbers<[1], [0], [0], [1], [0, 0, 1, 1], [], []>} : vector<128x32xbf16>, vector<32x192xbf16>, vector<128x192xf32> -> vector<128x192xf32>
    %65 = vector.extract_strided_slice %64 {offsets = [0, 0], sizes = [128, 96], strides = [1, 1]} : vector<128x192xf32> to vector<128x96xf32>
    %66 = arith.truncf %65 : vector<128x96xf32> to vector<128x96xbf16>
    %cst_31 = arith.constant dense<0.000000e+00> : vector<128x96xf32>
    %67 = tpu.matmul %3, %66, %cst_31 {dimension_numbers = #tpu.dot_dimension_numbers<[1], [0], [0], [1], [0, 0, 1, 1], [], []>} : vector<128x128xbf16>, vector<128x96xbf16>, vector<128x96xf32> -> vector<128x96xf32>
    %68 = arith.extf %66 : vector<128x96xbf16> to vector<128x96xf32>
    %69 = arith.subf %67, %68 : vector<128x96xf32>
    %70 = vector.extract_strided_slice %64 {offsets = [0, 96], sizes = [128, 96], strides = [1, 1]} : vector<128x192xf32> to vector<128x96xf32>
    %71 = vector.extract_strided_slice %69 {offsets = [0, 0], sizes = [128, 64], strides = [1, 1]} : vector<128x96xf32> to vector<128x64xf32>
    %72 = vector.extract_strided_slice %70 {offsets = [0, 0], sizes = [128, 64], strides = [1, 1]} : vector<128x96xf32> to vector<128x64xf32>
    %73 = arith.addf %71, %72 : vector<128x64xf32>
    %74 = vector.broadcast %6 : vector<1x64xf32> to vector<128x64xf32>
    %75 = arith.addf %73, %74 : vector<128x64xf32>
    %76 = arith.negf %75 : vector<128x64xf32>
    %77 = math.exp %76 : vector<128x64xf32>
    %cst_32 = arith.constant 1.000000e+00 : f32
    %78 = vector.broadcast %cst_32 : f32 to vector<128x64xf32>
    %79 = arith.addf %78, %77 : vector<128x64xf32>
    %80 = arith.divf %78, %79 : vector<128x64xf32>
    %81 = vector.extract_strided_slice %80 {offsets = [0, 0], sizes = [128, 32], strides = [1, 1]} : vector<128x64xf32> to vector<128x32xf32>
    %82 = vector.extract_strided_slice %80 {offsets = [0, 32], sizes = [128, 32], strides = [1, 1]} : vector<128x64xf32> to vector<128x32xf32>
    %83 = vector.extract_strided_slice %69 {offsets = [0, 64], sizes = [128, 32], strides = [1, 1]} : vector<128x96xf32> to vector<128x32xf32>
    %84 = vector.broadcast %7 : vector<1x32xf32> to vector<128x32xf32>
    %85 = arith.addf %83, %84 : vector<128x32xf32>
    %86 = vector.extract_strided_slice %70 {offsets = [0, 64], sizes = [128, 32], strides = [1, 1]} : vector<128x96xf32> to vector<128x32xf32>
    %87 = vector.broadcast %8 : vector<1x32xf32> to vector<128x32xf32>
    %88 = arith.addf %86, %87 : vector<128x32xf32>
    %89 = arith.mulf %81, %88 : vector<128x32xf32>
    %90 = arith.addf %85, %89 : vector<128x32xf32>
    %91 = math.tanh %90 : vector<128x32xf32>
    %cst_33 = arith.constant 1.000000e+00 : f32
    %92 = vector.broadcast %cst_33 : f32 to vector<128x32xf32>
    %93 = arith.subf %92, %82 : vector<128x32xf32>
    %94 = arith.mulf %93, %91 : vector<128x32xf32>
    %95 = arith.mulf %82, %60 : vector<128x32xf32>
    %96 = arith.addf %94, %95 : vector<128x32xf32>
    %cst_34 = arith.constant 0.000000e+00 : f32
    %97 = vector.broadcast %cst_34 : f32 to vector<128x32xf32>
    %98 = arith.cmpf oge, %96, %97 : vector<128x32xf32>
    %cst_35 = arith.constant 0.00999999977 : f32
    %99 = vector.broadcast %cst_35 : f32 to vector<128x32xf32>
    %100 = arith.mulf %99, %96 : vector<128x32xf32>
    %101 = arith.select %98, %96, %100 : vector<128x32xi1>, vector<128x32xf32>
    %102 = arith.addf %101, %24 : vector<128x32xf32>
    %103 = arith.truncf %102 : vector<128x32xf32> to vector<128x32xbf16>
    %c0_36 = arith.constant 0 : index
    %c0_37 = arith.constant 0 : index
    %104 = vector.load %arg10[%c0_36, %c0_37] : memref<32x32xbf16, #tpu.memory_space<vmem>>, vector<32x32xbf16>
    %cst_38 = arith.constant dense<0.000000e+00> : vector<128x32xf32>
    %105 = tpu.matmul %103, %104, %cst_38 {dimension_numbers = #tpu.dot_dimension_numbers<[1], [0], [0], [1], [0, 0, 1, 1], [], []>} : vector<128x32xbf16>, vector<32x32xbf16>, vector<128x32xf32> -> vector<128x32xf32>
    %c0_39 = arith.constant 0 : index
    %c0_40 = arith.constant 0 : index
    %106 = vector.load %arg11[%c0_39, %c0_40] : memref<1x32xf32, #tpu.memory_space<vmem>>, vector<1x32xf32>
    %107 = vector.broadcast %106 : vector<1x32xf32> to vector<128x32xf32>
    %108 = arith.addf %105, %107 : vector<128x32xf32>
    %cst_41 = arith.constant 0.000000e+00 : f32
    %109 = vector.broadcast %cst_41 : f32 to vector<128x32xf32>
    %110 = arith.cmpf oge, %108, %109 : vector<128x32xf32>
    %cst_42 = arith.constant 0.00999999977 : f32
    %111 = vector.broadcast %cst_42 : f32 to vector<128x32xf32>
    %112 = arith.mulf %111, %108 : vector<128x32xf32>
    %113 = arith.select %110, %108, %112 : vector<128x32xi1>, vector<128x32xf32>
    %114 = tpu.transpose %113, [1, 0] : vector<128x32xf32> -> vector<32x128xf32>
    %115 = arith.truncf %114 : vector<32x128xf32> to vector<32x128xbf16>
    %c0_43 = arith.constant 0 : index
    %c0_44 = arith.constant 0 : index
    %116 = vector.load %arg12[%c0_43, %c0_44] : memref<8x32xbf16, #tpu.memory_space<vmem>>, vector<8x32xbf16>
    %cst_45 = arith.constant dense<0.000000e+00> : vector<8x128xf32>
    %117 = tpu.matmul %116, %115, %cst_45 {dimension_numbers = #tpu.dot_dimension_numbers<[1], [0], [0], [1], [0, 0, 1, 1], [], []>} : vector<8x32xbf16>, vector<32x128xbf16>, vector<8x128xf32> -> vector<8x128xf32>
    %c0_46 = arith.constant 0 : index
    %c0_47 = arith.constant 0 : index
    %118 = vector.load %arg13[%c0_46, %c0_47] : memref<8x1xf32, #tpu.memory_space<vmem>>, vector<8x1xf32>
    %119 = vector.broadcast %118 : vector<8x1xf32> to vector<8x128xf32>
    %120 = arith.addf %117, %119 : vector<8x128xf32>
    %c0_48 = arith.constant 0 : index
    %c0_49 = arith.constant 0 : index
    %c0_50 = arith.constant 0 : index
    %121 = vector.load %arg14[%c0_48, %c0_49, %c0_50] : memref<1x8x128xf32, #tpu.memory_space<vmem>>, vector<1x8x128xf32>
    %122 = vector.shape_cast %121 : vector<1x8x128xf32> to vector<8x128xf32>
    %123 = vector.shape_cast %120 : vector<8x128xf32> to vector<1x8x128xf32>
    tpu.vector_store %arg14[%c0_48, %c0_49, %c0_50], %123 {strides = array<i32>} : memref<1x8x128xf32, #tpu.memory_space<vmem>>, vector<1x8x128xf32>,
    return
  }
  func.func @transform_0(%arg0: i32) -> (i32, i32, i32) {
    %c0_i32 = arith.constant 0 : i32
    %c0_i32_0 = arith.constant 0 : i32
    %c0_i32_1 = arith.constant 0 : i32
    return %arg0, %c0_i32, %c0_i32_0 : i32, i32, i32
  }
  func.func @transform_1(%arg0: i32) -> (i32, i32, i32) {
    %c0_i32 = arith.constant 0 : i32
    %c0_i32_0 = arith.constant 0 : i32
    %c0_i32_1 = arith.constant 0 : i32
    return %arg0, %c0_i32, %c0_i32_0 : i32, i32, i32
  }
  func.func @transform_2(%arg0: i32) -> (i32, i32, i32) {
    %c0_i32 = arith.constant 0 : i32
    %c0_i32_0 = arith.constant 0 : i32
    %c0_i32_1 = arith.constant 0 : i32
    return %arg0, %c0_i32, %c0_i32_0 : i32, i32, i32
  }
  func.func @transform_3(%arg0: i32) -> (i32, i32) {
    %c0_i32 = arith.constant 0 : i32
    %c0_i32_0 = arith.constant 0 : i32
    %c0_i32_1 = arith.constant 0 : i32
    return %c0_i32, %c0_i32_0 : i32, i32
  }
  func.func @transform_4(%arg0: i32) -> (i32, i32) {
    %c0_i32 = arith.constant 0 : i32
    %c0_i32_0 = arith.constant 0 : i32
    %c0_i32_1 = arith.constant 0 : i32
    return %c0_i32, %c0_i32_0 : i32, i32
  }
  func.func @transform_5(%arg0: i32) -> (i32, i32, i32) {
    %c0_i32 = arith.constant 0 : i32
    %c0_i32_0 = arith.constant 0 : i32
    %c0_i32_1 = arith.constant 0 : i32
    %c0_i32_2 = arith.constant 0 : i32
    return %c0_i32, %c0_i32_0, %c0_i32_1 : i32, i32, i32
  }
  func.func @transform_6(%arg0: i32) -> (i32, i32) {
    %c0_i32 = arith.constant 0 : i32
    %c0_i32_0 = arith.constant 0 : i32
    %c0_i32_1 = arith.constant 0 : i32
    return %c0_i32, %c0_i32_0 : i32, i32
  }
  func.func @transform_7(%arg0: i32) -> (i32, i32) {
    %c0_i32 = arith.constant 0 : i32
    %c0_i32_0 = arith.constant 0 : i32
    %c0_i32_1 = arith.constant 0 : i32
    return %c0_i32, %c0_i32_0 : i32, i32
  }
  func.func @transform_8(%arg0: i32) -> (i32, i32) {
    %c0_i32 = arith.constant 0 : i32
    %c0_i32_0 = arith.constant 0 : i32
    %c0_i32_1 = arith.constant 0 : i32
    return %c0_i32, %c0_i32_0 : i32, i32
  }
  func.func @transform_9(%arg0: i32) -> (i32, i32) {
    %c0_i32 = arith.constant 0 : i32
    %c0_i32_0 = arith.constant 0 : i32
    %c0_i32_1 = arith.constant 0 : i32
    return %c0_i32, %c0_i32_0 : i32, i32
  }
  func.func @transform_10(%arg0: i32) -> (i32, i32) {
    %c0_i32 = arith.constant 0 : i32
    %c0_i32_0 = arith.constant 0 : i32
    %c0_i32_1 = arith.constant 0 : i32
    return %c0_i32, %c0_i32_0 : i32, i32
  }
  func.func @transform_11(%arg0: i32) -> (i32, i32) {
    %c0_i32 = arith.constant 0 : i32
    %c0_i32_0 = arith.constant 0 : i32
    %c0_i32_1 = arith.constant 0 : i32
    return %c0_i32, %c0_i32_0 : i32, i32
  }
  func.func @transform_12(%arg0: i32) -> (i32, i32) {
    %c0_i32 = arith.constant 0 : i32
    %c0_i32_0 = arith.constant 0 : i32
    %c0_i32_1 = arith.constant 0 : i32
    return %c0_i32, %c0_i32_0 : i32, i32
  }
  func.func @transform_13(%arg0: i32) -> (i32, i32, i32) {
    %c0_i32 = arith.constant 0 : i32
    %c0_i32_0 = arith.constant 0 : i32
    %c0_i32_1 = arith.constant 0 : i32
    return %arg0, %c0_i32, %c0_i32_0 : i32, i32, i32
  }
}

</mosaic_0001>

<llo_original>
// kernel: tpu_custom_call.1
$region0: #{tpu_custom_call.1}
  #allocation0 [shape = 'u32[]', space=smem, size = 0x4, offset = 0x4, fixed_abs, tag = 'smem constant byte address 0x4 - core index']
  #allocation1 [shape = 'u32[144,128]{1,0:T(1,128)}', space=vmem, size = 0x12000, scoped, tag = 'internal scratch']
  %s0 = inlined_call_operand.vmem [shape: bf16[2,128,8], index: 0, kind: input, shape index: {}]
  %s1 = inlined_call_operand.vmem [shape: bf16[2,128,128], index: 1, kind: input, shape index: {}]
  %s2 = inlined_call_operand.vmem [shape: f32[2,128,1], index: 2, kind: input, shape index: {}]
  %s3 = inlined_call_operand.vmem [shape: bf16[8,32], index: 3, kind: input, shape index: {}]
  %s4 = inlined_call_operand.vmem [shape: f32[1,32], index: 4, kind: input, shape index: {}]
  %s5 = inlined_call_operand.vmem [shape: bf16[2,32,192], index: 5, kind: input, shape index: {}]
  %s6 = inlined_call_operand.vmem [shape: f32[1,64], index: 6, kind: input, shape index: {}]
  %s7 = inlined_call_operand.vmem [shape: f32[1,32], index: 7, kind: input, shape index: {}]
  %s8 = inlined_call_operand.vmem [shape: f32[1,32], index: 8, kind: input, shape index: {}]
  %s9 = inlined_call_operand.vmem [shape: bf16[32,32], index: 9, kind: input, shape index: {}]
  %s10 = inlined_call_operand.vmem [shape: f32[1,32], index: 10, kind: input, shape index: {}]
  %s11 = inlined_call_operand.vmem [shape: bf16[8,32], index: 11, kind: input, shape index: {}]
  %s12 = inlined_call_operand.vmem [shape: f32[8,1], index: 12, kind: input, shape index: {}]
  %s13 = inlined_call_operand.hbm [shape: f32[2,8,128], index: 13, kind: output, shape index: {}]
  %s14 = sld [smem:[#allocation0]]
  $region85: #{tpu_custom_call.1} parent=0
    _
  %s16 = ssub.s32 1, %s14
  %s17 = scalar_select 0, %s16, %s14
  $region1: #{tpu_custom_call.1} parent=0
    #allocation2 [shape = 'u8[8192]{0}', space=vmem, size = 0x2000, scoped, tag = 'output window, operand 0']
    #allocation3 [shape = 's32[2]{0}', space=sflag, size = 0x8, scoped, tag = 'scoped memory for tpu_custom_call.1']
    %18 = vsyncpa [#allocation3], 0
    %s19 = scalar_lea.sflag [#allocation3], 1
    %20 = vsyncpa %s19, 0
    loop: start=0, step=1, limit=4
    $region2: #{tpu_custom_call.1} parent=1 // loop_pre_header
      _
    $region3: #{tpu_custom_call.1} parent=1 // loop_header
      %s22 = sphi 0, %s26
      %p23 = scmp.ge.s32.totalorder %s22, 4
      %s32 = sphi 0, %s34
      %s35 = sphi 0, %s32
      %s36 = sphi 0, %s35
      %s52 = sphi 0, %s36
      %s58 = sphi 0, %s60
      %s61 = sphi 0, %s58
      %s62 = sphi 0, %s61
      %s78 = sphi 0, %s62
      %s84 = sphi 0, %s86
      %s87 = sphi 0, %s84
      %s88 = sphi 0, %s87
      %s104 = sphi 0, %s88
      %s108 = sphi 0, %s108
      %s110 = sphi 0, %s108
      %s111 = sphi 0, %s110
      %s125 = sphi 0, %s111
      %s129 = sphi 0, %s129
      %s131 = sphi 0, %s129
      %s132 = sphi 0, %s131
      %s146 = sphi 0, %s132
      %s150 = sphi 0, %s150
      %s152 = sphi 0, %s150
      %s153 = sphi 0, %s152
      %s167 = sphi 0, %s153
      %s171 = sphi 0, %s171
      %s173 = sphi 0, %s171
      %s174 = sphi 0, %s173
      %s188 = sphi 0, %s174
      %s192 = sphi 0, %s192
      %s194 = sphi 0, %s192
      %s195 = sphi 0, %s194
      %s209 = sphi 0, %s195
      %s213 = sphi 0, %s213
      %s215 = sphi 0, %s213
      %s216 = sphi 0, %s215
      %s230 = sphi 0, %s216
      %s234 = sphi 0, %s234
      %s236 = sphi 0, %s234
      %s237 = sphi 0, %s236
      %s251 = sphi 0, %s237
      %s255 = sphi 0, %s255
      %s257 = sphi 0, %s255
      %s258 = sphi 0, %s257
      %s272 = sphi 0, %s258
      %s276 = sphi 0, %s276
      %s278 = sphi 0, %s276
      %s279 = sphi 0, %s278
      %s293 = sphi 0, %s279
      %s297 = sphi 0, %s297
      %s299 = sphi 0, %s297
      %s300 = sphi 0, %s299
      %s314 = sphi 0, %s300
      %s320 = sphi 0, %s322
      %s323 = sphi 0, %s320
      %s324 = sphi 0, %s323
      %s340 = sphi 0, %s324
    $region4: #{tpu_custom_call.1} parent=1 // loop_header_branch
      %25 = sbr.rel (%p23) target = $region8
    $region5: #{tpu_custom_call.1} parent=1 // loop_body
      %s27 = ssub.s32 %s22, 1
      %s28 = ssub.s32 %s22, 2
      %s29 = sadd.s32 %s22, 1
      %s30 = ssub.s32 %s22, %s29
      %p31 = scmp.eq.s32.totalorder %s30, 0
      %s33 = sadd.s32 %s32, 1
      %s34 = scalar_select %p31, %s32, %s33
      %p37 = pneg %p31
      %p38 = scmp.eq.s32.totalorder %s22, 1
      %p39 = por %p37, %p38
      %p40 = scmp.ne.s32.totalorder %s32, %s35
      %p41 = scmp.eq.s32.totalorder %s22, 0
      %p42 = por %p40, %p41
      %p43 = scmp.ne.s32.totalorder %s32, %s35
      %p44 = scmp.eq.s32.totalorder %s27, 1
      %p45 = por %p43, %p44
      %p46 = scmp.ne.s32.totalorder %s35, %s36
      %p47 = scmp.eq.s32.totalorder %s27, 0
      %p48 = por %p46, %p47
      %p49 = scmp.ne.s32.totalorder %s35, %s36
      %p50 = scmp.eq.s32.totalorder %s28, 1
      %p51 = por %p49, %p50
      %p53 = scmp.ne.s32.totalorder %s36, %s52
      %p54 = scmp.eq.s32.totalorder %s28, 0
      %p55 = por %p53, %p54
      %s56 = ssub.s32 %s22, %s29
      %p57 = scmp.eq.s32.totalorder %s56, 0
      %s59 = sadd.s32 %s58, 1
      %s60 = scalar_select %p57, %s58, %s59
      %p63 = pneg %p57
      %p64 = scmp.eq.s32.totalorder %s22, 1
      %p65 = por %p63, %p64
      %p66 = scmp.ne.s32.totalorder %s58, %s61
      %p67 = scmp.eq.s32.totalorder %s22, 0
      %p68 = por %p66, %p67
      %p69 = scmp.ne.s32.totalorder %s58, %s61
      %p70 = scmp.eq.s32.totalorder %s27, 1
      %p71 = por %p69, %p70
      %p72 = scmp.ne.s32.totalorder %s61, %s62
      %p73 = scmp.eq.s32.totalorder %s27, 0
      %p74 = por %p72, %p73
      %p75 = scmp.ne.s32.totalorder %s61, %s62
      %p76 = scmp.eq.s32.totalorder %s28, 1
      %p77 = por %p75, %p76
      %p79 = scmp.ne.s32.totalorder %s62, %s78
      %p80 = scmp.eq.s32.totalorder %s28, 0
      %p81 = por %p79, %p80
      %s82 = ssub.s32 %s22, %s29
      %p83 = scmp.eq.s32.totalorder %s82, 0
      %s85 = sadd.s32 %s84, 1
      %s86 = scalar_select %p83, %s84, %s85
      %p89 = pneg %p83
      %p90 = scmp.eq.s32.totalorder %s22, 1
      %p91 = por %p89, %p90
      %p92 = scmp.ne.s32.totalorder %s84, %s87
      %p93 = scmp.eq.s32.totalorder %s22, 0
      %p94 = por %p92, %p93
      %p95 = scmp.ne.s32.totalorder %s84, %s87
      %p96 = scmp.eq.s32.totalorder %s27, 1
      %p97 = por %p95, %p96
      %p98 = scmp.ne.s32.totalorder %s87, %s88
      %p99 = scmp.eq.s32.totalorder %s27, 0
      %p100 = por %p98, %p99
      %p101 = scmp.ne.s32.totalorder %s87, %s88
      %p102 = scmp.eq.s32.totalorder %s28, 1
      %p103 = por %p101, %p102
      %p105 = scmp.ne.s32.totalorder %s88, %s104
      %p106 = scmp.eq.s32.totalorder %s28, 0
      %p107 = por %p105, %p106
      %s109 = sadd.s32 %s108, 1
      %p112 = scmp.eq.s32.totalorder %s22, 1
      %p113 = scmp.ne.s32.totalorder %s108, %s110
      %p114 = scmp.eq.s32.totalorder %s22, 0
      %p115 = por %p113, %p114
      %p116 = scmp.ne.s32.totalorder %s108, %s110
      %p117 = scmp.eq.s32.totalorder %s27, 1
      %p118 = por %p116, %p117
      %p119 = scmp.ne.s32.totalorder %s110, %s111
      %p120 = scmp.eq.s32.totalorder %s27, 0
      %p121 = por %p119, %p120
      %p122 = scmp.ne.s32.totalorder %s110, %s111
      %p123 = scmp.eq.s32.totalorder %s28, 1
      %p124 = por %p122, %p123
      %p126 = scmp.ne.s32.totalorder %s111, %s125
      %p127 = scmp.eq.s32.totalorder %s28, 0
      %p128 = por %p126, %p127
      %s130 = sadd.s32 %s129, 1
      %p133 = scmp.eq.s32.totalorder %s22, 1
      %p134 = scmp.ne.s32.totalorder %s129, %s131
      %p135 = scmp.eq.s32.totalorder %s22, 0
      %p136 = por %p134, %p135
      %p137 = scmp.ne.s32.totalorder %s129, %s131
      %p138 = scmp.eq.s32.totalorder %s27, 1
      %p139 = por %p137, %p138
      %p140 = scmp.ne.s32.totalorder %s131, %s132
      %p141 = scmp.eq.s32.totalorder %s27, 0
      %p142 = por %p140, %p141
      %p143 = scmp.ne.s32.totalorder %s131, %s132
      %p144 = scmp.eq.s32.totalorder %s28, 1
      %p145 = por %p143, %p144
      %p147 = scmp.ne.s32.totalorder %s132, %s146
      %p148 = scmp.eq.s32.totalorder %s28, 0
      %p149 = por %p147, %p148
      %s151 = sadd.s32 %s150, 1
      %p154 = scmp.eq.s32.totalorder %s22, 1
      %p155 = scmp.ne.s32.totalorder %s150, %s152
      %p156 = scmp.eq.s32.totalorder %s22, 0
      %p157 = por %p155, %p156
      %p158 = scmp.ne.s32.totalorder %s150, %s152
      %p159 = scmp.eq.s32.totalorder %s27, 1
      %p160 = por %p158, %p159
      %p161 = scmp.ne.s32.totalorder %s152, %s153
      %p162 = scmp.eq.s32.totalorder %s27, 0
      %p163 = por %p161, %p162
      %p164 = scmp.ne.s32.totalorder %s152, %s153
      %p165 = scmp.eq.s32.totalorder %s28, 1
      %p166 = por %p164, %p165
      %p168 = scmp.ne.s32.totalorder %s153, %s167
      %p169 = scmp.eq.s32.totalorder %s28, 0
      %p170 = por %p168, %p169
      %s172 = sadd.s32 %s171, 1
      %p175 = scmp.eq.s32.totalorder %s22, 1
      %p176 = scmp.ne.s32.totalorder %s171, %s173
      %p177 = scmp.eq.s32.totalorder %s22, 0
      %p178 = por %p176, %p177
      %p179 = scmp.ne.s32.totalorder %s171, %s173
      %p180 = scmp.eq.s32.totalorder %s27, 1
      %p181 = por %p179, %p180
      %p182 = scmp.ne.s32.totalorder %s173, %s174
      %p183 = scmp.eq.s32.totalorder %s27, 0
      %p184 = por %p182, %p183
      %p185 = scmp.ne.s32.totalorder %s173, %s174
      %p186 = scmp.eq.s32.totalorder %s28, 1
      %p187 = por %p185, %p186
      %p189 = scmp.ne.s32.totalorder %s174, %s188
      %p190 = scmp.eq.s32.totalorder %s28, 0
      %p191 = por %p189, %p190
      %s193 = sadd.s32 %s192, 1
      %p196 = scmp.eq.s32.totalorder %s22, 1
      %p197 = scmp.ne.s32.totalorder %s192, %s194
      %p198 = scmp.eq.s32.totalorder %s22, 0
      %p199 = por %p197, %p198
      %p200 = scmp.ne.s32.totalorder %s192, %s194
      %p201 = scmp.eq.s32.totalorder %s27, 1
      %p202 = por %p200, %p201
      %p203 = scmp.ne.s32.totalorder %s194, %s195
      %p204 = scmp.eq.s32.totalorder %s27, 0
      %p205 = por %p203, %p204
      %p206 = scmp.ne.s32.totalorder %s194, %s195
      %p207 = scmp.eq.s32.totalorder %s28, 1
      %p208 = por %p206, %p207
      %p210 = scmp.ne.s32.totalorder %s195, %s209
      %p211 = scmp.eq.s32.totalorder %s28, 0
      %p212 = por %p210, %p211
      %s214 = sadd.s32 %s213, 1
      %p217 = scmp.eq.s32.totalorder %s22, 1
      %p218 = scmp.ne.s32.totalorder %s213, %s215
      %p219 = scmp.eq.s32.totalorder %s22, 0
      %p220 = por %p218, %p219
      %p221 = scmp.ne.s32.totalorder %s213, %s215
      %p222 = scmp.eq.s32.totalorder %s27, 1
      %p223 = por %p221, %p222
      %p224 = scmp.ne.s32.totalorder %s215, %s216
      %p225 = scmp.eq.s32.totalorder %s27, 0
      %p226 = por %p224, %p225
      %p227 = scmp.ne.s32.totalorder %s215, %s216
      %p228 = scmp.eq.s32.totalorder %s28, 1
      %p229 = por %p227, %p228
      %p231 = scmp.ne.s32.totalorder %s216, %s230
      %p232 = scmp.eq.s32.totalorder %s28, 0
      %p233 = por %p231, %p232
      %s235 = sadd.s32 %s234, 1
      %p238 = scmp.eq.s32.totalorder %s22, 1
      %p239 = scmp.ne.s32.totalorder %s234, %s236
      %p240 = scmp.eq.s32.totalorder %s22, 0
      %p241 = por %p239, %p240
      %p242 = scmp.ne.s32.totalorder %s234, %s236
      %p243 = scmp.eq.s32.totalorder %s27, 1
      %p244 = por %p242, %p243
      %p245 = scmp.ne.s32.totalorder %s236, %s237
      %p246 = scmp.eq.s32.totalorder %s27, 0
      %p247 = por %p245, %p246
      %p248 = scmp.ne.s32.totalorder %s236, %s237
      %p249 = scmp.eq.s32.totalorder %s28, 1
      %p250 = por %p248, %p249
      %p252 = scmp.ne.s32.totalorder %s237, %s251
      %p253 = scmp.eq.s32.totalorder %s28, 0
      %p254 = por %p252, %p253
      %s256 = sadd.s32 %s255, 1
      %p259 = scmp.eq.s32.totalorder %s22, 1
      %p260 = scmp.ne.s32.totalorder %s255, %s257
      %p261 = scmp.eq.s32.totalorder %s22, 0
      %p262 = por %p260, %p261
      %p263 = scmp.ne.s32.totalorder %s255, %s257
      %p264 = scmp.eq.s32.totalorder %s27, 1
      %p265 = por %p263, %p264
      %p266 = scmp.ne.s32.totalorder %s257, %s258
      %p267 = scmp.eq.s32.totalorder %s27, 0
      %p268 = por %p266, %p267
      %p269 = scmp.ne.s32.totalorder %s257, %s258
      %p270 = scmp.eq.s32.totalorder %s28, 1
      %p271 = por %p269, %p270
      %p273 = scmp.ne.s32.totalorder %s258, %s272
      %p274 = scmp.eq.s32.totalorder %s28, 0
      %p275 = por %p273, %p274
      %s277 = sadd.s32 %s276, 1
      %p280 = scmp.eq.s32.totalorder %s22, 1
      %p281 = scmp.ne.s32.totalorder %s276, %s278
      %p282 = scmp.eq.s32.totalorder %s22, 0
      %p283 = por %p281, %p282
      %p284 = scmp.ne.s32.totalorder %s276, %s278
      %p285 = scmp.eq.s32.totalorder %s27, 1
      %p286 = por %p284, %p285
      %p287 = scmp.ne.s32.totalorder %s278, %s279
      %p288 = scmp.eq.s32.totalorder %s27, 0
      %p289 = por %p287, %p288
      %p290 = scmp.ne.s32.totalorder %s278, %s279
      %p291 = scmp.eq.s32.totalorder %s28, 1
      %p292 = por %p290, %p291
      %p294 = scmp.ne.s32.totalorder %s279, %s293
      %p295 = scmp.eq.s32.totalorder %s28, 0
      %p296 = por %p294, %p295
      %s298 = sadd.s32 %s297, 1
      %p301 = scmp.eq.s32.totalorder %s22, 1
      %p302 = scmp.ne.s32.totalorder %s297, %s299
      %p303 = scmp.eq.s32.totalorder %s22, 0
      %p304 = por %p302, %p303
      %p305 = scmp.ne.s32.totalorder %s297, %s299
      %p306 = scmp.eq.s32.totalorder %s27, 1
      %p307 = por %p305, %p306
      %p308 = scmp.ne.s32.totalorder %s299, %s300
      %p309 = scmp.eq.s32.totalorder %s27, 0
      %p310 = por %p308, %p309
      %p311 = scmp.ne.s32.totalorder %s299, %s300
      %p312 = scmp.eq.s32.totalorder %s28, 1
      %p313 = por %p311, %p312
      %p315 = scmp.ne.s32.totalorder %s300, %s314
      %p316 = scmp.eq.s32.totalorder %s28, 0
      %p317 = por %p315, %p316
      %s318 = ssub.s32 %s22, %s29
      %p319 = scmp.eq.s32.totalorder %s318, 0
      %s321 = sadd.s32 %s320, 1
      %s322 = scalar_select %p319, %s320, %s321
      %p325 = pneg %p319
      %p326 = scmp.eq.s32.totalorder %s22, 1
      %p327 = por %p325, %p326
      %p328 = scmp.ne.s32.totalorder %s320, %s323
      %p329 = scmp.eq.s32.totalorder %s22, 0
      %p330 = por %p328, %p329
      %p331 = scmp.ne.s32.totalorder %s320, %s323
      %p332 = scmp.eq.s32.totalorder %s27, 1
      %p333 = por %p331, %p332
      %p334 = scmp.ne.s32.totalorder %s323, %s324
      %p335 = scmp.eq.s32.totalorder %s27, 0
      %p336 = por %p334, %p335
      %p337 = scmp.ne.s32.totalorder %s323, %s324
      %p338 = scmp.eq.s32.totalorder %s28, 1
      %p339 = por %p337, %p338
      %p341 = scmp.ne.s32.totalorder %s324, %s340
      %p342 = scmp.eq.s32.totalorder %s28, 0
      %p343 = por %p341, %p342
      %p344 = scmp.le.s32.totalorder 1, %s22
      %p345 = scmp.lt.s32.totalorder %s22, 3
      %p346 = pnand %p344, %p345
      %p347 = pneg %p346
      // Predicated region
      $region9: #{tpu_custom_call.1} parent=5 // pred_check
        _
      $region10: #{tpu_custom_call.1} parent=5 // pred_check_branch
        %349 = sbr.rel (%p346) target = $region12
      $region11: #{tpu_custom_call.1} parent=5 // pred_region
        %s350 = ssub.s32 %s22, 1
        // Predicated region
        $region13: #{tpu_custom_call.1} parent=11 // pred_check
          %p351 = pneg %p121
        $region14: #{tpu_custom_call.1} parent=11 // pred_check_branch
          %353 = sbr.rel (%p351) target = $region16
        $region15: #{tpu_custom_call.1} parent=11 // pred_region
          _
        $region16: #{tpu_custom_call.1} parent=11 // pred_fallthru
          _
        // Predicated region
        $region17: #{tpu_custom_call.1} parent=11 // pred_check
          %p354 = pneg %p142
        $region18: #{tpu_custom_call.1} parent=11 // pred_check_branch
          %356 = sbr.rel (%p354) target = $region20
        $region19: #{tpu_custom_call.1} parent=11 // pred_region
          _
        $region20: #{tpu_custom_call.1} parent=11 // pred_fallthru
          _
        // Predicated region
        $region21: #{tpu_custom_call.1} parent=11 // pred_check
          %p357 = pneg %p163
        $region22: #{tpu_custom_call.1} parent=11 // pred_check_branch
          %359 = sbr.rel (%p357) target = $region24
        $region23: #{tpu_custom_call.1} parent=11 // pred_region
          _
        $region24: #{tpu_custom_call.1} parent=11 // pred_fallthru
          _
        // Predicated region
        $region25: #{tpu_custom_call.1} parent=11 // pred_check
          %p360 = pneg %p184
        $region26: #{tpu_custom_call.1} parent=11 // pred_check_branch
          %362 = sbr.rel (%p360) target = $region28
        $region27: #{tpu_custom_call.1} parent=11 // pred_region
          _
        $region28: #{tpu_custom_call.1} parent=11 // pred_fallthru
          _
        // Predicated region
        $region29: #{tpu_custom_call.1} parent=11 // pred_check
          %p363 = pneg %p205
        $region30: #{tpu_custom_call.1} parent=11 // pred_check_branch
          %365 = sbr.rel (%p363) target = $region32
        $region31: #{tpu_custom_call.1} parent=11 // pred_region
          _
        $region32: #{tpu_custom_call.1} parent=11 // pred_fallthru
          _
        // Predicated region
        $region33: #{tpu_custom_call.1} parent=11 // pred_check
          %p366 = pneg %p226
        $region34: #{tpu_custom_call.1} parent=11 // pred_check_branch
          %368 = sbr.rel (%p366) target = $region36
        $region35: #{tpu_custom_call.1} parent=11 // pred_region
          _
        $region36: #{tpu_custom_call.1} parent=11 // pred_fallthru
          _
        // Predicated region
        $region37: #{tpu_custom_call.1} parent=11 // pred_check
          %p369 = pneg %p247
        $region38: #{tpu_custom_call.1} parent=11 // pred_check_branch
          %371 = sbr.rel (%p369) target = $region40
        $region39: #{tpu_custom_call.1} parent=11 // pred_region
          _
        $region40: #{tpu_custom_call.1} parent=11 // pred_fallthru
          _
        // Predicated region
        $region41: #{tpu_custom_call.1} parent=11 // pred_check
          %p372 = pneg %p268
        $region42: #{tpu_custom_call.1} parent=11 // pred_check_branch
          %374 = sbr.rel (%p372) target = $region44
        $region43: #{tpu_custom_call.1} parent=11 // pred_region
          _
        $region44: #{tpu_custom_call.1} parent=11 // pred_fallthru
          _
        // Predicated region
        $region45: #{tpu_custom_call.1} parent=11 // pred_check
          %p375 = pneg %p289
        $region46: #{tpu_custom_call.1} parent=11 // pred_check_branch
          %377 = sbr.rel (%p375) target = $region48
        $region47: #{tpu_custom_call.1} parent=11 // pred_region
          _
        $region48: #{tpu_custom_call.1} parent=11 // pred_fallthru
          _
        // Predicated region
        $region49: #{tpu_custom_call.1} parent=11 // pred_check
          %p378 = pneg %p310
        $region50: #{tpu_custom_call.1} parent=11 // pred_check_branch
          %380 = sbr.rel (%p378) target = $region52
        $region51: #{tpu_custom_call.1} parent=11 // pred_region
          _
        $region52: #{tpu_custom_call.1} parent=11 // pred_fallthru
          _
      $region12: #{tpu_custom_call.1} parent=5 // pred_fallthru
        _
      %p381 = scmp.lt.s32.totalorder %s22, 2
      // Predicated region
      $region53: #{tpu_custom_call.1} parent=5 // pred_check
        %p382 = pneg %p381
      $region54: #{tpu_custom_call.1} parent=5 // pred_check_branch
        %384 = sbr.rel (%p382) target = $region56
      $region55: #{tpu_custom_call.1} parent=5 // pred_region
        // Predicated region
        $region57: #{tpu_custom_call.1} parent=55 // pred_check
          %p385 = pneg %p42
        $region58: #{tpu_custom_call.1} parent=55 // pred_check_branch
          %387 = sbr.rel (%p385) target = $region60
        $region59: #{tpu_custom_call.1} parent=55 // pred_region
          %p388 = scmp.lt.s32.totalorder %s22, 1
          %s389 = scalar_select %p388, %s22, 1
          %s390 = smul.addr %s389, 16
          %s391 = smul.addr %s390, 4
          %s392 = scalar_lea.vmem %s0, %s391
        $region60: #{tpu_custom_call.1} parent=55 // pred_fallthru
          _
        // Predicated region
        $region61: #{tpu_custom_call.1} parent=55 // pred_check
          %p393 = pneg %p68
        $region62: #{tpu_custom_call.1} parent=55 // pred_check_branch
          %395 = sbr.rel (%p393) target = $region64
        $region63: #{tpu_custom_call.1} parent=55 // pred_region
          %p396 = scmp.lt.s32.totalorder %s22, 1
          %s397 = scalar_select %p396, %s22, 1
          %s398 = smul.addr %s397, 16
          %s399 = smul.addr %s398, 4
          %s400 = scalar_lea.vmem %s1, %s399
        $region64: #{tpu_custom_call.1} parent=55 // pred_fallthru
          _
        // Predicated region
        $region65: #{tpu_custom_call.1} parent=55 // pred_check
          %p401 = pneg %p94
        $region66: #{tpu_custom_call.1} parent=55 // pred_check_branch
          %403 = sbr.rel (%p401) target = $region68
        $region67: #{tpu_custom_call.1} parent=55 // pred_region
          %p404 = scmp.lt.s32.totalorder %s22, 1
          %s405 = scalar_select %p404, %s22, 1
          %s406 = smul.addr %s405, 16
          %s407 = smul.addr %s406, 8
          %s408 = scalar_lea.vmem %s2, %s407
        $region68: #{tpu_custom_call.1} parent=55 // pred_fallthru
          _
      $region56: #{tpu_custom_call.1} parent=5 // pred_fallthru
        _
      %p409 = scmp.le.s32.totalorder 1, %s22
      %p410 = scmp.lt.s32.totalorder %s22, 3
      %p411 = pnand %p409, %p410
      %p412 = pneg %p411
      // Predicated region
      $region69: #{tpu_custom_call.1} parent=5 // pred_check
        _
      $region70: #{tpu_custom_call.1} parent=5 // pred_check_branch
        %414 = sbr.rel (%p411) target = $region72
      $region71: #{tpu_custom_call.1} parent=5 // pred_region
        %s415 = ssub.s32 %s22, 1
        %p416 = scmp.lt.s32.totalorder %s27, 1
        %s417 = scalar_select %p416, %s27, 1
        %s418 = smul.addr %s417, 16
        %s419 = smul.addr %s418, 4
        %s420 = scalar_lea.vmem %s0, %s419
        %p421 = pneg %p48
        %p422 = pneg %p45
        %p423 = scmp.lt.s32.totalorder %s27, 1
        %s424 = scalar_select %p423, %s27, 1
        %s425 = smul.addr %s424, 16
        %s426 = smul.addr %s425, 4
        %s427 = scalar_lea.vmem %s1, %s426
        %p428 = pneg %p74
        %p429 = pneg %p71
        %p430 = scmp.lt.s32.totalorder %s27, 1
        %s431 = scalar_select %p430, %s27, 1
        %s432 = smul.addr %s431, 16
        %s433 = smul.addr %s432, 8
        %s434 = scalar_lea.vmem %s2, %s433
        %p435 = pneg %p100
        %p436 = pneg %p97
        %p437 = pneg %p121
        %p438 = pneg %p118
        %p439 = pneg %p142
        %p440 = pneg %p139
        %p441 = pneg %p163
        %p442 = pneg %p160
        %p443 = pneg %p184
        %p444 = pneg %p181
        %p445 = pneg %p205
        %p446 = pneg %p202
        %p447 = pneg %p226
        %p448 = pneg %p223
        %p449 = pneg %p247
        %p450 = pneg %p244
        %p451 = pneg %p268
        %p452 = pneg %p265
        %p453 = pneg %p289
        %p454 = pneg %p286
        %p455 = pneg %p310
        %p456 = pneg %p307
        %p457 = pneg %p336
        %p458 = pneg %p333
        %s459 = sand.u32 %s323, 1
        %s460 = scalar_lea.sflag [#allocation3], %s459
        %s461 = sand.u32 %s323, 1
        %s462 = smul.addr %s461, 8
        %s463 = scalar_lea.vmem [#allocation2], %s462
        %p464 = scmp.lt.s32.totalorder %s27, 1
        %s465 = scalar_select %p464, %s27, 1
        %s466 = smul.addr %s465, 16
        %s467 = smul.addr %s466, 4
        %s468 = scalar_lea.vmem %s0, %s467
        %p469 = scmp.lt.s32.totalorder %s27, 1
        %s470 = scalar_select %p469, %s27, 1
        %s471 = smul.addr %s470, 16
        %s472 = smul.addr %s471, 4
        %s473 = scalar_lea.vmem %s1, %s472
        %p474 = scmp.lt.s32.totalorder %s27, 1
        %s475 = scalar_select %p474, %s27, 1
        %s476 = smul.addr %s475, 16
        %s477 = smul.addr %s476, 8
        %s478 = scalar_lea.vmem %s2, %s477
        %v480 = vld [vmem:[%s468] sm:$0xf]
        %v481 = vld [vmem:[%s468 + $0x4] sm:$0xf]
        %v482 = vld [vmem:[%s468 + $0x8] sm:$0xf]
        %v483 = vld [vmem:[%s468 + $0xc] sm:$0xf]
        %v484 = vld [vmem:[%s468 + $0x10] sm:$0xf]
        %v485 = vld [vmem:[%s468 + $0x14] sm:$0xf]
        %v486 = vld [vmem:[%s468 + $0x18] sm:$0xf]
        %v487 = vld [vmem:[%s468 + $0x1c] sm:$0xf]
        %v488 = vld [vmem:[%s468 + $0x20] sm:$0xf]
        %v489 = vld [vmem:[%s468 + $0x24] sm:$0xf]
        %v490 = vld [vmem:[%s468 + $0x28] sm:$0xf]
        %v491 = vld [vmem:[%s468 + $0x2c] sm:$0xf]
        %v492 = vld [vmem:[%s468 + $0x30] sm:$0xf]
        %v493 = vld [vmem:[%s468 + $0x34] sm:$0xf]
        %v494 = vld [vmem:[%s468 + $0x38] sm:$0xf]
        %v495 = vld [vmem:[%s468 + $0x3c] sm:$0xf]
        %v496 = vld [vmem:[%s473] sm:$0xf]
        %v497 = vld [vmem:[%s473 + $0x4] sm:$0xf]
        %v498 = vld [vmem:[%s473 + $0x8] sm:$0xf]
        %v499 = vld [vmem:[%s473 + $0xc] sm:$0xf]
        %v500 = vld [vmem:[%s473 + $0x10] sm:$0xf]
        %v501 = vld [vmem:[%s473 + $0x14] sm:$0xf]
        %v502 = vld [vmem:[%s473 + $0x18] sm:$0xf]
        %v503 = vld [vmem:[%s473 + $0x1c] sm:$0xf]
        %v504 = vld [vmem:[%s473 + $0x20] sm:$0xf]
        %v505 = vld [vmem:[%s473 + $0x24] sm:$0xf]
        %v506 = vld [vmem:[%s473 + $0x28] sm:$0xf]
        %v507 = vld [vmem:[%s473 + $0x2c] sm:$0xf]
        %v508 = vld [vmem:[%s473 + $0x30] sm:$0xf]
        %v509 = vld [vmem:[%s473 + $0x34] sm:$0xf]
        %v510 = vld [vmem:[%s473 + $0x38] sm:$0xf]
        %v511 = vld [vmem:[%s473 + $0x3c] sm:$0xf]
        %v512 = vld [vmem:[%s478] sm:$0xff]
        %v513 = vld [vmem:[%s478 + $0x8] sm:$0xff]
        %v514 = vld [vmem:[%s478 + $0x10] sm:$0xff]
        %v515 = vld [vmem:[%s478 + $0x18] sm:$0xff]
        %v516 = vld [vmem:[%s478 + $0x20] sm:$0xff]
        %v517 = vld [vmem:[%s478 + $0x28] sm:$0xff]
        %v518 = vld [vmem:[%s478 + $0x30] sm:$0xff]
        %v519 = vld [vmem:[%s478 + $0x38] sm:$0xff]
        %v520 = vld [vmem:[%s478 + $0x40] sm:$0xff]
        %v521 = vld [vmem:[%s478 + $0x48] sm:$0xff]
        %v522 = vld [vmem:[%s478 + $0x50] sm:$0xff]
        %v523 = vld [vmem:[%s478 + $0x58] sm:$0xff]
        %v524 = vld [vmem:[%s478 + $0x60] sm:$0xff]
        %v525 = vld [vmem:[%s478 + $0x68] sm:$0xff]
        %v526 = vld [vmem:[%s478 + $0x70] sm:$0xff]
        %v527 = vld [vmem:[%s478 + $0x78] sm:$0xff]
        %v528 = vld [vmem:[%s6] sm:$0x1]
        %v529 = vld [vmem:[%s7] sm:$0x1]
        %v530 = vld [vmem:[%s8] sm:$0x1]
        %v531 = vld [vmem:[%s3] sm:$0xf]
        %v548 = vunpack.c.l.b16 %v480
        %v549 = vunpack.c.l.b16 %v481
        %v550 = vunpack.c.l.b16 %v482
        %v551 = vunpack.c.l.b16 %v483
        %v552 = vunpack.c.l.b16 %v484
        %v553 = vunpack.c.l.b16 %v485
        %v554 = vunpack.c.l.b16 %v486
        %v555 = vunpack.c.l.b16 %v487
        %v556 = vunpack.c.l.b16 %v488
        %v557 = vunpack.c.l.b16 %v489
        %v558 = vunpack.c.l.b16 %v490
        %v559 = vunpack.c.l.b16 %v491
        %v560 = vunpack.c.l.b16 %v492
        %v561 = vunpack.c.l.b16 %v493
        %v562 = vunpack.c.l.b16 %v494
        %v563 = vunpack.c.l.b16 %v495
        %v564 = vpack.c.b16 %v549, %v548
        %v565 = vpack.c.b16 %v551, %v550
        %v566 = vpack.c.b16 %v553, %v552
        %v567 = vpack.c.b16 %v555, %v554
        %v568 = vpack.c.b16 %v557, %v556
        %v569 = vpack.c.b16 %v559, %v558
        %v570 = vpack.c.b16 %v561, %v560
        %v571 = vpack.c.b16 %v563, %v562
        %vm572 = vcmask 64512
        %v574 = vsel %vm572, %v564, 0
        %v577 = vsel %vm572, %v565, 0
        %v580 = vsel %vm572, %v566, 0
        %v583 = vsel %vm572, %v567, 0
        %v586 = vsel %vm572, %v568, 0
        %v589 = vsel %vm572, %v569, 0
        %v592 = vsel %vm572, %v570, 0
        %v595 = vsel %vm572, %v571, 0
        %vm597 = vcmask 1043456
        %v599 = vsel %vm597, %v531, 0
        %601 = vmatprep.subr.bf16.mxu0 0
        %602 = vmatpush1.bf16.msra.mxu0 %v599
        %603 = vmatprep.subr.bf16.mxu0 0
        %604 = vmatpush1.bf16.msra.mxu0 0
        %605 = vmatprep.subr.bf16.mxu0 0
        %606 = vmatpush1.bf16.msra.mxu0 0
        %607 = vmatprep.subr.bf16.mxu0 0
        %608 = vmatpush1.bf16.msra.mxu0 0
        %609 = vmatprep.subr.bf16.mxu0 0
        %610 = vmatpush1.bf16.msra.mxu0 0
        %611 = vmatprep.subr.bf16.mxu0 0
        %612 = vmatpush1.bf16.msra.mxu0 0
        %613 = vmatprep.subr.bf16.mxu0 0
        %614 = vmatpush1.bf16.msra.mxu0 0
        %615 = vmatprep.subr.bf16.mxu0 0
        %616 = vmatpush1.bf16.msra.mxu0 0
        %617 = vmatprep.subr.bf16.mxu0 0
        %618 = vmatpush1.bf16.msra.mxu0 0
        %619 = vmatprep.subr.bf16.mxu0 0
        %620 = vmatpush1.bf16.msra.mxu0 0
        %621 = vmatprep.subr.bf16.mxu0 0
        %622 = vmatpush1.bf16.msra.mxu0 0
        %623 = vmatprep.subr.bf16.mxu0 0
        %624 = vmatpush1.bf16.msra.mxu0 0
        %625 = vmatprep.subr.bf16.mxu0 0
        %626 = vmatpush1.bf16.msra.mxu0 0
        %627 = vmatprep.subr.bf16.mxu0 0
        %628 = vmatpush1.bf16.msra.mxu0 0
        %629 = vmatprep.subr.bf16.mxu0 0
        %630 = vmatpush1.bf16.msra.mxu0 0
        %631 = vmatprep.subr.bf16.mxu0 0
        %632 = vmatpush1.bf16.msra.mxu0 0
        %633 = vmatprep.mubr.bf16.mxu0 0
        %634 = vmatmul.mubr.bf16.gmra.mrb[0].mxu0 %v574
        %v635 = vpop.f32.mrb[0].mxu0
        %v636 = vadd.f32 0.0, %v635
        %v637 = vpop.f32.mrb[0].mxu0
        %v638 = vpop.f32.mrb[0].mxu0
        %v639 = vadd.f32 0.0, %v638
        %v640 = vpop.f32.mrb[0].mxu0
        %641 = vmatprep.mubr.bf16.mxu0 0
        %642 = vmatmul.mubr.bf16.gmra.mrb[0].mxu0 %v577
        %v643 = vpop.f32.mrb[0].mxu0
        %v644 = vadd.f32 0.0, %v643
        %v645 = vpop.f32.mrb[0].mxu0
        %v646 = vpop.f32.mrb[0].mxu0
        %v647 = vadd.f32 0.0, %v646
        %v648 = vpop.f32.mrb[0].mxu0
        %649 = vmatprep.mubr.bf16.mxu0 0
        %650 = vmatmul.mubr.bf16.gmra.mrb[0].mxu0 %v580
        %v651 = vpop.f32.mrb[0].mxu0
        %v652 = vadd.f32 0.0, %v651
        %v653 = vpop.f32.mrb[0].mxu0
        %v654 = vpop.f32.mrb[0].mxu0
        %v655 = vadd.f32 0.0, %v654
        %v656 = vpop.f32.mrb[0].mxu0
        %657 = vmatprep.mubr.bf16.mxu0 0
        %658 = vmatmul.mubr.bf16.gmra.mrb[0].mxu0 %v583
        %v659 = vpop.f32.mrb[0].mxu0
        %v660 = vadd.f32 0.0, %v659
        %v661 = vpop.f32.mrb[0].mxu0
        %v662 = vpop.f32.mrb[0].mxu0
        %v663 = vadd.f32 0.0, %v662
        %v664 = vpop.f32.mrb[0].mxu0
        %665 = vmatprep.mubr.bf16.mxu0 0
        %666 = vmatmul.mubr.bf16.gmra.mrb[0].mxu0 %v586
        %v667 = vpop.f32.mrb[0].mxu0
        %v668 = vadd.f32 0.0, %v667
        %v669 = vpop.f32.mrb[0].mxu0
        %v670 = vpop.f32.mrb[0].mxu0
        %v671 = vadd.f32 0.0, %v670
        %v672 = vpop.f32.mrb[0].mxu0
        %673 = vmatprep.mubr.bf16.mxu0 0
        %674 = vmatmul.mubr.bf16.gmra.mrb[0].mxu0 %v589
        %v675 = vpop.f32.mrb[0].mxu0
        %v676 = vadd.f32 0.0, %v675
        %v677 = vpop.f32.mrb[0].mxu0
        %v678 = vpop.f32.mrb[0].mxu0
        %v679 = vadd.f32 0.0, %v678
        %v680 = vpop.f32.mrb[0].mxu0
        %681 = vmatprep.mubr.bf16.mxu0 0
        %682 = vmatmul.mubr.bf16.gmra.mrb[0].mxu0 %v592
        %v683 = vpop.f32.mrb[0].mxu0
        %v684 = vadd.f32 0.0, %v683
        %v685 = vpop.f32.mrb[0].mxu0
        %v686 = vpop.f32.mrb[0].mxu0
        %v687 = vadd.f32 0.0, %v686
        %v688 = vpop.f32.mrb[0].mxu0
        %689 = vmatprep.mubr.bf16.mxu0 0
        %690 = vmatmul.mubr.bf16.gmra.mrb[0].mxu0 %v595
        %v691 = vpop.f32.mrb[0].mxu0
        %v692 = vadd.f32 0.0, %v691
        %v693 = vpop.f32.mrb[0].mxu0
        %v694 = vpop.f32.mrb[0].mxu0
        %v695 = vadd.f32 0.0, %v694
        %v696 = vpop.f32.mrb[0].mxu0
        %697 = vdwg.mxu0
        %699 = vset.pattern.permute.xlu0 0
        %700 = vperm.xlu0 %699, %v512
        %v701 = vpop.permute.xlu0 %700
        %704 = vset.pattern.permute.xlu0 0
        %705 = vperm.xlu0 %704, %v513
        %v706 = vpop.permute.xlu0 %705
        %709 = vset.pattern.permute.xlu0 0
        %710 = vperm.xlu0 %709, %v514
        %v711 = vpop.permute.xlu0 %710
        %714 = vset.pattern.permute.xlu0 0
        %715 = vperm.xlu0 %714, %v515
        %v716 = vpop.permute.xlu0 %715
        %719 = vset.pattern.permute.xlu0 0
        %720 = vperm.xlu0 %719, %v516
        %v721 = vpop.permute.xlu0 %720
        %724 = vset.pattern.permute.xlu0 0
        %725 = vperm.xlu0 %724, %v517
        %v726 = vpop.permute.xlu0 %725
        %729 = vset.pattern.permute.xlu0 0
        %730 = vperm.xlu0 %729, %v518
        %v731 = vpop.permute.xlu0 %730
        %734 = vset.pattern.permute.xlu0 0
        %735 = vperm.xlu0 %734, %v519
        %v736 = vpop.permute.xlu0 %735
        %739 = vset.pattern.permute.xlu0 0
        %740 = vperm.xlu0 %739, %v520
        %v741 = vpop.permute.xlu0 %740
        %744 = vset.pattern.permute.xlu0 0
        %745 = vperm.xlu0 %744, %v521
        %v746 = vpop.permute.xlu0 %745
        %749 = vset.pattern.permute.xlu0 0
        %750 = vperm.xlu0 %749, %v522
        %v751 = vpop.permute.xlu0 %750
        %754 = vset.pattern.permute.xlu0 0
        %755 = vperm.xlu0 %754, %v523
        %v756 = vpop.permute.xlu0 %755
        %759 = vset.pattern.permute.xlu0 0
        %760 = vperm.xlu0 %759, %v524
        %v761 = vpop.permute.xlu0 %760
        %764 = vset.pattern.permute.xlu0 0
        %765 = vperm.xlu0 %764, %v525
        %v766 = vpop.permute.xlu0 %765
        %769 = vset.pattern.permute.xlu0 0
        %770 = vperm.xlu0 %769, %v526
        %v771 = vpop.permute.xlu0 %770
        %774 = vset.pattern.permute.xlu0 0
        %775 = vperm.xlu0 %774, %v527
        %v776 = vpop.permute.xlu0 %775
        %v778 = vmul.f32 %v701, %v636
        %v779 = vmul.f32 %v706, %v639
        %v780 = vmul.f32 %v711, %v644
        %v781 = vmul.f32 %v716, %v647
        %v782 = vmul.f32 %v721, %v652
        %v783 = vmul.f32 %v726, %v655
        %v784 = vmul.f32 %v731, %v660
        %v785 = vmul.f32 %v736, %v663
        %v786 = vmul.f32 %v741, %v668
        %v787 = vmul.f32 %v746, %v671
        %v788 = vmul.f32 %v751, %v676
        %v789 = vmul.f32 %v756, %v679
        %v790 = vmul.f32 %v761, %v684
        %v791 = vmul.f32 %v766, %v687
        %v792 = vmul.f32 %v771, %v692
        %v793 = vmul.f32 %v776, %v695
        %v794 = vpack.c.bf16 %v779, %v778
        %v795 = vpack.c.bf16 %v781, %v780
        %v796 = vpack.c.bf16 %v783, %v782
        %v797 = vpack.c.bf16 %v785, %v784
        %v798 = vpack.c.bf16 %v787, %v786
        %v799 = vpack.c.bf16 %v789, %v788
        %v800 = vpack.c.bf16 %v791, %v790
        %v801 = vpack.c.bf16 %v793, %v792
        %v818 = vunpack.c.l.b16 %v496
        %v819 = vunpack.c.l.b16 %v497
        %v820 = vunpack.c.l.b16 %v498
        %v821 = vunpack.c.l.b16 %v499
        %v822 = vunpack.c.l.b16 %v500
        %v823 = vunpack.c.l.b16 %v501
        %v824 = vunpack.c.l.b16 %v502
        %v825 = vunpack.c.l.b16 %v503
        %v826 = vunpack.c.l.b16 %v504
        %v827 = vunpack.c.l.b16 %v505
        %v828 = vunpack.c.l.b16 %v506
        %v829 = vunpack.c.l.b16 %v507
        %v830 = vunpack.c.l.b16 %v508
        %v831 = vunpack.c.l.b16 %v509
        %v832 = vunpack.c.l.b16 %v510
        %v833 = vunpack.c.l.b16 %v511
        %v834 = vpack.c.b16 %v819, %v818
        %v835 = vpack.c.b16 %v821, %v820
        %v836 = vpack.c.b16 %v823, %v822
        %v837 = vpack.c.b16 %v825, %v824
        %v838 = vpack.c.b16 %v827, %v826
        %v839 = vpack.c.b16 %v829, %v828
        %v840 = vpack.c.b16 %v831, %v830
        %v841 = vpack.c.b16 %v833, %v832
        %850 = vmatprep.subr.bf16.mxu0 0
        %851 = vmatpush1.bf16.msra.mxu0 %v794
        %852 = vmatprep.subr.bf16.mxu0 0
        %853 = vmatpush1.bf16.msra.mxu0 %v795
        %854 = vmatprep.subr.bf16.mxu0 0
        %855 = vmatpush1.bf16.msra.mxu0 %v796
        %856 = vmatprep.subr.bf16.mxu0 0
        %857 = vmatpush1.bf16.msra.mxu0 %v797
        %858 = vmatprep.subr.bf16.mxu0 0
        %859 = vmatpush1.bf16.msra.mxu0 %v798
        %860 = vmatprep.subr.bf16.mxu0 0
        %861 = vmatpush1.bf16.msra.mxu0 %v799
        %862 = vmatprep.subr.bf16.mxu0 0
        %863 = vmatpush1.bf16.msra.mxu0 %v800
        %864 = vmatprep.subr.bf16.mxu0 0
        %865 = vmatpush1.bf16.msra.mxu0 %v801
        %866 = vmatprep.subr.bf16.mxu0 0
        %867 = vmatpush1.bf16.msra.mxu0 0
        %868 = vmatprep.subr.bf16.mxu0 0
        %869 = vmatpush1.bf16.msra.mxu0 0
        %870 = vmatprep.subr.bf16.mxu0 0
        %871 = vmatpush1.bf16.msra.mxu0 0
        %872 = vmatprep.subr.bf16.mxu0 0
        %873 = vmatpush1.bf16.msra.mxu0 0
        %874 = vmatprep.subr.bf16.mxu0 0
        %875 = vmatpush1.bf16.msra.mxu0 0
        %876 = vmatprep.subr.bf16.mxu0 0
        %877 = vmatpush1.bf16.msra.mxu0 0
        %878 = vmatprep.subr.bf16.mxu0 0
        %879 = vmatpush1.bf16.msra.mxu0 0
        %880 = vmatprep.subr.bf16.mxu0 0
        %881 = vmatpush1.bf16.msra.mxu0 0
        %882 = vmatprep.mubr.bf16.mxu0 0
        %883 = vmatmul.mubr.bf16.gmra.mrb[0].mxu0 %v834
        %v884 = vpop.f32.mrb[0].mxu0
        %v885 = vadd.f32 0.0, %v884
        %v886 = vpop.f32.mrb[0].mxu0
        %v887 = vpop.f32.mrb[0].mxu0
        %v888 = vadd.f32 0.0, %v887
        %v889 = vpop.f32.mrb[0].mxu0
        %890 = vmatprep.mubr.bf16.mxu0 0
        %891 = vmatmul.mubr.bf16.gmra.mrb[0].mxu0 %v835
        %v892 = vpop.f32.mrb[0].mxu0
        %v893 = vadd.f32 0.0, %v892
        %v894 = vpop.f32.mrb[0].mxu0
        %v895 = vpop.f32.mrb[0].mxu0
        %v896 = vadd.f32 0.0, %v895
        %v897 = vpop.f32.mrb[0].mxu0
        %898 = vmatprep.mubr.bf16.mxu0 0
        %899 = vmatmul.mubr.bf16.gmra.mrb[0].mxu0 %v836
        %v900 = vpop.f32.mrb[0].mxu0
        %v901 = vadd.f32 0.0, %v900
        %v902 = vpop.f32.mrb[0].mxu0
        %v903 = vpop.f32.mrb[0].mxu0
        %v904 = vadd.f32 0.0, %v903
        %v905 = vpop.f32.mrb[0].mxu0
        %906 = vmatprep.mubr.bf16.mxu0 0
        %907 = vmatmul.mubr.bf16.gmra.mrb[0].mxu0 %v837
        %v908 = vpop.f32.mrb[0].mxu0
        %v909 = vadd.f32 0.0, %v908
        %v910 = vpop.f32.mrb[0].mxu0
        %v911 = vpop.f32.mrb[0].mxu0
        %v912 = vadd.f32 0.0, %v911
        %v913 = vpop.f32.mrb[0].mxu0
        %914 = vmatprep.mubr.bf16.mxu0 0
        %915 = vmatmul.mubr.bf16.gmra.mrb[0].mxu0 %v838
        %v916 = vpop.f32.mrb[0].mxu0
        %v917 = vadd.f32 0.0, %v916
        %v918 = vpop.f32.mrb[0].mxu0
        %v919 = vpop.f32.mrb[0].mxu0
        %v920 = vadd.f32 0.0, %v919
        %v921 = vpop.f32.mrb[0].mxu0
        %922 = vmatprep.mubr.bf16.mxu0 0
        %923 = vmatmul.mubr.bf16.gmra.mrb[0].mxu0 %v839
        %v924 = vpop.f32.mrb[0].mxu0
        %v925 = vadd.f32 0.0, %v924
        %v926 = vpop.f32.mrb[0].mxu0
        %v927 = vpop.f32.mrb[0].mxu0
        %v928 = vadd.f32 0.0, %v927
        %v929 = vpop.f32.mrb[0].mxu0
        %930 = vmatprep.mubr.bf16.mxu0 0
        %931 = vmatmul.mubr.bf16.gmra.mrb[0].mxu0 %v840
        %v932 = vpop.f32.mrb[0].mxu0
        %v933 = vadd.f32 0.0, %v932
        %v934 = vpop.f32.mrb[0].mxu0
        %v935 = vpop.f32.mrb[0].mxu0
        %v936 = vadd.f32 0.0, %v935
        %v937 = vpop.f32.mrb[0].mxu0
        %938 = vmatprep.mubr.bf16.mxu0 0
        %939 = vmatmul.mubr.bf16.gmra.mrb[0].mxu0 %v841
        %v940 = vpop.f32.mrb[0].mxu0
        %v941 = vadd.f32 0.0, %v940
        %v942 = vpop.f32.mrb[0].mxu0
        %v943 = vpop.f32.mrb[0].mxu0
        %v944 = vadd.f32 0.0, %v943
        %v945 = vpop.f32.mrb[0].mxu0
        %946 = vdwg.mxu0
        %v947 = vmul.f32 %v701, %v885
        %v948 = vmul.f32 %v706, %v888
        %v949 = vmul.f32 %v711, %v893
        %v950 = vmul.f32 %v716, %v896
        %v951 = vmul.f32 %v721, %v901
        %v952 = vmul.f32 %v726, %v904
        %v953 = vmul.f32 %v731, %v909
        %v954 = vmul.f32 %v736, %v912
        %v955 = vmul.f32 %v741, %v917
        %v956 = vmul.f32 %v746, %v920
        %v957 = vmul.f32 %v751, %v925
        %v958 = vmul.f32 %v756, %v928
        %v959 = vmul.f32 %v761, %v933
        %v960 = vmul.f32 %v766, %v936
        %v961 = vmul.f32 %v771, %v941
        %v962 = vmul.f32 %v776, %v944
        %v963 = vld [vmem:[%s4] sm:$0x1]
        %v965 = vlaneseq
        %v966 = vshrl.u32 %v965, 7
        %v967 = vsub.s32 0, %v966
        %v968 = vrot.slane %v963, %v967
        %v970 = vadd.f32 %v947, %v968
        %v971 = vadd.f32 %v948, %v968
        %v972 = vadd.f32 %v949, %v968
        %v973 = vadd.f32 %v950, %v968
        %v974 = vadd.f32 %v951, %v968
        %v975 = vadd.f32 %v952, %v968
        %v976 = vadd.f32 %v953, %v968
        %v977 = vadd.f32 %v954, %v968
        %v978 = vadd.f32 %v955, %v968
        %v979 = vadd.f32 %v956, %v968
        %v980 = vadd.f32 %v957, %v968
        %v981 = vadd.f32 %v958, %v968
        %v982 = vadd.f32 %v959, %v968
        %v983 = vadd.f32 %v960, %v968
        %v984 = vadd.f32 %v961, %v968
        %v985 = vadd.f32 %v962, %v968
        %vm986 = vcmp.ge.f32.partialorder %v970, 0.0
        %vm987 = vcmp.ge.f32.partialorder %v971, 0.0
        %vm988 = vcmp.ge.f32.partialorder %v972, 0.0
        %vm989 = vcmp.ge.f32.partialorder %v973, 0.0
        %vm990 = vcmp.ge.f32.partialorder %v974, 0.0
        %vm991 = vcmp.ge.f32.partialorder %v975, 0.0
        %vm992 = vcmp.ge.f32.partialorder %v976, 0.0
        %vm993 = vcmp.ge.f32.partialorder %v977, 0.0
        %vm994 = vcmp.ge.f32.partialorder %v978, 0.0
        %vm995 = vcmp.ge.f32.partialorder %v979, 0.0
        %vm996 = vcmp.ge.f32.partialorder %v980, 0.0
        %vm997 = vcmp.ge.f32.partialorder %v981, 0.0
        %vm998 = vcmp.ge.f32.partialorder %v982, 0.0
        %vm999 = vcmp.ge.f32.partialorder %v983, 0.0
        %vm1000 = vcmp.ge.f32.partialorder %v984, 0.0
        %vm1001 = vcmp.ge.f32.partialorder %v985, 0.0
        %v1002 = vmul.f32 %v970, 0.01
        %v1003 = vmul.f32 %v971, 0.01
        %v1004 = vmul.f32 %v972, 0.01
        %v1005 = vmul.f32 %v973, 0.01
        %v1006 = vmul.f32 %v974, 0.01
        %v1007 = vmul.f32 %v975, 0.01
        %v1008 = vmul.f32 %v976, 0.01
        %v1009 = vmul.f32 %v977, 0.01
        %v1010 = vmul.f32 %v978, 0.01
        %v1011 = vmul.f32 %v979, 0.01
        %v1012 = vmul.f32 %v980, 0.01
        %v1013 = vmul.f32 %v981, 0.01
        %v1014 = vmul.f32 %v982, 0.01
        %v1015 = vmul.f32 %v983, 0.01
        %v1016 = vmul.f32 %v984, 0.01
        %v1017 = vmul.f32 %v985, 0.01
        %v1018 = vsel %vm986, %v970, %v1002
        %v1019 = vsel %vm987, %v971, %v1003
        %v1020 = vsel %vm988, %v972, %v1004
        %v1021 = vsel %vm989, %v973, %v1005
        %v1022 = vsel %vm990, %v974, %v1006
        %v1023 = vsel %vm991, %v975, %v1007
        %v1024 = vsel %vm992, %v976, %v1008
        %v1025 = vsel %vm993, %v977, %v1009
        %v1026 = vsel %vm994, %v978, %v1010
        %v1027 = vsel %vm995, %v979, %v1011
        %v1028 = vsel %vm996, %v980, %v1012
        %v1029 = vsel %vm997, %v981, %v1013
        %v1030 = vsel %vm998, %v982, %v1014
        %v1031 = vsel %vm999, %v983, %v1015
        %v1032 = vsel %vm1000, %v984, %v1016
        %v1033 = vsel %vm1001, %v985, %v1017
        %v1034 = vpack.c.bf16 %v1019, %v1018
        %v1035 = vpack.c.bf16 %v1021, %v1020
        %v1036 = vpack.c.bf16 %v1023, %v1022
        %v1037 = vpack.c.bf16 %v1025, %v1024
        %v1038 = vpack.c.bf16 %v1027, %v1026
        %v1039 = vpack.c.bf16 %v1029, %v1028
        %v1040 = vpack.c.bf16 %v1031, %v1030
        %v1041 = vpack.c.bf16 %v1033, %v1032
        %v1042 = vld [vmem:[%s5] sm:$0xff]
        %v1043 = vld [vmem:[%s5 + $0x8] sm:$0xff]
        %v1044 = vld [vmem:[%s5 + $0x10] sm:$0xff]
        %v1045 = vld [vmem:[%s5 + $0x18] sm:$0xff]
        %v1050 = vunpack.c.l.b16 %v1042
        %v1051 = vunpack.c.h.b16 %v1042
        %v1052 = vunpack.c.l.b16 %v1043
        %v1053 = vunpack.c.h.b16 %v1043
        %v1054 = vunpack.c.l.b16 %v1044
        %v1055 = vunpack.c.h.b16 %v1044
        %v1056 = vunpack.c.l.b16 %v1045
        %v1057 = vunpack.c.h.b16 %v1045
        %v1058 = vpack.c.b16 %v1052, %v1050
        %v1059 = vpack.c.b16 %v1053, %v1051
        %v1060 = vpack.c.b16 %v1056, %v1054
        %v1061 = vpack.c.b16 %v1057, %v1055
        %vm1066 = vcmask 261120
        %v1068 = vsel %vm1066, %v1034, 0
        %v1071 = vsel %vm1066, %v1035, 0
        %v1074 = vsel %vm1066, %v1036, 0
        %v1077 = vsel %vm1066, %v1037, 0
        %v1080 = vsel %vm1066, %v1038, 0
        %v1083 = vsel %vm1066, %v1039, 0
        %v1086 = vsel %vm1066, %v1040, 0
        %v1089 = vsel %vm1066, %v1041, 0
        %1091 = vmatprep.subr.bf16.mxu0 %v1059
        %1092 = vmatpush1.bf16.msra.mxu0 %v1058
        %1093 = vmatprep.subr.bf16.mxu0 %v1061
        %1094 = vmatpush1.bf16.msra.mxu0 %v1060
        %1095 = vmatprep.subr.bf16.mxu0 0
        %1096 = vmatpush1.bf16.msra.mxu0 0
        %1097 = vmatprep.subr.bf16.mxu0 0
        %1098 = vmatpush1.bf16.msra.mxu0 0
        %1099 = vmatprep.subr.bf16.mxu0 0
        %1100 = vmatpush1.bf16.msra.mxu0 0
        %1101 = vmatprep.subr.bf16.mxu0 0
        %1102 = vmatpush1.bf16.msra.mxu0 0
        %1103 = vmatprep.subr.bf16.mxu0 0
        %1104 = vmatpush1.bf16.msra.mxu0 0
        %1105 = vmatprep.subr.bf16.mxu0 0
        %1106 = vmatpush1.bf16.msra.mxu0 0
        %1107 = vmatprep.subr.bf16.mxu0 0
        %1108 = vmatpush1.bf16.msra.mxu0 0
        %1109 = vmatprep.subr.bf16.mxu0 0
        %1110 = vmatpush1.bf16.msra.mxu0 0
        %1111 = vmatprep.subr.bf16.mxu0 0
        %1112 = vmatpush1.bf16.msra.mxu0 0
        %1113 = vmatprep.subr.bf16.mxu0 0
        %1114 = vmatpush1.bf16.msra.mxu0 0
        %1115 = vmatprep.subr.bf16.mxu0 0
        %1116 = vmatpush1.bf16.msra.mxu0 0
        %1117 = vmatprep.subr.bf16.mxu0 0
        %1118 = vmatpush1.bf16.msra.mxu0 0
        %1119 = vmatprep.subr.bf16.mxu0 0
        %1120 = vmatpush1.bf16.msra.mxu0 0
        %1121 = vmatprep.subr.bf16.mxu0 0
        %1122 = vmatpush1.bf16.msra.mxu0 0
        %1123 = vmatprep.mubr.bf16.mxu0 0
        %1124 = vmatmul.mubr.bf16.gmra.mrb[0].mxu0 %v1068
        %v1125 = vpop.f32.mrb[0].mxu0
        %v1126 = vadd.f32 0.0, %v1125
        %v1127 = vpop.f32.mrb[0].mxu0
        %v1128 = vadd.f32 0.0, %v1127
        %v1129 = vpop.f32.mrb[0].mxu0
        %v1130 = vadd.f32 0.0, %v1129
        %v1131 = vpop.f32.mrb[0].mxu0
        %v1132 = vadd.f32 0.0, %v1131
        %1133 = vmatprep.mubr.bf16.mxu0 0
        %1134 = vmatmul.mubr.bf16.gmra.mrb[0].mxu0 %v1071
        %v1135 = vpop.f32.mrb[0].mxu0
        %v1136 = vadd.f32 0.0, %v1135
        %v1137 = vpop.f32.mrb[0].mxu0
        %v1138 = vadd.f32 0.0, %v1137
        %v1139 = vpop.f32.mrb[0].mxu0
        %v1140 = vadd.f32 0.0, %v1139
        %v1141 = vpop.f32.mrb[0].mxu0
        %v1142 = vadd.f32 0.0, %v1141
        %1143 = vmatprep.mubr.bf16.mxu0 0
        %1144 = vmatmul.mubr.bf16.gmra.mrb[0].mxu0 %v1074
        %v1145 = vpop.f32.mrb[0].mxu0
        %v1146 = vadd.f32 0.0, %v1145
        %v1147 = vpop.f32.mrb[0].mxu0
        %v1148 = vadd.f32 0.0, %v1147
        %v1149 = vpop.f32.mrb[0].mxu0
        %v1150 = vadd.f32 0.0, %v1149
        %v1151 = vpop.f32.mrb[0].mxu0
        %v1152 = vadd.f32 0.0, %v1151
        %1153 = vmatprep.mubr.bf16.mxu0 0
        %1154 = vmatmul.mubr.bf16.gmra.mrb[0].mxu0 %v1077
        %v1155 = vpop.f32.mrb[0].mxu0
        %v1156 = vadd.f32 0.0, %v1155
        %v1157 = vpop.f32.mrb[0].mxu0
        %v1158 = vadd.f32 0.0, %v1157
        %v1159 = vpop.f32.mrb[0].mxu0
        %v1160 = vadd.f32 0.0, %v1159
        %v1161 = vpop.f32.mrb[0].mxu0
        %v1162 = vadd.f32 0.0, %v1161
        %1163 = vmatprep.mubr.bf16.mxu0 0
        %1164 = vmatmul.mubr.bf16.gmra.mrb[0].mxu0 %v1080
        %v1165 = vpop.f32.mrb[0].mxu0
        %v1166 = vadd.f32 0.0, %v1165
        %v1167 = vpop.f32.mrb[0].mxu0
        %v1168 = vadd.f32 0.0, %v1167
        %v1169 = vpop.f32.mrb[0].mxu0
        %v1170 = vadd.f32 0.0, %v1169
        %v1171 = vpop.f32.mrb[0].mxu0
        %v1172 = vadd.f32 0.0, %v1171
        %1173 = vmatprep.mubr.bf16.mxu0 0
        %1174 = vmatmul.mubr.bf16.gmra.mrb[0].mxu0 %v1083
        %v1175 = vpop.f32.mrb[0].mxu0
        %v1176 = vadd.f32 0.0, %v1175
        %v1177 = vpop.f32.mrb[0].mxu0
        %v1178 = vadd.f32 0.0, %v1177
        %v1179 = vpop.f32.mrb[0].mxu0
        %v1180 = vadd.f32 0.0, %v1179
        %v1181 = vpop.f32.mrb[0].mxu0
        %v1182 = vadd.f32 0.0, %v1181
        %1183 = vmatprep.mubr.bf16.mxu0 0
        %1184 = vmatmul.mubr.bf16.gmra.mrb[0].mxu0 %v1086
        %v1185 = vpop.f32.mrb[0].mxu0
        %v1186 = vadd.f32 0.0, %v1185
        %v1187 = vpop.f32.mrb[0].mxu0
        %v1188 = vadd.f32 0.0, %v1187
        %v1189 = vpop.f32.mrb[0].mxu0
        %v1190 = vadd.f32 0.0, %v1189
        %v1191 = vpop.f32.mrb[0].mxu0
        %v1192 = vadd.f32 0.0, %v1191
        %1193 = vmatprep.mubr.bf16.mxu0 0
        %1194 = vmatmul.mubr.bf16.gmra.mrb[0].mxu0 %v1089
        %v1195 = vpop.f32.mrb[0].mxu0
        %v1196 = vadd.f32 0.0, %v1195
        %v1197 = vpop.f32.mrb[0].mxu0
        %v1198 = vadd.f32 0.0, %v1197
        %v1199 = vpop.f32.mrb[0].mxu0
        %v1200 = vadd.f32 0.0, %v1199
        %v1201 = vpop.f32.mrb[0].mxu0
        %v1202 = vadd.f32 0.0, %v1201
        %1203 = vdwg.mxu0
        %v1204 = vpack.c.bf16 %v1130, %v1126
        %v1205 = vpack.c.bf16 %v1140, %v1136
        %v1206 = vpack.c.bf16 %v1150, %v1146
        %v1207 = vpack.c.bf16 %v1160, %v1156
        %v1208 = vpack.c.bf16 %v1170, %v1166
        %v1209 = vpack.c.bf16 %v1180, %v1176
        %v1210 = vpack.c.bf16 %v1190, %v1186
        %v1211 = vpack.c.bf16 %v1200, %v1196
        %1212 = vmatprep.subr.bf16.mxu0 0
        %1213 = vmatpush1.bf16.msra.mxu0 %v1204
        %1214 = vmatprep.subr.bf16.mxu0 0
        %1215 = vmatpush1.bf16.msra.mxu0 %v1205
        %1216 = vmatprep.subr.bf16.mxu0 0
        %1217 = vmatpush1.bf16.msra.mxu0 %v1206
        %1218 = vmatprep.subr.bf16.mxu0 0
        %1219 = vmatpush1.bf16.msra.mxu0 %v1207
        %1220 = vmatprep.subr.bf16.mxu0 0
        %1221 = vmatpush1.bf16.msra.mxu0 %v1208
        %1222 = vmatprep.subr.bf16.mxu0 0
        %1223 = vmatpush1.bf16.msra.mxu0 %v1209
        %1224 = vmatprep.subr.bf16.mxu0 0
        %1225 = vmatpush1.bf16.msra.mxu0 %v1210
        %1226 = vmatprep.subr.bf16.mxu0 0
        %1227 = vmatpush1.bf16.msra.mxu0 %v1211
        %1228 = vmatprep.subr.bf16.mxu0 0
        %1229 = vmatpush1.bf16.msra.mxu0 0
        %1230 = vmatprep.subr.bf16.mxu0 0
        %1231 = vmatpush1.bf16.msra.mxu0 0
        %1232 = vmatprep.subr.bf16.mxu0 0
        %1233 = vmatpush1.bf16.msra.mxu0 0
        %1234 = vmatprep.subr.bf16.mxu0 0
        %1235 = vmatpush1.bf16.msra.mxu0 0
        %1236 = vmatprep.subr.bf16.mxu0 0
        %1237 = vmatpush1.bf16.msra.mxu0 0
        %1238 = vmatprep.subr.bf16.mxu0 0
        %1239 = vmatpush1.bf16.msra.mxu0 0
        %1240 = vmatprep.subr.bf16.mxu0 0
        %1241 = vmatpush1.bf16.msra.mxu0 0
        %1242 = vmatprep.subr.bf16.mxu0 0
        %1243 = vmatpush1.bf16.msra.mxu0 0
        %1244 = vmatprep.mubr.bf16.mxu0 0
        %1245 = vmatmul.mubr.bf16.gmra.mrb[0].mxu0 %v834
        %v1246 = vpop.f32.mrb[0].mxu0
        %v1247 = vadd.f32 0.0, %v1246
        %v1248 = vpop.f32.mrb[0].mxu0
        %v1249 = vpop.f32.mrb[0].mxu0
        %v1250 = vadd.f32 0.0, %v1249
        %v1251 = vpop.f32.mrb[0].mxu0
        %1252 = vmatprep.mubr.bf16.mxu0 0
        %1253 = vmatmul.mubr.bf16.gmra.mrb[0].mxu0 %v835
        %v1254 = vpop.f32.mrb[0].mxu0
        %v1255 = vadd.f32 0.0, %v1254
        %v1256 = vpop.f32.mrb[0].mxu0
        %v1257 = vpop.f32.mrb[0].mxu0
        %v1258 = vadd.f32 0.0, %v1257
        %v1259 = vpop.f32.mrb[0].mxu0
        %1260 = vmatprep.mubr.bf16.mxu0 0
        %1261 = vmatmul.mubr.bf16.gmra.mrb[0].mxu0 %v836
        %v1262 = vpop.f32.mrb[0].mxu0
        %v1263 = vadd.f32 0.0, %v1262
        %v1264 = vpop.f32.mrb[0].mxu0
        %v1265 = vpop.f32.mrb[0].mxu0
        %v1266 = vadd.f32 0.0, %v1265
        %v1267 = vpop.f32.mrb[0].mxu0
        %1268 = vmatprep.mubr.bf16.mxu0 0
        %1269 = vmatmul.mubr.bf16.gmra.mrb[0].mxu0 %v837
        %v1270 = vpop.f32.mrb[0].mxu0
        %v1271 = vadd.f32 0.0, %v1270
        %v1272 = vpop.f32.mrb[0].mxu0
        %v1273 = vpop.f32.mrb[0].mxu0
        %v1274 = vadd.f32 0.0, %v1273
        %v1275 = vpop.f32.mrb[0].mxu0
        %1276 = vmatprep.mubr.bf16.mxu0 0
        %1277 = vmatmul.mubr.bf16.gmra.mrb[0].mxu0 %v838
        %v1278 = vpop.f32.mrb[0].mxu0
        %v1279 = vadd.f32 0.0, %v1278
        %v1280 = vpop.f32.mrb[0].mxu0
        %v1281 = vpop.f32.mrb[0].mxu0
        %v1282 = vadd.f32 0.0, %v1281
        %v1283 = vpop.f32.mrb[0].mxu0
        %1284 = vmatprep.mubr.bf16.mxu0 0
        %1285 = vmatmul.mubr.bf16.gmra.mrb[0].mxu0 %v839
        %v1286 = vpop.f32.mrb[0].mxu0
        %v1287 = vadd.f32 0.0, %v1286
        %v1288 = vpop.f32.mrb[0].mxu0
        %v1289 = vpop.f32.mrb[0].mxu0
        %v1290 = vadd.f32 0.0, %v1289
        %v1291 = vpop.f32.mrb[0].mxu0
        %1292 = vmatprep.mubr.bf16.mxu0 0
        %1293 = vmatmul.mubr.bf16.gmra.mrb[0].mxu0 %v840
        %v1294 = vpop.f32.mrb[0].mxu0
        %v1295 = vadd.f32 0.0, %v1294
        %v1296 = vpop.f32.mrb[0].mxu0
        %v1297 = vpop.f32.mrb[0].mxu0
        %v1298 = vadd.f32 0.0, %v1297
        %v1299 = vpop.f32.mrb[0].mxu0
        %1300 = vmatprep.mubr.bf16.mxu0 0
        %1301 = vmatmul.mubr.bf16.gmra.mrb[0].mxu0 %v841
        %v1302 = vpop.f32.mrb[0].mxu0
        %v1303 = vadd.f32 0.0, %v1302
        %v1304 = vpop.f32.mrb[0].mxu0
        %v1305 = vpop.f32.mrb[0].mxu0
        %v1306 = vadd.f32 0.0, %v1305
        %v1307 = vpop.f32.mrb[0].mxu0
        %1308 = vdwg.mxu0
        %v1309 = vunpack.c.l.bf16 %v1204
        %v1310 = vunpack.c.h.bf16 %v1204
        %v1311 = vunpack.c.l.bf16 %v1205
        %v1312 = vunpack.c.h.bf16 %v1205
        %v1313 = vunpack.c.l.bf16 %v1206
        %v1314 = vunpack.c.h.bf16 %v1206
        %v1315 = vunpack.c.l.bf16 %v1207
        %v1316 = vunpack.c.h.bf16 %v1207
        %v1317 = vunpack.c.l.bf16 %v1208
        %v1318 = vunpack.c.h.bf16 %v1208
        %v1319 = vunpack.c.l.bf16 %v1209
        %v1320 = vunpack.c.h.bf16 %v1209
        %v1321 = vunpack.c.l.bf16 %v1210
        %v1322 = vunpack.c.h.bf16 %v1210
        %v1323 = vunpack.c.l.bf16 %v1211
        %v1324 = vunpack.c.h.bf16 %v1211
        %v1325 = vsub.f32 %v1247, %v1309
        %v1326 = vsub.f32 %v1250, %v1310
        %v1327 = vsub.f32 %v1255, %v1311
        %v1328 = vsub.f32 %v1258, %v1312
        %v1329 = vsub.f32 %v1263, %v1313
        %v1330 = vsub.f32 %v1266, %v1314
        %v1331 = vsub.f32 %v1271, %v1315
        %v1332 = vsub.f32 %v1274, %v1316
        %v1333 = vsub.f32 %v1279, %v1317
        %v1334 = vsub.f32 %v1282, %v1318
        %v1335 = vsub.f32 %v1287, %v1319
        %v1336 = vsub.f32 %v1290, %v1320
        %v1337 = vsub.f32 %v1295, %v1321
        %v1338 = vsub.f32 %v1298, %v1322
        %v1339 = vsub.f32 %v1303, %v1323
        %v1340 = vsub.f32 %v1306, %v1324
        %1373 = vrot.lane.b32.xlu0 %v1126, 32
        %v1374 = vpop.permute.xlu0 %1373
        %1375 = vrot.lane.b32.xlu0 %v1128, 32
        %v1376 = vpop.permute.xlu0 %1375
        %1377 = vrot.lane.b32.xlu0 %v1130, 32
        %v1378 = vpop.permute.xlu0 %1377
        %1379 = vrot.lane.b32.xlu0 %v1132, 32
        %v1380 = vpop.permute.xlu0 %1379
        %1381 = vrot.lane.b32.xlu0 %v1136, 32
        %v1382 = vpop.permute.xlu0 %1381
        %1383 = vrot.lane.b32.xlu0 %v1138, 32
        %v1384 = vpop.permute.xlu0 %1383
        %1385 = vrot.lane.b32.xlu0 %v1140, 32
        %v1386 = vpop.permute.xlu0 %1385
        %1387 = vrot.lane.b32.xlu0 %v1142, 32
        %v1388 = vpop.permute.xlu0 %1387
        %1389 = vrot.lane.b32.xlu0 %v1146, 32
        %v1390 = vpop.permute.xlu0 %1389
        %1391 = vrot.lane.b32.xlu0 %v1148, 32
        %v1392 = vpop.permute.xlu0 %1391
        %1393 = vrot.lane.b32.xlu0 %v1150, 32
        %v1394 = vpop.permute.xlu0 %1393
        %1395 = vrot.lane.b32.xlu0 %v1152, 32
        %v1396 = vpop.permute.xlu0 %1395
        %1397 = vrot.lane.b32.xlu0 %v1156, 32
        %v1398 = vpop.permute.xlu0 %1397
        %1399 = vrot.lane.b32.xlu0 %v1158, 32
        %v1400 = vpop.permute.xlu0 %1399
        %1401 = vrot.lane.b32.xlu0 %v1160, 32
        %v1402 = vpop.permute.xlu0 %1401
        %1403 = vrot.lane.b32.xlu0 %v1162, 32
        %v1404 = vpop.permute.xlu0 %1403
        %1405 = vrot.lane.b32.xlu0 %v1166, 32
        %v1406 = vpop.permute.xlu0 %1405
        %1407 = vrot.lane.b32.xlu0 %v1168, 32
        %v1408 = vpop.permute.xlu0 %1407
        %1409 = vrot.lane.b32.xlu0 %v1170, 32
        %v1410 = vpop.permute.xlu0 %1409
        %1411 = vrot.lane.b32.xlu0 %v1172, 32
        %v1412 = vpop.permute.xlu0 %1411
        %1413 = vrot.lane.b32.xlu0 %v1176, 32
        %v1414 = vpop.permute.xlu0 %1413
        %1415 = vrot.lane.b32.xlu0 %v1178, 32
        %v1416 = vpop.permute.xlu0 %1415
        %1417 = vrot.lane.b32.xlu0 %v1180, 32
        %v1418 = vpop.permute.xlu0 %1417
        %1419 = vrot.lane.b32.xlu0 %v1182, 32
        %v1420 = vpop.permute.xlu0 %1419
        %1421 = vrot.lane.b32.xlu0 %v1186, 32
        %v1422 = vpop.permute.xlu0 %1421
        %1423 = vrot.lane.b32.xlu0 %v1188, 32
        %v1424 = vpop.permute.xlu0 %1423
        %1425 = vrot.lane.b32.xlu0 %v1190, 32
        %v1426 = vpop.permute.xlu0 %1425
        %1427 = vrot.lane.b32.xlu0 %v1192, 32
        %v1428 = vpop.permute.xlu0 %1427
        %1429 = vrot.lane.b32.xlu0 %v1196, 32
        %v1430 = vpop.permute.xlu0 %1429
        %1431 = vrot.lane.b32.xlu0 %v1198, 32
        %v1432 = vpop.permute.xlu0 %1431
        %1433 = vrot.lane.b32.xlu0 %v1200, 32
        %v1434 = vpop.permute.xlu0 %1433
        %1435 = vrot.lane.b32.xlu0 %v1202, 32
        %v1436 = vpop.permute.xlu0 %1435
        %v1437 = vsel %vm1066, %v1374, %v1376
        %v1438 = vsel %vm1066, %v1378, %v1380
        %v1439 = vsel %vm1066, %v1382, %v1384
        %v1440 = vsel %vm1066, %v1386, %v1388
        %v1441 = vsel %vm1066, %v1390, %v1392
        %v1442 = vsel %vm1066, %v1394, %v1396
        %v1443 = vsel %vm1066, %v1398, %v1400
        %v1444 = vsel %vm1066, %v1402, %v1404
        %v1445 = vsel %vm1066, %v1406, %v1408
        %v1446 = vsel %vm1066, %v1410, %v1412
        %v1447 = vsel %vm1066, %v1414, %v1416
        %v1448 = vsel %vm1066, %v1418, %v1420
        %v1449 = vsel %vm1066, %v1422, %v1424
        %v1450 = vsel %vm1066, %v1426, %v1428
        %v1451 = vsel %vm1066, %v1430, %v1432
        %v1452 = vsel %vm1066, %v1434, %v1436
        %v1469 = vadd.f32 %v1325, %v1437
        %v1470 = vadd.f32 %v1326, %v1438
        %v1471 = vadd.f32 %v1327, %v1439
        %v1472 = vadd.f32 %v1328, %v1440
        %v1473 = vadd.f32 %v1329, %v1441
        %v1474 = vadd.f32 %v1330, %v1442
        %v1475 = vadd.f32 %v1331, %v1443
        %v1476 = vadd.f32 %v1332, %v1444
        %v1477 = vadd.f32 %v1333, %v1445
        %v1478 = vadd.f32 %v1334, %v1446
        %v1479 = vadd.f32 %v1335, %v1447
        %v1480 = vadd.f32 %v1336, %v1448
        %v1481 = vadd.f32 %v1337, %v1449
        %v1482 = vadd.f32 %v1338, %v1450
        %v1483 = vadd.f32 %v1339, %v1451
        %v1484 = vadd.f32 %v1340, %v1452
        %v1486 = vlaneseq
        %v1487 = vshrl.u32 %v1486, 7
        %v1488 = vsub.s32 0, %v1487
        %v1489 = vrot.slane %v528, %v1488
        %v1491 = vadd.f32 %v1469, %v1489
        %v1492 = vadd.f32 %v1470, %v1489
        %v1493 = vadd.f32 %v1471, %v1489
        %v1494 = vadd.f32 %v1472, %v1489
        %v1495 = vadd.f32 %v1473, %v1489
        %v1496 = vadd.f32 %v1474, %v1489
        %v1497 = vadd.f32 %v1475, %v1489
        %v1498 = vadd.f32 %v1476, %v1489
        %v1499 = vadd.f32 %v1477, %v1489
        %v1500 = vadd.f32 %v1478, %v1489
        %v1501 = vadd.f32 %v1479, %v1489
        %v1502 = vadd.f32 %v1480, %v1489
        %v1503 = vadd.f32 %v1481, %v1489
        %v1504 = vadd.f32 %v1482, %v1489
        %v1505 = vadd.f32 %v1483, %v1489
        %v1506 = vadd.f32 %v1484, %v1489
        %v1507 = vxor.u32 %v1491, 2147483648
        %v1508 = vxor.u32 %v1492, 2147483648
        %v1509 = vxor.u32 %v1493, 2147483648
        %v1510 = vxor.u32 %v1494, 2147483648
        %v1511 = vxor.u32 %v1495, 2147483648
        %v1512 = vxor.u32 %v1496, 2147483648
        %v1513 = vxor.u32 %v1497, 2147483648
        %v1514 = vxor.u32 %v1498, 2147483648
        %v1515 = vxor.u32 %v1499, 2147483648
        %v1516 = vxor.u32 %v1500, 2147483648
        %v1517 = vxor.u32 %v1501, 2147483648
        %v1518 = vxor.u32 %v1502, 2147483648
        %v1519 = vxor.u32 %v1503, 2147483648
        %v1520 = vxor.u32 %v1504, 2147483648
        %v1521 = vxor.u32 %v1505, 2147483648
        %v1522 = vxor.u32 %v1506, 2147483648
        %v1523 = vmul.f32 %v1507, 1.442695
        %v1524 = vpow.pop %v1523
        %v1525 = vmul.f32 %v1508, 1.442695
        %v1526 = vpow.pop %v1525
        %v1527 = vmul.f32 %v1509, 1.442695
        %v1528 = vpow.pop %v1527
        %v1529 = vmul.f32 %v1510, 1.442695
        %v1530 = vpow.pop %v1529
        %v1531 = vmul.f32 %v1511, 1.442695
        %v1532 = vpow.pop %v1531
        %v1533 = vmul.f32 %v1512, 1.442695
        %v1534 = vpow.pop %v1533
        %v1535 = vmul.f32 %v1513, 1.442695
        %v1536 = vpow.pop %v1535
        %v1537 = vmul.f32 %v1514, 1.442695
        %v1538 = vpow.pop %v1537
        %v1539 = vmul.f32 %v1515, 1.442695
        %v1540 = vpow.pop %v1539
        %v1541 = vmul.f32 %v1516, 1.442695
        %v1542 = vpow.pop %v1541
        %v1543 = vmul.f32 %v1517, 1.442695
        %v1544 = vpow.pop %v1543
        %v1545 = vmul.f32 %v1518, 1.442695
        %v1546 = vpow.pop %v1545
        %v1547 = vmul.f32 %v1519, 1.442695
        %v1548 = vpow.pop %v1547
        %v1549 = vmul.f32 %v1520, 1.442695
        %v1550 = vpow.pop %v1549
        %v1551 = vmul.f32 %v1521, 1.442695
        %v1552 = vpow.pop %v1551
        %v1553 = vmul.f32 %v1522, 1.442695
        %v1554 = vpow.pop %v1553
        %v1555 = vadd.f32 %v1524, 1.0
        %v1556 = vadd.f32 %v1526, 1.0
        %v1557 = vadd.f32 %v1528, 1.0
        %v1558 = vadd.f32 %v1530, 1.0
        %v1559 = vadd.f32 %v1532, 1.0
        %v1560 = vadd.f32 %v1534, 1.0
        %v1561 = vadd.f32 %v1536, 1.0
        %v1562 = vadd.f32 %v1538, 1.0
        %v1563 = vadd.f32 %v1540, 1.0
        %v1564 = vadd.f32 %v1542, 1.0
        %v1565 = vadd.f32 %v1544, 1.0
        %v1566 = vadd.f32 %v1546, 1.0
        %v1567 = vadd.f32 %v1548, 1.0
        %v1568 = vadd.f32 %v1550, 1.0
        %v1569 = vadd.f32 %v1552, 1.0
        %v1570 = vadd.f32 %v1554, 1.0
        %v1571 = vrcp.pop %v1555
        %v1572 = vmul.f32 1.0, %v1571
        %v1573 = vrcp.pop %v1556
        %v1574 = vmul.f32 1.0, %v1573
        %v1575 = vrcp.pop %v1557
        %v1576 = vmul.f32 1.0, %v1575
        %v1577 = vrcp.pop %v1558
        %v1578 = vmul.f32 1.0, %v1577
        %v1579 = vrcp.pop %v1559
        %v1580 = vmul.f32 1.0, %v1579
        %v1581 = vrcp.pop %v1560
        %v1582 = vmul.f32 1.0, %v1581
        %v1583 = vrcp.pop %v1561
        %v1584 = vmul.f32 1.0, %v1583
        %v1585 = vrcp.pop %v1562
        %v1586 = vmul.f32 1.0, %v1585
        %v1587 = vrcp.pop %v1563
        %v1588 = vmul.f32 1.0, %v1587
        %v1589 = vrcp.pop %v1564
        %v1590 = vmul.f32 1.0, %v1589
        %v1591 = vrcp.pop %v1565
        %v1592 = vmul.f32 1.0, %v1591
        %v1593 = vrcp.pop %v1566
        %v1594 = vmul.f32 1.0, %v1593
        %v1595 = vrcp.pop %v1567
        %v1596 = vmul.f32 1.0, %v1595
        %v1597 = vrcp.pop %v1568
        %v1598 = vmul.f32 1.0, %v1597
        %v1599 = vrcp.pop %v1569
        %v1600 = vmul.f32 1.0, %v1599
        %v1601 = vrcp.pop %v1570
        %v1602 = vmul.f32 1.0, %v1601
        %v1604 = vlaneseq
        %v1605 = vshrl.u32 %v1604, 7
        %v1606 = vsub.s32 0, %v1605
        %v1607 = vrot.slane %v529, %v1606
        %1608 = vrot.lane.b32.xlu0 %v1607, 64
        %v1609 = vpop.permute.xlu0 %1608
        %v1611 = vadd.f32 %v1325, %v1609
        %v1612 = vadd.f32 %v1326, %v1609
        %v1613 = vadd.f32 %v1327, %v1609
        %v1614 = vadd.f32 %v1328, %v1609
        %v1615 = vadd.f32 %v1329, %v1609
        %v1616 = vadd.f32 %v1330, %v1609
        %v1617 = vadd.f32 %v1331, %v1609
        %v1618 = vadd.f32 %v1332, %v1609
        %v1619 = vadd.f32 %v1333, %v1609
        %v1620 = vadd.f32 %v1334, %v1609
        %v1621 = vadd.f32 %v1335, %v1609
        %v1622 = vadd.f32 %v1336, %v1609
        %v1623 = vadd.f32 %v1337, %v1609
        %v1624 = vadd.f32 %v1338, %v1609
        %v1625 = vadd.f32 %v1339, %v1609
        %v1626 = vadd.f32 %v1340, %v1609
        %v1628 = vlaneseq
        %v1629 = vshrl.u32 %v1628, 7
        %v1630 = vsub.s32 0, %v1629
        %v1631 = vrot.slane %v530, %v1630
        %1632 = vrot.lane.b32.xlu0 %v1631, 32
        %v1633 = vpop.permute.xlu0 %1632
        %v1635 = vadd.f32 %v1128, %v1633
        %v1636 = vadd.f32 %v1132, %v1633
        %v1637 = vadd.f32 %v1138, %v1633
        %v1638 = vadd.f32 %v1142, %v1633
        %v1639 = vadd.f32 %v1148, %v1633
        %v1640 = vadd.f32 %v1152, %v1633
        %v1641 = vadd.f32 %v1158, %v1633
        %v1642 = vadd.f32 %v1162, %v1633
        %v1643 = vadd.f32 %v1168, %v1633
        %v1644 = vadd.f32 %v1172, %v1633
        %v1645 = vadd.f32 %v1178, %v1633
        %v1646 = vadd.f32 %v1182, %v1633
        %v1647 = vadd.f32 %v1188, %v1633
        %v1648 = vadd.f32 %v1192, %v1633
        %v1649 = vadd.f32 %v1198, %v1633
        %v1650 = vadd.f32 %v1202, %v1633
        %1667 = vrot.lane.b32.xlu0 %v1635, 96
        %v1668 = vpop.permute.xlu0 %1667
        %1669 = vrot.lane.b32.xlu0 %v1636, 96
        %v1670 = vpop.permute.xlu0 %1669
        %1671 = vrot.lane.b32.xlu0 %v1637, 96
        %v1672 = vpop.permute.xlu0 %1671
        %1673 = vrot.lane.b32.xlu0 %v1638, 96
        %v1674 = vpop.permute.xlu0 %1673
        %1675 = vrot.lane.b32.xlu0 %v1639, 96
        %v1676 = vpop.permute.xlu0 %1675
        %1677 = vrot.lane.b32.xlu0 %v1640, 96
        %v1678 = vpop.permute.xlu0 %1677
        %1679 = vrot.lane.b32.xlu0 %v1641, 96
        %v1680 = vpop.permute.xlu0 %1679
        %1681 = vrot.lane.b32.xlu0 %v1642, 96
        %v1682 = vpop.permute.xlu0 %1681
        %1683 = vrot.lane.b32.xlu0 %v1643, 96
        %v1684 = vpop.permute.xlu0 %1683
        %1685 = vrot.lane.b32.xlu0 %v1644, 96
        %v1686 = vpop.permute.xlu0 %1685
        %1687 = vrot.lane.b32.xlu0 %v1645, 96
        %v1688 = vpop.permute.xlu0 %1687
        %1689 = vrot.lane.b32.xlu0 %v1646, 96
        %v1690 = vpop.permute.xlu0 %1689
        %1691 = vrot.lane.b32.xlu0 %v1647, 96
        %v1692 = vpop.permute.xlu0 %1691
        %1693 = vrot.lane.b32.xlu0 %v1648, 96
        %v1694 = vpop.permute.xlu0 %1693
        %1695 = vrot.lane.b32.xlu0 %v1649, 96
        %v1696 = vpop.permute.xlu0 %1695
        %1697 = vrot.lane.b32.xlu0 %v1650, 96
        %v1698 = vpop.permute.xlu0 %1697
        %v1715 = vmul.f32 %v1572, %v1668
        %v1716 = vmul.f32 %v1574, %v1670
        %v1717 = vmul.f32 %v1576, %v1672
        %v1718 = vmul.f32 %v1578, %v1674
        %v1719 = vmul.f32 %v1580, %v1676
        %v1720 = vmul.f32 %v1582, %v1678
        %v1721 = vmul.f32 %v1584, %v1680
        %v1722 = vmul.f32 %v1586, %v1682
        %v1723 = vmul.f32 %v1588, %v1684
        %v1724 = vmul.f32 %v1590, %v1686
        %v1725 = vmul.f32 %v1592, %v1688
        %v1726 = vmul.f32 %v1594, %v1690
        %v1727 = vmul.f32 %v1596, %v1692
        %v1728 = vmul.f32 %v1598, %v1694
        %v1729 = vmul.f32 %v1600, %v1696
        %v1730 = vmul.f32 %v1602, %v1698
        %1747 = vrot.lane.b32.xlu0 %v1715, 64
        %v1748 = vpop.permute.xlu0 %1747
        %1749 = vrot.lane.b32.xlu0 %v1716, 64
        %v1750 = vpop.permute.xlu0 %1749
        %1751 = vrot.lane.b32.xlu0 %v1717, 64
        %v1752 = vpop.permute.xlu0 %1751
        %1753 = vrot.lane.b32.xlu0 %v1718, 64
        %v1754 = vpop.permute.xlu0 %1753
        %1755 = vrot.lane.b32.xlu0 %v1719, 64
        %v1756 = vpop.permute.xlu0 %1755
        %1757 = vrot.lane.b32.xlu0 %v1720, 64
        %v1758 = vpop.permute.xlu0 %1757
        %1759 = vrot.lane.b32.xlu0 %v1721, 64
        %v1760 = vpop.permute.xlu0 %1759
        %1761 = vrot.lane.b32.xlu0 %v1722, 64
        %v1762 = vpop.permute.xlu0 %1761
        %1763 = vrot.lane.b32.xlu0 %v1723, 64
        %v1764 = vpop.permute.xlu0 %1763
        %1765 = vrot.lane.b32.xlu0 %v1724, 64
        %v1766 = vpop.permute.xlu0 %1765
        %1767 = vrot.lane.b32.xlu0 %v1725, 64
        %v1768 = vpop.permute.xlu0 %1767
        %1769 = vrot.lane.b32.xlu0 %v1726, 64
        %v1770 = vpop.permute.xlu0 %1769
        %1771 = vrot.lane.b32.xlu0 %v1727, 64
        %v1772 = vpop.permute.xlu0 %1771
        %1773 = vrot.lane.b32.xlu0 %v1728, 64
        %v1774 = vpop.permute.xlu0 %1773
        %1775 = vrot.lane.b32.xlu0 %v1729, 64
        %v1776 = vpop.permute.xlu0 %1775
        %1777 = vrot.lane.b32.xlu0 %v1730, 64
        %v1778 = vpop.permute.xlu0 %1777
        %v1795 = vadd.f32 %v1611, %v1748
        %v1796 = vadd.f32 %v1612, %v1750
        %v1797 = vadd.f32 %v1613, %v1752
        %v1798 = vadd.f32 %v1614, %v1754
        %v1799 = vadd.f32 %v1615, %v1756
        %v1800 = vadd.f32 %v1616, %v1758
        %v1801 = vadd.f32 %v1617, %v1760
        %v1802 = vadd.f32 %v1618, %v1762
        %v1803 = vadd.f32 %v1619, %v1764
        %v1804 = vadd.f32 %v1620, %v1766
        %v1805 = vadd.f32 %v1621, %v1768
        %v1806 = vadd.f32 %v1622, %v1770
        %v1807 = vadd.f32 %v1623, %v1772
        %v1808 = vadd.f32 %v1624, %v1774
        %v1809 = vadd.f32 %v1625, %v1776
        %v1810 = vadd.f32 %v1626, %v1778
        %v1811 = vtanh.pop %v1795
        %v1812 = vtanh.pop %v1796
        %v1813 = vtanh.pop %v1797
        %v1814 = vtanh.pop %v1798
        %v1815 = vtanh.pop %v1799
        %v1816 = vtanh.pop %v1800
        %v1817 = vtanh.pop %v1801
        %v1818 = vtanh.pop %v1802
        %v1819 = vtanh.pop %v1803
        %v1820 = vtanh.pop %v1804
        %v1821 = vtanh.pop %v1805
        %v1822 = vtanh.pop %v1806
        %v1823 = vtanh.pop %v1807
        %v1824 = vtanh.pop %v1808
        %v1825 = vtanh.pop %v1809
        %v1826 = vtanh.pop %v1810
        %v1827 = vsub.f32 1.0, %v1572
        %v1828 = vsub.f32 1.0, %v1574
        %v1829 = vsub.f32 1.0, %v1576
        %v1830 = vsub.f32 1.0, %v1578
        %v1831 = vsub.f32 1.0, %v1580
        %v1832 = vsub.f32 1.0, %v1582
        %v1833 = vsub.f32 1.0, %v1584
        %v1834 = vsub.f32 1.0, %v1586
        %v1835 = vsub.f32 1.0, %v1588
        %v1836 = vsub.f32 1.0, %v1590
        %v1837 = vsub.f32 1.0, %v1592
        %v1838 = vsub.f32 1.0, %v1594
        %v1839 = vsub.f32 1.0, %v1596
        %v1840 = vsub.f32 1.0, %v1598
        %v1841 = vsub.f32 1.0, %v1600
        %v1842 = vsub.f32 1.0, %v1602
        %1859 = vrot.lane.b32.xlu0 %v1811, 96
        %v1860 = vpop.permute.xlu0 %1859
        %1861 = vrot.lane.b32.xlu0 %v1812, 96
        %v1862 = vpop.permute.xlu0 %1861
        %1863 = vrot.lane.b32.xlu0 %v1813, 96
        %v1864 = vpop.permute.xlu0 %1863
        %1865 = vrot.lane.b32.xlu0 %v1814, 96
        %v1866 = vpop.permute.xlu0 %1865
        %1867 = vrot.lane.b32.xlu0 %v1815, 96
        %v1868 = vpop.permute.xlu0 %1867
        %1869 = vrot.lane.b32.xlu0 %v1816, 96
        %v1870 = vpop.permute.xlu0 %1869
        %1871 = vrot.lane.b32.xlu0 %v1817, 96
        %v1872 = vpop.permute.xlu0 %1871
        %1873 = vrot.lane.b32.xlu0 %v1818, 96
        %v1874 = vpop.permute.xlu0 %1873
        %1875 = vrot.lane.b32.xlu0 %v1819, 96
        %v1876 = vpop.permute.xlu0 %1875
        %1877 = vrot.lane.b32.xlu0 %v1820, 96
        %v1878 = vpop.permute.xlu0 %1877
        %1879 = vrot.lane.b32.xlu0 %v1821, 96
        %v1880 = vpop.permute.xlu0 %1879
        %1881 = vrot.lane.b32.xlu0 %v1822, 96
        %v1882 = vpop.permute.xlu0 %1881
        %1883 = vrot.lane.b32.xlu0 %v1823, 96
        %v1884 = vpop.permute.xlu0 %1883
        %1885 = vrot.lane.b32.xlu0 %v1824, 96
        %v1886 = vpop.permute.xlu0 %1885
        %1887 = vrot.lane.b32.xlu0 %v1825, 96
        %v1888 = vpop.permute.xlu0 %1887
        %1889 = vrot.lane.b32.xlu0 %v1826, 96
        %v1890 = vpop.permute.xlu0 %1889
        %v1907 = vmul.f32 %v1827, %v1860
        %v1908 = vmul.f32 %v1828, %v1862
        %v1909 = vmul.f32 %v1829, %v1864
        %v1910 = vmul.f32 %v1830, %v1866
        %v1911 = vmul.f32 %v1831, %v1868
        %v1912 = vmul.f32 %v1832, %v1870
        %v1913 = vmul.f32 %v1833, %v1872
        %v1914 = vmul.f32 %v1834, %v1874
        %v1915 = vmul.f32 %v1835, %v1876
        %v1916 = vmul.f32 %v1836, %v1878
        %v1917 = vmul.f32 %v1837, %v1880
        %v1918 = vmul.f32 %v1838, %v1882
        %v1919 = vmul.f32 %v1839, %v1884
        %v1920 = vmul.f32 %v1840, %v1886
        %v1921 = vmul.f32 %v1841, %v1888
        %v1922 = vmul.f32 %v1842, %v1890
        %1939 = vrot.lane.b32.xlu0 %v1018, 32
        %v1940 = vpop.permute.xlu0 %1939
        %1941 = vrot.lane.b32.xlu0 %v1019, 32
        %v1942 = vpop.permute.xlu0 %1941
        %1943 = vrot.lane.b32.xlu0 %v1020, 32
        %v1944 = vpop.permute.xlu0 %1943
        %1945 = vrot.lane.b32.xlu0 %v1021, 32
        %v1946 = vpop.permute.xlu0 %1945
        %1947 = vrot.lane.b32.xlu0 %v1022, 32
        %v1948 = vpop.permute.xlu0 %1947
        %1949 = vrot.lane.b32.xlu0 %v1023, 32
        %v1950 = vpop.permute.xlu0 %1949
        %1951 = vrot.lane.b32.xlu0 %v1024, 32
        %v1952 = vpop.permute.xlu0 %1951
        %1953 = vrot.lane.b32.xlu0 %v1025, 32
        %v1954 = vpop.permute.xlu0 %1953
        %1955 = vrot.lane.b32.xlu0 %v1026, 32
        %v1956 = vpop.permute.xlu0 %1955
        %1957 = vrot.lane.b32.xlu0 %v1027, 32
        %v1958 = vpop.permute.xlu0 %1957
        %1959 = vrot.lane.b32.xlu0 %v1028, 32
        %v1960 = vpop.permute.xlu0 %1959
        %1961 = vrot.lane.b32.xlu0 %v1029, 32
        %v1962 = vpop.permute.xlu0 %1961
        %1963 = vrot.lane.b32.xlu0 %v1030, 32
        %v1964 = vpop.permute.xlu0 %1963
        %1965 = vrot.lane.b32.xlu0 %v1031, 32
        %v1966 = vpop.permute.xlu0 %1965
        %1967 = vrot.lane.b32.xlu0 %v1032, 32
        %v1968 = vpop.permute.xlu0 %1967
        %1969 = vrot.lane.b32.xlu0 %v1033, 32
        %v1970 = vpop.permute.xlu0 %1969
        %v1987 = vmul.f32 %v1572, %v1940
        %v1988 = vmul.f32 %v1574, %v1942
        %v1989 = vmul.f32 %v1576, %v1944
        %v1990 = vmul.f32 %v1578, %v1946
        %v1991 = vmul.f32 %v1580, %v1948
        %v1992 = vmul.f32 %v1582, %v1950
        %v1993 = vmul.f32 %v1584, %v1952
        %v1994 = vmul.f32 %v1586, %v1954
        %v1995 = vmul.f32 %v1588, %v1956
        %v1996 = vmul.f32 %v1590, %v1958
        %v1997 = vmul.f32 %v1592, %v1960
        %v1998 = vmul.f32 %v1594, %v1962
        %v1999 = vmul.f32 %v1596, %v1964
        %v2000 = vmul.f32 %v1598, %v1966
        %v2001 = vmul.f32 %v1600, %v1968
        %v2002 = vmul.f32 %v1602, %v1970
        %v2003 = vadd.f32 %v1907, %v1987
        %v2004 = vadd.f32 %v1908, %v1988
        %v2005 = vadd.f32 %v1909, %v1989
        %v2006 = vadd.f32 %v1910, %v1990
        %v2007 = vadd.f32 %v1911, %v1991
        %v2008 = vadd.f32 %v1912, %v1992
        %v2009 = vadd.f32 %v1913, %v1993
        %v2010 = vadd.f32 %v1914, %v1994
        %v2011 = vadd.f32 %v1915, %v1995
        %v2012 = vadd.f32 %v1916, %v1996
        %v2013 = vadd.f32 %v1917, %v1997
        %v2014 = vadd.f32 %v1918, %v1998
        %v2015 = vadd.f32 %v1919, %v1999
        %v2016 = vadd.f32 %v1920, %v2000
        %v2017 = vadd.f32 %v1921, %v2001
        %v2018 = vadd.f32 %v1922, %v2002
        %v2019 = vpack.c.bf16 %v2004, %v2003
        %v2020 = vpack.c.bf16 %v2006, %v2005
        %v2021 = vpack.c.bf16 %v2008, %v2007
        %v2022 = vpack.c.bf16 %v2010, %v2009
        %v2023 = vpack.c.bf16 %v2012, %v2011
        %v2024 = vpack.c.bf16 %v2014, %v2013
        %v2025 = vpack.c.bf16 %v2016, %v2015
        %v2026 = vpack.c.bf16 %v2018, %v2017
        %s2027 = scalar_lea.vmem %s5, 32
        %v2028 = vld [vmem:[%s2027] sm:$0xff]
        %v2029 = vld [vmem:[%s2027 + $0x8] sm:$0xff]
        %v2030 = vld [vmem:[%s2027 + $0x10] sm:$0xff]
        %v2031 = vld [vmem:[%s2027 + $0x18] sm:$0xff]
        %2040 = vrot.lane.b32.xlu0 %v2019, 96
        %v2041 = vpop.permute.xlu0 %2040
        %2042 = vrot.lane.b32.xlu0 %v2020, 96
        %v2043 = vpop.permute.xlu0 %2042
        %2044 = vrot.lane.b32.xlu0 %v2021, 96
        %v2045 = vpop.permute.xlu0 %2044
        %2046 = vrot.lane.b32.xlu0 %v2022, 96
        %v2047 = vpop.permute.xlu0 %2046
        %2048 = vrot.lane.b32.xlu0 %v2023, 96
        %v2049 = vpop.permute.xlu0 %2048
        %2050 = vrot.lane.b32.xlu0 %v2024, 96
        %v2051 = vpop.permute.xlu0 %2050
        %2052 = vrot.lane.b32.xlu0 %v2025, 96
        %v2053 = vpop.permute.xlu0 %2052
        %2054 = vrot.lane.b32.xlu0 %v2026, 96
        %v2055 = vpop.permute.xlu0 %2054
        %v2060 = vunpack.c.l.b16 %v2028
        %v2061 = vunpack.c.h.b16 %v2028
        %v2062 = vunpack.c.l.b16 %v2029
        %v2063 = vunpack.c.h.b16 %v2029
        %v2064 = vunpack.c.l.b16 %v2030
        %v2065 = vunpack.c.h.b16 %v2030
        %v2066 = vunpack.c.l.b16 %v2031
        %v2067 = vunpack.c.h.b16 %v2031
        %v2068 = vpack.c.b16 %v2062, %v2060
        %v2069 = vpack.c.b16 %v2063, %v2061
        %v2070 = vpack.c.b16 %v2066, %v2064
        %v2071 = vpack.c.b16 %v2067, %v2065
        %v2077 = vsel %vm1066, %v2041, 0
        %v2080 = vsel %vm1066, %v2043, 0
        %v2083 = vsel %vm1066, %v2045, 0
        %v2086 = vsel %vm1066, %v2047, 0
        %v2089 = vsel %vm1066, %v2049, 0
        %v2092 = vsel %vm1066, %v2051, 0
        %v2095 = vsel %vm1066, %v2053, 0
        %v2098 = vsel %vm1066, %v2055, 0
        %2100 = vmatprep.subr.bf16.mxu0 %v2069
        %2101 = vmatpush1.bf16.msra.mxu0 %v2068
        %2102 = vmatprep.subr.bf16.mxu0 %v2071
        %2103 = vmatpush1.bf16.msra.mxu0 %v2070
        %2104 = vmatprep.subr.bf16.mxu0 0
        %2105 = vmatpush1.bf16.msra.mxu0 0
        %2106 = vmatprep.subr.bf16.mxu0 0
        %2107 = vmatpush1.bf16.msra.mxu0 0
        %2108 = vmatprep.subr.bf16.mxu0 0
        %2109 = vmatpush1.bf16.msra.mxu0 0
        %2110 = vmatprep.subr.bf16.mxu0 0
        %2111 = vmatpush1.bf16.msra.mxu0 0
        %2112 = vmatprep.subr.bf16.mxu0 0
        %2113 = vmatpush1.bf16.msra.mxu0 0
        %2114 = vmatprep.subr.bf16.mxu0 0
        %2115 = vmatpush1.bf16.msra.mxu0 0
        %2116 = vmatprep.subr.bf16.mxu0 0
        %2117 = vmatpush1.bf16.msra.mxu0 0
        %2118 = vmatprep.subr.bf16.mxu0 0
        %2119 = vmatpush1.bf16.msra.mxu0 0
        %2120 = vmatprep.subr.bf16.mxu0 0
        %2121 = vmatpush1.bf16.msra.mxu0 0
        %2122 = vmatprep.subr.bf16.mxu0 0
        %2123 = vmatpush1.bf16.msra.mxu0 0
        %2124 = vmatprep.subr.bf16.mxu0 0
        %2125 = vmatpush1.bf16.msra.mxu0 0
        %2126 = vmatprep.subr.bf16.mxu0 0
        %2127 = vmatpush1.bf16.msra.mxu0 0
        %2128 = vmatprep.subr.bf16.mxu0 0
        %2129 = vmatpush1.bf16.msra.mxu0 0
        %2130 = vmatprep.subr.bf16.mxu0 0
        %2131 = vmatpush1.bf16.msra.mxu0 0
        %2132 = vmatprep.mubr.bf16.mxu0 0
        %2133 = vmatmul.mubr.bf16.gmra.mrb[0].mxu0 %v2077
        %v2134 = vpop.f32.mrb[0].mxu0
        %v2135 = vadd.f32 0.0, %v2134
        %v2136 = vpop.f32.mrb[0].mxu0
        %v2137 = vadd.f32 0.0, %v2136
        %v2138 = vpop.f32.mrb[0].mxu0
        %v2139 = vadd.f32 0.0, %v2138
        %v2140 = vpop.f32.mrb[0].mxu0
        %v2141 = vadd.f32 0.0, %v2140
        %2142 = vmatprep.mubr.bf16.mxu0 0
        %2143 = vmatmul.mubr.bf16.gmra.mrb[0].mxu0 %v2080
        %v2144 = vpop.f32.mrb[0].mxu0
        %v2145 = vadd.f32 0.0, %v2144
        %v2146 = vpop.f32.mrb[0].mxu0
        %v2147 = vadd.f32 0.0, %v2146
        %v2148 = vpop.f32.mrb[0].mxu0
        %v2149 = vadd.f32 0.0, %v2148
        %v2150 = vpop.f32.mrb[0].mxu0
        %v2151 = vadd.f32 0.0, %v2150
        %2152 = vmatprep.mubr.bf16.mxu0 0
        %2153 = vmatmul.mubr.bf16.gmra.mrb[0].mxu0 %v2083
        %v2154 = vpop.f32.mrb[0].mxu0
        %v2155 = vadd.f32 0.0, %v2154
        %v2156 = vpop.f32.mrb[0].mxu0
        %v2157 = vadd.f32 0.0, %v2156
        %v2158 = vpop.f32.mrb[0].mxu0
        %v2159 = vadd.f32 0.0, %v2158
        %v2160 = vpop.f32.mrb[0].mxu0
        %v2161 = vadd.f32 0.0, %v2160
        %2162 = vmatprep.mubr.bf16.mxu0 0
        %2163 = vmatmul.mubr.bf16.gmra.mrb[0].mxu0 %v2086
        %v2164 = vpop.f32.mrb[0].mxu0
        %v2165 = vadd.f32 0.0, %v2164
        %v2166 = vpop.f32.mrb[0].mxu0
        %v2167 = vadd.f32 0.0, %v2166
        %v2168 = vpop.f32.mrb[0].mxu0
        %v2169 = vadd.f32 0.0, %v2168
        %v2170 = vpop.f32.mrb[0].mxu0
        %v2171 = vadd.f32 0.0, %v2170
        %2172 = vmatprep.mubr.bf16.mxu0 0
        %2173 = vmatmul.mubr.bf16.gmra.mrb[0].mxu0 %v2089
        %v2174 = vpop.f32.mrb[0].mxu0
        %v2175 = vadd.f32 0.0, %v2174
        %v2176 = vpop.f32.mrb[0].mxu0
        %v2177 = vadd.f32 0.0, %v2176
        %v2178 = vpop.f32.mrb[0].mxu0
        %v2179 = vadd.f32 0.0, %v2178
        %v2180 = vpop.f32.mrb[0].mxu0
        %v2181 = vadd.f32 0.0, %v2180
        %2182 = vmatprep.mubr.bf16.mxu0 0
        %2183 = vmatmul.mubr.bf16.gmra.mrb[0].mxu0 %v2092
        %v2184 = vpop.f32.mrb[0].mxu0
        %v2185 = vadd.f32 0.0, %v2184
        %v2186 = vpop.f32.mrb[0].mxu0
        %v2187 = vadd.f32 0.0, %v2186
        %v2188 = vpop.f32.mrb[0].mxu0
        %v2189 = vadd.f32 0.0, %v2188
        %v2190 = vpop.f32.mrb[0].mxu0
        %v2191 = vadd.f32 0.0, %v2190
        %2192 = vmatprep.mubr.bf16.mxu0 0
        %2193 = vmatmul.mubr.bf16.gmra.mrb[0].mxu0 %v2095
        %v2194 = vpop.f32.mrb[0].mxu0
        %v2195 = vadd.f32 0.0, %v2194
        %v2196 = vpop.f32.mrb[0].mxu0
        %v2197 = vadd.f32 0.0, %v2196
        %v2198 = vpop.f32.mrb[0].mxu0
        %v2199 = vadd.f32 0.0, %v2198
        %v2200 = vpop.f32.mrb[0].mxu0
        %v2201 = vadd.f32 0.0, %v2200
        %2202 = vmatprep.mubr.bf16.mxu0 0
        %2203 = vmatmul.mubr.bf16.gmra.mrb[0].mxu0 %v2098
        %v2204 = vpop.f32.mrb[0].mxu0
        %v2205 = vadd.f32 0.0, %v2204
        %v2206 = vpop.f32.mrb[0].mxu0
        %v2207 = vadd.f32 0.0, %v2206
        %v2208 = vpop.f32.mrb[0].mxu0
        %v2209 = vadd.f32 0.0, %v2208
        %v2210 = vpop.f32.mrb[0].mxu0
        %v2211 = vadd.f32 0.0, %v2210
        %2212 = vdwg.mxu0
        %v2213 = vpack.c.bf16 %v2139, %v2135
        %v2214 = vpack.c.bf16 %v2149, %v2145
        %v2215 = vpack.c.bf16 %v2159, %v2155
        %v2216 = vpack.c.bf16 %v2169, %v2165
        %v2217 = vpack.c.bf16 %v2179, %v2175
        %v2218 = vpack.c.bf16 %v2189, %v2185
        %v2219 = vpack.c.bf16 %v2199, %v2195
        %v2220 = vpack.c.bf16 %v2209, %v2205
        %2221 = vmatprep.subr.bf16.mxu0 0
        %2222 = vmatpush1.bf16.msra.mxu0 %v2213
        %2223 = vmatprep.subr.bf16.mxu0 0
        %2224 = vmatpush1.bf16.msra.mxu0 %v2214
        %2225 = vmatprep.subr.bf16.mxu0 0
        %2226 = vmatpush1.bf16.msra.mxu0 %v2215
        %2227 = vmatprep.subr.bf16.mxu0 0
        %2228 = vmatpush1.bf16.msra.mxu0 %v2216
        %2229 = vmatprep.subr.bf16.mxu0 0
        %2230 = vmatpush1.bf16.msra.mxu0 %v2217
        %2231 = vmatprep.subr.bf16.mxu0 0
        %2232 = vmatpush1.bf16.msra.mxu0 %v2218
        %2233 = vmatprep.subr.bf16.mxu0 0
        %2234 = vmatpush1.bf16.msra.mxu0 %v2219
        %2235 = vmatprep.subr.bf16.mxu0 0
        %2236 = vmatpush1.bf16.msra.mxu0 %v2220
        %2237 = vmatprep.subr.bf16.mxu0 0
        %2238 = vmatpush1.bf16.msra.mxu0 0
        %2239 = vmatprep.subr.bf16.mxu0 0
        %2240 = vmatpush1.bf16.msra.mxu0 0
        %2241 = vmatprep.subr.bf16.mxu0 0
        %2242 = vmatpush1.bf16.msra.mxu0 0
        %2243 = vmatprep.subr.bf16.mxu0 0
        %2244 = vmatpush1.bf16.msra.mxu0 0
        %2245 = vmatprep.subr.bf16.mxu0 0
        %2246 = vmatpush1.bf16.msra.mxu0 0
        %2247 = vmatprep.subr.bf16.mxu0 0
        %2248 = vmatpush1.bf16.msra.mxu0 0
        %2249 = vmatprep.subr.bf16.mxu0 0
        %2250 = vmatpush1.bf16.msra.mxu0 0
        %2251 = vmatprep.subr.bf16.mxu0 0
        %2252 = vmatpush1.bf16.msra.mxu0 0
        %2253 = vmatprep.mubr.bf16.mxu0 0
        %2254 = vmatmul.mubr.bf16.gmra.mrb[0].mxu0 %v834
        %v2255 = vpop.f32.mrb[0].mxu0
        %v2256 = vadd.f32 0.0, %v2255
        %v2257 = vpop.f32.mrb[0].mxu0
        %v2258 = vpop.f32.mrb[0].mxu0
        %v2259 = vadd.f32 0.0, %v2258
        %v2260 = vpop.f32.mrb[0].mxu0
        %2261 = vmatprep.mubr.bf16.mxu0 0
        %2262 = vmatmul.mubr.bf16.gmra.mrb[0].mxu0 %v835
        %v2263 = vpop.f32.mrb[0].mxu0
        %v2264 = vadd.f32 0.0, %v2263
        %v2265 = vpop.f32.mrb[0].mxu0
        %v2266 = vpop.f32.mrb[0].mxu0
        %v2267 = vadd.f32 0.0, %v2266
        %v2268 = vpop.f32.mrb[0].mxu0
        %2269 = vmatprep.mubr.bf16.mxu0 0
        %2270 = vmatmul.mubr.bf16.gmra.mrb[0].mxu0 %v836
        %v2271 = vpop.f32.mrb[0].mxu0
        %v2272 = vadd.f32 0.0, %v2271
        %v2273 = vpop.f32.mrb[0].mxu0
        %v2274 = vpop.f32.mrb[0].mxu0
        %v2275 = vadd.f32 0.0, %v2274
        %v2276 = vpop.f32.mrb[0].mxu0
        %2277 = vmatprep.mubr.bf16.mxu0 0
        %2278 = vmatmul.mubr.bf16.gmra.mrb[0].mxu0 %v837
        %v2279 = vpop.f32.mrb[0].mxu0
        %v2280 = vadd.f32 0.0, %v2279
        %v2281 = vpop.f32.mrb[0].mxu0
        %v2282 = vpop.f32.mrb[0].mxu0
        %v2283 = vadd.f32 0.0, %v2282
        %v2284 = vpop.f32.mrb[0].mxu0
        %2285 = vmatprep.mubr.bf16.mxu0 0
        %2286 = vmatmul.mubr.bf16.gmra.mrb[0].mxu0 %v838
        %v2287 = vpop.f32.mrb[0].mxu0
        %v2288 = vadd.f32 0.0, %v2287
        %v2289 = vpop.f32.mrb[0].mxu0
        %v2290 = vpop.f32.mrb[0].mxu0
        %v2291 = vadd.f32 0.0, %v2290
        %v2292 = vpop.f32.mrb[0].mxu0
        %2293 = vmatprep.mubr.bf16.mxu0 0
        %2294 = vmatmul.mubr.bf16.gmra.mrb[0].mxu0 %v839
        %v2295 = vpop.f32.mrb[0].mxu0
        %v2296 = vadd.f32 0.0, %v2295
        %v2297 = vpop.f32.mrb[0].mxu0
        %v2298 = vpop.f32.mrb[0].mxu0
        %v2299 = vadd.f32 0.0, %v2298
        %v2300 = vpop.f32.mrb[0].mxu0
        %2301 = vmatprep.mubr.bf16.mxu0 0
        %2302 = vmatmul.mubr.bf16.gmra.mrb[0].mxu0 %v840
        %v2303 = vpop.f32.mrb[0].mxu0
        %v2304 = vadd.f32 0.0, %v2303
        %v2305 = vpop.f32.mrb[0].mxu0
        %v2306 = vpop.f32.mrb[0].mxu0
        %v2307 = vadd.f32 0.0, %v2306
        %v2308 = vpop.f32.mrb[0].mxu0
        %2309 = vmatprep.mubr.bf16.mxu0 0
        %2310 = vmatmul.mubr.bf16.gmra.mrb[0].mxu0 %v841
        %v2311 = vpop.f32.mrb[0].mxu0
        %v2312 = vadd.f32 0.0, %v2311
        %v2313 = vpop.f32.mrb[0].mxu0
        %v2314 = vpop.f32.mrb[0].mxu0
        %v2315 = vadd.f32 0.0, %v2314
        %v2316 = vpop.f32.mrb[0].mxu0
        %2317 = vdwg.mxu0
        %v2318 = vunpack.c.l.bf16 %v2213
        %v2319 = vunpack.c.h.bf16 %v2213
        %v2320 = vunpack.c.l.bf16 %v2214
        %v2321 = vunpack.c.h.bf16 %v2214
        %v2322 = vunpack.c.l.bf16 %v2215
        %v2323 = vunpack.c.h.bf16 %v2215
        %v2324 = vunpack.c.l.bf16 %v2216
        %v2325 = vunpack.c.h.bf16 %v2216
        %v2326 = vunpack.c.l.bf16 %v2217
        %v2327 = vunpack.c.h.bf16 %v2217
        %v2328 = vunpack.c.l.bf16 %v2218
        %v2329 = vunpack.c.h.bf16 %v2218
        %v2330 = vunpack.c.l.bf16 %v2219
        %v2331 = vunpack.c.h.bf16 %v2219
        %v2332 = vunpack.c.l.bf16 %v2220
        %v2333 = vunpack.c.h.bf16 %v2220
        %v2334 = vsub.f32 %v2256, %v2318
        %v2335 = vsub.f32 %v2259, %v2319
        %v2336 = vsub.f32 %v2264, %v2320
        %v2337 = vsub.f32 %v2267, %v2321
        %v2338 = vsub.f32 %v2272, %v2322
        %v2339 = vsub.f32 %v2275, %v2323
        %v2340 = vsub.f32 %v2280, %v2324
        %v2341 = vsub.f32 %v2283, %v2325
        %v2342 = vsub.f32 %v2288, %v2326
        %v2343 = vsub.f32 %v2291, %v2327
        %v2344 = vsub.f32 %v2296, %v2328
        %v2345 = vsub.f32 %v2299, %v2329
        %v2346 = vsub.f32 %v2304, %v2330
        %v2347 = vsub.f32 %v2307, %v2331
        %v2348 = vsub.f32 %v2312, %v2332
        %v2349 = vsub.f32 %v2315, %v2333
        %2382 = vrot.lane.b32.xlu0 %v2135, 32
        %v2383 = vpop.permute.xlu0 %2382
        %2384 = vrot.lane.b32.xlu0 %v2137, 32
        %v2385 = vpop.permute.xlu0 %2384
        %2386 = vrot.lane.b32.xlu0 %v2139, 32
        %v2387 = vpop.permute.xlu0 %2386
        %2388 = vrot.lane.b32.xlu0 %v2141, 32
        %v2389 = vpop.permute.xlu0 %2388
        %2390 = vrot.lane.b32.xlu0 %v2145, 32
        %v2391 = vpop.permute.xlu0 %2390
        %2392 = vrot.lane.b32.xlu0 %v2147, 32
        %v2393 = vpop.permute.xlu0 %2392
        %2394 = vrot.lane.b32.xlu0 %v2149, 32
        %v2395 = vpop.permute.xlu0 %2394
        %2396 = vrot.lane.b32.xlu0 %v2151, 32
        %v2397 = vpop.permute.xlu0 %2396
        %2398 = vrot.lane.b32.xlu0 %v2155, 32
        %v2399 = vpop.permute.xlu0 %2398
        %2400 = vrot.lane.b32.xlu0 %v2157, 32
        %v2401 = vpop.permute.xlu0 %2400
        %2402 = vrot.lane.b32.xlu0 %v2159, 32
        %v2403 = vpop.permute.xlu0 %2402
        %2404 = vrot.lane.b32.xlu0 %v2161, 32
        %v2405 = vpop.permute.xlu0 %2404
        %2406 = vrot.lane.b32.xlu0 %v2165, 32
        %v2407 = vpop.permute.xlu0 %2406
        %2408 = vrot.lane.b32.xlu0 %v2167, 32
        %v2409 = vpop.permute.xlu0 %2408
        %2410 = vrot.lane.b32.xlu0 %v2169, 32
        %v2411 = vpop.permute.xlu0 %2410
        %2412 = vrot.lane.b32.xlu0 %v2171, 32
        %v2413 = vpop.permute.xlu0 %2412
        %2414 = vrot.lane.b32.xlu0 %v2175, 32
        %v2415 = vpop.permute.xlu0 %2414
        %2416 = vrot.lane.b32.xlu0 %v2177, 32
        %v2417 = vpop.permute.xlu0 %2416
        %2418 = vrot.lane.b32.xlu0 %v2179, 32
        %v2419 = vpop.permute.xlu0 %2418
        %2420 = vrot.lane.b32.xlu0 %v2181, 32
        %v2421 = vpop.permute.xlu0 %2420
        %2422 = vrot.lane.b32.xlu0 %v2185, 32
        %v2423 = vpop.permute.xlu0 %2422
        %2424 = vrot.lane.b32.xlu0 %v2187, 32
        %v2425 = vpop.permute.xlu0 %2424
        %2426 = vrot.lane.b32.xlu0 %v2189, 32
        %v2427 = vpop.permute.xlu0 %2426
        %2428 = vrot.lane.b32.xlu0 %v2191, 32
        %v2429 = vpop.permute.xlu0 %2428
        %2430 = vrot.lane.b32.xlu0 %v2195, 32
        %v2431 = vpop.permute.xlu0 %2430
        %2432 = vrot.lane.b32.xlu0 %v2197, 32
        %v2433 = vpop.permute.xlu0 %2432
        %2434 = vrot.lane.b32.xlu0 %v2199, 32
        %v2435 = vpop.permute.xlu0 %2434
        %2436 = vrot.lane.b32.xlu0 %v2201, 32
        %v2437 = vpop.permute.xlu0 %2436
        %2438 = vrot.lane.b32.xlu0 %v2205, 32
        %v2439 = vpop.permute.xlu0 %2438
        %2440 = vrot.lane.b32.xlu0 %v2207, 32
        %v2441 = vpop.permute.xlu0 %2440
        %2442 = vrot.lane.b32.xlu0 %v2209, 32
        %v2443 = vpop.permute.xlu0 %2442
        %2444 = vrot.lane.b32.xlu0 %v2211, 32
        %v2445 = vpop.permute.xlu0 %2444
        %v2446 = vsel %vm1066, %v2383, %v2385
        %v2447 = vsel %vm1066, %v2387, %v2389
        %v2448 = vsel %vm1066, %v2391, %v2393
        %v2449 = vsel %vm1066, %v2395, %v2397
        %v2450 = vsel %vm1066, %v2399, %v2401
        %v2451 = vsel %vm1066, %v2403, %v2405
        %v2452 = vsel %vm1066, %v2407, %v2409
        %v2453 = vsel %vm1066, %v2411, %v2413
        %v2454 = vsel %vm1066, %v2415, %v2417
        %v2455 = vsel %vm1066, %v2419, %v2421
        %v2456 = vsel %vm1066, %v2423, %v2425
        %v2457 = vsel %vm1066, %v2427, %v2429
        %v2458 = vsel %vm1066, %v2431, %v2433
        %v2459 = vsel %vm1066, %v2435, %v2437
        %v2460 = vsel %vm1066, %v2439, %v2441
        %v2461 = vsel %vm1066, %v2443, %v2445
        %v2478 = vadd.f32 %v2334, %v2446
        %v2479 = vadd.f32 %v2335, %v2447
        %v2480 = vadd.f32 %v2336, %v2448
        %v2481 = vadd.f32 %v2337, %v2449
        %v2482 = vadd.f32 %v2338, %v2450
        %v2483 = vadd.f32 %v2339, %v2451
        %v2484 = vadd.f32 %v2340, %v2452
        %v2485 = vadd.f32 %v2341, %v2453
        %v2486 = vadd.f32 %v2342, %v2454
        %v2487 = vadd.f32 %v2343, %v2455
        %v2488 = vadd.f32 %v2344, %v2456
        %v2489 = vadd.f32 %v2345, %v2457
        %v2490 = vadd.f32 %v2346, %v2458
        %v2491 = vadd.f32 %v2347, %v2459
        %v2492 = vadd.f32 %v2348, %v2460
        %v2493 = vadd.f32 %v2349, %v2461
        %v2494 = vadd.f32 %v2478, %v1489
        %v2495 = vadd.f32 %v2479, %v1489
        %v2496 = vadd.f32 %v2480, %v1489
        %v2497 = vadd.f32 %v2481, %v1489
        %v2498 = vadd.f32 %v2482, %v1489
        %v2499 = vadd.f32 %v2483, %v1489
        %v2500 = vadd.f32 %v2484, %v1489
        %v2501 = vadd.f32 %v2485, %v1489
        %v2502 = vadd.f32 %v2486, %v1489
        %v2503 = vadd.f32 %v2487, %v1489
        %v2504 = vadd.f32 %v2488, %v1489
        %v2505 = vadd.f32 %v2489, %v1489
        %v2506 = vadd.f32 %v2490, %v1489
        %v2507 = vadd.f32 %v2491, %v1489
        %v2508 = vadd.f32 %v2492, %v1489
        %v2509 = vadd.f32 %v2493, %v1489
        %v2510 = vxor.u32 %v2494, 2147483648
        %v2511 = vxor.u32 %v2495, 2147483648
        %v2512 = vxor.u32 %v2496, 2147483648
        %v2513 = vxor.u32 %v2497, 2147483648
        %v2514 = vxor.u32 %v2498, 2147483648
        %v2515 = vxor.u32 %v2499, 2147483648
        %v2516 = vxor.u32 %v2500, 2147483648
        %v2517 = vxor.u32 %v2501, 2147483648
        %v2518 = vxor.u32 %v2502, 2147483648
        %v2519 = vxor.u32 %v2503, 2147483648
        %v2520 = vxor.u32 %v2504, 2147483648
        %v2521 = vxor.u32 %v2505, 2147483648
        %v2522 = vxor.u32 %v2506, 2147483648
        %v2523 = vxor.u32 %v2507, 2147483648
        %v2524 = vxor.u32 %v2508, 2147483648
        %v2525 = vxor.u32 %v2509, 2147483648
        %v2526 = vmul.f32 %v2510, 1.442695
        %v2527 = vpow.pop %v2526
        %v2528 = vmul.f32 %v2511, 1.442695
        %v2529 = vpow.pop %v2528
        %v2530 = vmul.f32 %v2512, 1.442695
        %v2531 = vpow.pop %v2530
        %v2532 = vmul.f32 %v2513, 1.442695
        %v2533 = vpow.pop %v2532
        %v2534 = vmul.f32 %v2514, 1.442695
        %v2535 = vpow.pop %v2534
        %v2536 = vmul.f32 %v2515, 1.442695
        %v2537 = vpow.pop %v2536
        %v2538 = vmul.f32 %v2516, 1.442695
        %v2539 = vpow.pop %v2538
        %v2540 = vmul.f32 %v2517, 1.442695
        %v2541 = vpow.pop %v2540
        %v2542 = vmul.f32 %v2518, 1.442695
        %v2543 = vpow.pop %v2542
        %v2544 = vmul.f32 %v2519, 1.442695
        %v2545 = vpow.pop %v2544
        %v2546 = vmul.f32 %v2520, 1.442695
        %v2547 = vpow.pop %v2546
        %v2548 = vmul.f32 %v2521, 1.442695
        %v2549 = vpow.pop %v2548
        %v2550 = vmul.f32 %v2522, 1.442695
        %v2551 = vpow.pop %v2550
        %v2552 = vmul.f32 %v2523, 1.442695
        %v2553 = vpow.pop %v2552
        %v2554 = vmul.f32 %v2524, 1.442695
        %v2555 = vpow.pop %v2554
        %v2556 = vmul.f32 %v2525, 1.442695
        %v2557 = vpow.pop %v2556
        %v2558 = vadd.f32 %v2527, 1.0
        %v2559 = vadd.f32 %v2529, 1.0
        %v2560 = vadd.f32 %v2531, 1.0
        %v2561 = vadd.f32 %v2533, 1.0
        %v2562 = vadd.f32 %v2535, 1.0
        %v2563 = vadd.f32 %v2537, 1.0
        %v2564 = vadd.f32 %v2539, 1.0
        %v2565 = vadd.f32 %v2541, 1.0
        %v2566 = vadd.f32 %v2543, 1.0
        %v2567 = vadd.f32 %v2545, 1.0
        %v2568 = vadd.f32 %v2547, 1.0
        %v2569 = vadd.f32 %v2549, 1.0
        %v2570 = vadd.f32 %v2551, 1.0
        %v2571 = vadd.f32 %v2553, 1.0
        %v2572 = vadd.f32 %v2555, 1.0
        %v2573 = vadd.f32 %v2557, 1.0
        %v2574 = vrcp.pop %v2558
        %v2575 = vmul.f32 1.0, %v2574
        %v2576 = vrcp.pop %v2559
        %v2577 = vmul.f32 1.0, %v2576
        %v2578 = vrcp.pop %v2560
        %v2579 = vmul.f32 1.0, %v2578
        %v2580 = vrcp.pop %v2561
        %v2581 = vmul.f32 1.0, %v2580
        %v2582 = vrcp.pop %v2562
        %v2583 = vmul.f32 1.0, %v2582
        %v2584 = vrcp.pop %v2563
        %v2585 = vmul.f32 1.0, %v2584
        %v2586 = vrcp.pop %v2564
        %v2587 = vmul.f32 1.0, %v2586
        %v2588 = vrcp.pop %v2565
        %v2589 = vmul.f32 1.0, %v2588
        %v2590 = vrcp.pop %v2566
        %v2591 = vmul.f32 1.0, %v2590
        %v2592 = vrcp.pop %v2567
        %v2593 = vmul.f32 1.0, %v2592
        %v2594 = vrcp.pop %v2568
        %v2595 = vmul.f32 1.0, %v2594
        %v2596 = vrcp.pop %v2569
        %v2597 = vmul.f32 1.0, %v2596
        %v2598 = vrcp.pop %v2570
        %v2599 = vmul.f32 1.0, %v2598
        %v2600 = vrcp.pop %v2571
        %v2601 = vmul.f32 1.0, %v2600
        %v2602 = vrcp.pop %v2572
        %v2603 = vmul.f32 1.0, %v2602
        %v2604 = vrcp.pop %v2573
        %v2605 = vmul.f32 1.0, %v2604
        %v2606 = vadd.f32 %v2334, %v1609
        %v2607 = vadd.f32 %v2335, %v1609
        %v2608 = vadd.f32 %v2336, %v1609
        %v2609 = vadd.f32 %v2337, %v1609
        %v2610 = vadd.f32 %v2338, %v1609
        %v2611 = vadd.f32 %v2339, %v1609
        %v2612 = vadd.f32 %v2340, %v1609
        %v2613 = vadd.f32 %v2341, %v1609
        %v2614 = vadd.f32 %v2342, %v1609
        %v2615 = vadd.f32 %v2343, %v1609
        %v2616 = vadd.f32 %v2344, %v1609
        %v2617 = vadd.f32 %v2345, %v1609
        %v2618 = vadd.f32 %v2346, %v1609
        %v2619 = vadd.f32 %v2347, %v1609
        %v2620 = vadd.f32 %v2348, %v1609
        %v2621 = vadd.f32 %v2349, %v1609
        %v2622 = vadd.f32 %v2137, %v1633
        %v2623 = vadd.f32 %v2141, %v1633
        %v2624 = vadd.f32 %v2147, %v1633
        %v2625 = vadd.f32 %v2151, %v1633
        %v2626 = vadd.f32 %v2157, %v1633
        %v2627 = vadd.f32 %v2161, %v1633
        %v2628 = vadd.f32 %v2167, %v1633
        %v2629 = vadd.f32 %v2171, %v1633
        %v2630 = vadd.f32 %v2177, %v1633
        %v2631 = vadd.f32 %v2181, %v1633
        %v2632 = vadd.f32 %v2187, %v1633
        %v2633 = vadd.f32 %v2191, %v1633
        %v2634 = vadd.f32 %v2197, %v1633
        %v2635 = vadd.f32 %v2201, %v1633
        %v2636 = vadd.f32 %v2207, %v1633
        %v2637 = vadd.f32 %v2211, %v1633
        %2654 = vrot.lane.b32.xlu0 %v2622, 96
        %v2655 = vpop.permute.xlu0 %2654
        %2656 = vrot.lane.b32.xlu0 %v2623, 96
        %v2657 = vpop.permute.xlu0 %2656
        %2658 = vrot.lane.b32.xlu0 %v2624, 96
        %v2659 = vpop.permute.xlu0 %2658
        %2660 = vrot.lane.b32.xlu0 %v2625, 96
        %v2661 = vpop.permute.xlu0 %2660
        %2662 = vrot.lane.b32.xlu0 %v2626, 96
        %v2663 = vpop.permute.xlu0 %2662
        %2664 = vrot.lane.b32.xlu0 %v2627, 96
        %v2665 = vpop.permute.xlu0 %2664
        %2666 = vrot.lane.b32.xlu0 %v2628, 96
        %v2667 = vpop.permute.xlu0 %2666
        %2668 = vrot.lane.b32.xlu0 %v2629, 96
        %v2669 = vpop.permute.xlu0 %2668
        %2670 = vrot.lane.b32.xlu0 %v2630, 96
        %v2671 = vpop.permute.xlu0 %2670
        %2672 = vrot.lane.b32.xlu0 %v2631, 96
        %v2673 = vpop.permute.xlu0 %2672
        %2674 = vrot.lane.b32.xlu0 %v2632, 96
        %v2675 = vpop.permute.xlu0 %2674
        %2676 = vrot.lane.b32.xlu0 %v2633, 96
        %v2677 = vpop.permute.xlu0 %2676
        %2678 = vrot.lane.b32.xlu0 %v2634, 96
        %v2679 = vpop.permute.xlu0 %2678
        %2680 = vrot.lane.b32.xlu0 %v2635, 96
        %v2681 = vpop.permute.xlu0 %2680
        %2682 = vrot.lane.b32.xlu0 %v2636, 96
        %v2683 = vpop.permute.xlu0 %2682
        %2684 = vrot.lane.b32.xlu0 %v2637, 96
        %v2685 = vpop.permute.xlu0 %2684
        %v2702 = vmul.f32 %v2575, %v2655
        %v2703 = vmul.f32 %v2577, %v2657
        %v2704 = vmul.f32 %v2579, %v2659
        %v2705 = vmul.f32 %v2581, %v2661
        %v2706 = vmul.f32 %v2583, %v2663
        %v2707 = vmul.f32 %v2585, %v2665
        %v2708 = vmul.f32 %v2587, %v2667
        %v2709 = vmul.f32 %v2589, %v2669
        %v2710 = vmul.f32 %v2591, %v2671
        %v2711 = vmul.f32 %v2593, %v2673
        %v2712 = vmul.f32 %v2595, %v2675
        %v2713 = vmul.f32 %v2597, %v2677
        %v2714 = vmul.f32 %v2599, %v2679
        %v2715 = vmul.f32 %v2601, %v2681
        %v2716 = vmul.f32 %v2603, %v2683
        %v2717 = vmul.f32 %v2605, %v2685
        %2734 = vrot.lane.b32.xlu0 %v2702, 64
        %v2735 = vpop.permute.xlu0 %2734
        %2736 = vrot.lane.b32.xlu0 %v2703, 64
        %v2737 = vpop.permute.xlu0 %2736
        %2738 = vrot.lane.b32.xlu0 %v2704, 64
        %v2739 = vpop.permute.xlu0 %2738
        %2740 = vrot.lane.b32.xlu0 %v2705, 64
        %v2741 = vpop.permute.xlu0 %2740
        %2742 = vrot.lane.b32.xlu0 %v2706, 64
        %v2743 = vpop.permute.xlu0 %2742
        %2744 = vrot.lane.b32.xlu0 %v2707, 64
        %v2745 = vpop.permute.xlu0 %2744
        %2746 = vrot.lane.b32.xlu0 %v2708, 64
        %v2747 = vpop.permute.xlu0 %2746
        %2748 = vrot.lane.b32.xlu0 %v2709, 64
        %v2749 = vpop.permute.xlu0 %2748
        %2750 = vrot.lane.b32.xlu0 %v2710, 64
        %v2751 = vpop.permute.xlu0 %2750
        %2752 = vrot.lane.b32.xlu0 %v2711, 64
        %v2753 = vpop.permute.xlu0 %2752
        %2754 = vrot.lane.b32.xlu0 %v2712, 64
        %v2755 = vpop.permute.xlu0 %2754
        %2756 = vrot.lane.b32.xlu0 %v2713, 64
        %v2757 = vpop.permute.xlu0 %2756
        %2758 = vrot.lane.b32.xlu0 %v2714, 64
        %v2759 = vpop.permute.xlu0 %2758
        %2760 = vrot.lane.b32.xlu0 %v2715, 64
        %v2761 = vpop.permute.xlu0 %2760
        %2762 = vrot.lane.b32.xlu0 %v2716, 64
        %v2763 = vpop.permute.xlu0 %2762
        %2764 = vrot.lane.b32.xlu0 %v2717, 64
        %v2765 = vpop.permute.xlu0 %2764
        %v2782 = vadd.f32 %v2606, %v2735
        %v2783 = vadd.f32 %v2607, %v2737
        %v2784 = vadd.f32 %v2608, %v2739
        %v2785 = vadd.f32 %v2609, %v2741
        %v2786 = vadd.f32 %v2610, %v2743
        %v2787 = vadd.f32 %v2611, %v2745
        %v2788 = vadd.f32 %v2612, %v2747
        %v2789 = vadd.f32 %v2613, %v2749
        %v2790 = vadd.f32 %v2614, %v2751
        %v2791 = vadd.f32 %v2615, %v2753
        %v2792 = vadd.f32 %v2616, %v2755
        %v2793 = vadd.f32 %v2617, %v2757
        %v2794 = vadd.f32 %v2618, %v2759
        %v2795 = vadd.f32 %v2619, %v2761
        %v2796 = vadd.f32 %v2620, %v2763
        %v2797 = vadd.f32 %v2621, %v2765
        %v2798 = vtanh.pop %v2782
        %v2799 = vtanh.pop %v2783
        %v2800 = vtanh.pop %v2784
        %v2801 = vtanh.pop %v2785
        %v2802 = vtanh.pop %v2786
        %v2803 = vtanh.pop %v2787
        %v2804 = vtanh.pop %v2788
        %v2805 = vtanh.pop %v2789
        %v2806 = vtanh.pop %v2790
        %v2807 = vtanh.pop %v2791
        %v2808 = vtanh.pop %v2792
        %v2809 = vtanh.pop %v2793
        %v2810 = vtanh.pop %v2794
        %v2811 = vtanh.pop %v2795
        %v2812 = vtanh.pop %v2796
        %v2813 = vtanh.pop %v2797
        %v2814 = vsub.f32 1.0, %v2575
        %v2815 = vsub.f32 1.0, %v2577
        %v2816 = vsub.f32 1.0, %v2579
        %v2817 = vsub.f32 1.0, %v2581
        %v2818 = vsub.f32 1.0, %v2583
        %v2819 = vsub.f32 1.0, %v2585
        %v2820 = vsub.f32 1.0, %v2587
        %v2821 = vsub.f32 1.0, %v2589
        %v2822 = vsub.f32 1.0, %v2591
        %v2823 = vsub.f32 1.0, %v2593
        %v2824 = vsub.f32 1.0, %v2595
        %v2825 = vsub.f32 1.0, %v2597
        %v2826 = vsub.f32 1.0, %v2599
        %v2827 = vsub.f32 1.0, %v2601
        %v2828 = vsub.f32 1.0, %v2603
        %v2829 = vsub.f32 1.0, %v2605
        %2846 = vrot.lane.b32.xlu0 %v2798, 96
        %v2847 = vpop.permute.xlu0 %2846
        %2848 = vrot.lane.b32.xlu0 %v2799, 96
        %v2849 = vpop.permute.xlu0 %2848
        %2850 = vrot.lane.b32.xlu0 %v2800, 96
        %v2851 = vpop.permute.xlu0 %2850
        %2852 = vrot.lane.b32.xlu0 %v2801, 96
        %v2853 = vpop.permute.xlu0 %2852
        %2854 = vrot.lane.b32.xlu0 %v2802, 96
        %v2855 = vpop.permute.xlu0 %2854
        %2856 = vrot.lane.b32.xlu0 %v2803, 96
        %v2857 = vpop.permute.xlu0 %2856
        %2858 = vrot.lane.b32.xlu0 %v2804, 96
        %v2859 = vpop.permute.xlu0 %2858
        %2860 = vrot.lane.b32.xlu0 %v2805, 96
        %v2861 = vpop.permute.xlu0 %2860
        %2862 = vrot.lane.b32.xlu0 %v2806, 96
        %v2863 = vpop.permute.xlu0 %2862
        %2864 = vrot.lane.b32.xlu0 %v2807, 96
        %v2865 = vpop.permute.xlu0 %2864
        %2866 = vrot.lane.b32.xlu0 %v2808, 96
        %v2867 = vpop.permute.xlu0 %2866
        %2868 = vrot.lane.b32.xlu0 %v2809, 96
        %v2869 = vpop.permute.xlu0 %2868
        %2870 = vrot.lane.b32.xlu0 %v2810, 96
        %v2871 = vpop.permute.xlu0 %2870
        %2872 = vrot.lane.b32.xlu0 %v2811, 96
        %v2873 = vpop.permute.xlu0 %2872
        %2874 = vrot.lane.b32.xlu0 %v2812, 96
        %v2875 = vpop.permute.xlu0 %2874
        %2876 = vrot.lane.b32.xlu0 %v2813, 96
        %v2877 = vpop.permute.xlu0 %2876
        %v2894 = vmul.f32 %v2814, %v2847
        %v2895 = vmul.f32 %v2815, %v2849
        %v2896 = vmul.f32 %v2816, %v2851
        %v2897 = vmul.f32 %v2817, %v2853
        %v2898 = vmul.f32 %v2818, %v2855
        %v2899 = vmul.f32 %v2819, %v2857
        %v2900 = vmul.f32 %v2820, %v2859
        %v2901 = vmul.f32 %v2821, %v2861
        %v2902 = vmul.f32 %v2822, %v2863
        %v2903 = vmul.f32 %v2823, %v2865
        %v2904 = vmul.f32 %v2824, %v2867
        %v2905 = vmul.f32 %v2825, %v2869
        %v2906 = vmul.f32 %v2826, %v2871
        %v2907 = vmul.f32 %v2827, %v2873
        %v2908 = vmul.f32 %v2828, %v2875
        %v2909 = vmul.f32 %v2829, %v2877
        %v2910 = vmul.f32 %v2575, %v2003
        %v2911 = vmul.f32 %v2577, %v2004
        %v2912 = vmul.f32 %v2579, %v2005
        %v2913 = vmul.f32 %v2581, %v2006
        %v2914 = vmul.f32 %v2583, %v2007
        %v2915 = vmul.f32 %v2585, %v2008
        %v2916 = vmul.f32 %v2587, %v2009
        %v2917 = vmul.f32 %v2589, %v2010
        %v2918 = vmul.f32 %v2591, %v2011
        %v2919 = vmul.f32 %v2593, %v2012
        %v2920 = vmul.f32 %v2595, %v2013
        %v2921 = vmul.f32 %v2597, %v2014
        %v2922 = vmul.f32 %v2599, %v2015
        %v2923 = vmul.f32 %v2601, %v2016
        %v2924 = vmul.f32 %v2603, %v2017
        %v2925 = vmul.f32 %v2605, %v2018
        %v2926 = vadd.f32 %v2894, %v2910
        %v2927 = vadd.f32 %v2895, %v2911
        %v2928 = vadd.f32 %v2896, %v2912
        %v2929 = vadd.f32 %v2897, %v2913
        %v2930 = vadd.f32 %v2898, %v2914
        %v2931 = vadd.f32 %v2899, %v2915
        %v2932 = vadd.f32 %v2900, %v2916
        %v2933 = vadd.f32 %v2901, %v2917
        %v2934 = vadd.f32 %v2902, %v2918
        %v2935 = vadd.f32 %v2903, %v2919
        %v2936 = vadd.f32 %v2904, %v2920
        %v2937 = vadd.f32 %v2905, %v2921
        %v2938 = vadd.f32 %v2906, %v2922
        %v2939 = vadd.f32 %v2907, %v2923
        %v2940 = vadd.f32 %v2908, %v2924
        %v2941 = vadd.f32 %v2909, %v2925
        %vm2942 = vcmp.ge.f32.partialorder %v2926, 0.0
        %vm2943 = vcmp.ge.f32.partialorder %v2927, 0.0
        %vm2944 = vcmp.ge.f32.partialorder %v2928, 0.0
        %vm2945 = vcmp.ge.f32.partialorder %v2929, 0.0
        %vm2946 = vcmp.ge.f32.partialorder %v2930, 0.0
        %vm2947 = vcmp.ge.f32.partialorder %v2931, 0.0
        %vm2948 = vcmp.ge.f32.partialorder %v2932, 0.0
        %vm2949 = vcmp.ge.f32.partialorder %v2933, 0.0
        %vm2950 = vcmp.ge.f32.partialorder %v2934, 0.0
        %vm2951 = vcmp.ge.f32.partialorder %v2935, 0.0
        %vm2952 = vcmp.ge.f32.partialorder %v2936, 0.0
        %vm2953 = vcmp.ge.f32.partialorder %v2937, 0.0
        %vm2954 = vcmp.ge.f32.partialorder %v2938, 0.0
        %vm2955 = vcmp.ge.f32.partialorder %v2939, 0.0
        %vm2956 = vcmp.ge.f32.partialorder %v2940, 0.0
        %vm2957 = vcmp.ge.f32.partialorder %v2941, 0.0
        %v2958 = vmul.f32 %v2926, 0.01
        %v2959 = vmul.f32 %v2927, 0.01
        %v2960 = vmul.f32 %v2928, 0.01
        %v2961 = vmul.f32 %v2929, 0.01
        %v2962 = vmul.f32 %v2930, 0.01
        %v2963 = vmul.f32 %v2931, 0.01
        %v2964 = vmul.f32 %v2932, 0.01
        %v2965 = vmul.f32 %v2933, 0.01
        %v2966 = vmul.f32 %v2934, 0.01
        %v2967 = vmul.f32 %v2935, 0.01
        %v2968 = vmul.f32 %v2936, 0.01
        %v2969 = vmul.f32 %v2937, 0.01
        %v2970 = vmul.f32 %v2938, 0.01
        %v2971 = vmul.f32 %v2939, 0.01
        %v2972 = vmul.f32 %v2940, 0.01
        %v2973 = vmul.f32 %v2941, 0.01
        %v2974 = vsel %vm2942, %v2926, %v2958
        %v2975 = vsel %vm2943, %v2927, %v2959
        %v2976 = vsel %vm2944, %v2928, %v2960
        %v2977 = vsel %vm2945, %v2929, %v2961
        %v2978 = vsel %vm2946, %v2930, %v2962
        %v2979 = vsel %vm2947, %v2931, %v2963
        %v2980 = vsel %vm2948, %v2932, %v2964
        %v2981 = vsel %vm2949, %v2933, %v2965
        %v2982 = vsel %vm2950, %v2934, %v2966
        %v2983 = vsel %vm2951, %v2935, %v2967
        %v2984 = vsel %vm2952, %v2936, %v2968
        %v2985 = vsel %vm2953, %v2937, %v2969
        %v2986 = vsel %vm2954, %v2938, %v2970
        %v2987 = vsel %vm2955, %v2939, %v2971
        %v2988 = vsel %vm2956, %v2940, %v2972
        %v2989 = vsel %vm2957, %v2941, %v2973
        %v2990 = vadd.f32 %v2974, %v1940
        %v2991 = vadd.f32 %v2975, %v1942
        %v2992 = vadd.f32 %v2976, %v1944
        %v2993 = vadd.f32 %v2977, %v1946
        %v2994 = vadd.f32 %v2978, %v1948
        %v2995 = vadd.f32 %v2979, %v1950
        %v2996 = vadd.f32 %v2980, %v1952
        %v2997 = vadd.f32 %v2981, %v1954
        %v2998 = vadd.f32 %v2982, %v1956
        %v2999 = vadd.f32 %v2983, %v1958
        %v3000 = vadd.f32 %v2984, %v1960
        %v3001 = vadd.f32 %v2985, %v1962
        %v3002 = vadd.f32 %v2986, %v1964
        %v3003 = vadd.f32 %v2987, %v1966
        %v3004 = vadd.f32 %v2988, %v1968
        %v3005 = vadd.f32 %v2989, %v1970
        %v3006 = vpack.c.bf16 %v2991, %v2990
        %v3007 = vpack.c.bf16 %v2993, %v2992
        %v3008 = vpack.c.bf16 %v2995, %v2994
        %v3009 = vpack.c.bf16 %v2997, %v2996
        %v3010 = vpack.c.bf16 %v2999, %v2998
        %v3011 = vpack.c.bf16 %v3001, %v3000
        %v3012 = vpack.c.bf16 %v3003, %v3002
        %v3013 = vpack.c.bf16 %v3005, %v3004
        %v3014 = vld [vmem:[%s9] sm:$0xf]
        %v3015 = vld [vmem:[%s9 + $0x4] sm:$0xf]
        %v3016 = vld [vmem:[%s9 + $0x8] sm:$0xf]
        %v3017 = vld [vmem:[%s9 + $0xc] sm:$0xf]
        %v3018 = vld [vmem:[%s10] sm:$0x1]
        %v3020 = vlaneseq
        %v3021 = vshrl.u32 %v3020, 7
        %v3022 = vsub.s32 0, %v3021
        %v3023 = vrot.slane %v3018, %v3022
        %3033 = vrot.lane.b32.xlu0 %v3006, 96
        %v3034 = vpop.permute.xlu0 %3033
        %3035 = vrot.lane.b32.xlu0 %v3007, 96
        %v3036 = vpop.permute.xlu0 %3035
        %3037 = vrot.lane.b32.xlu0 %v3008, 96
        %v3038 = vpop.permute.xlu0 %3037
        %3039 = vrot.lane.b32.xlu0 %v3009, 96
        %v3040 = vpop.permute.xlu0 %3039
        %3041 = vrot.lane.b32.xlu0 %v3010, 96
        %v3042 = vpop.permute.xlu0 %3041
        %3043 = vrot.lane.b32.xlu0 %v3011, 96
        %v3044 = vpop.permute.xlu0 %3043
        %3045 = vrot.lane.b32.xlu0 %v3012, 96
        %v3046 = vpop.permute.xlu0 %3045
        %3047 = vrot.lane.b32.xlu0 %v3013, 96
        %v3048 = vpop.permute.xlu0 %3047
        %v3053 = vunpack.c.l.b16 %v3014
        %v3054 = vunpack.c.l.b16 %v3015
        %v3055 = vunpack.c.l.b16 %v3016
        %v3056 = vunpack.c.l.b16 %v3017
        %v3057 = vpack.c.b16 %v3054, %v3053
        %v3058 = vpack.c.b16 %v3056, %v3055
        %v3062 = vsel %vm1066, %v3034, 0
        %v3065 = vsel %vm1066, %v3036, 0
        %v3068 = vsel %vm1066, %v3038, 0
        %v3071 = vsel %vm1066, %v3040, 0
        %v3074 = vsel %vm1066, %v3042, 0
        %v3077 = vsel %vm1066, %v3044, 0
        %v3080 = vsel %vm1066, %v3046, 0
        %v3083 = vsel %vm1066, %v3048, 0
        %3085 = vmatprep.subr.bf16.mxu0 0
        %3086 = vmatpush1.bf16.msra.mxu0 %v3057
        %3087 = vmatprep.subr.bf16.mxu0 0
        %3088 = vmatpush1.bf16.msra.mxu0 %v3058
        %3089 = vmatprep.subr.bf16.mxu0 0
        %3090 = vmatpush1.bf16.msra.mxu0 0
        %3091 = vmatprep.subr.bf16.mxu0 0
        %3092 = vmatpush1.bf16.msra.mxu0 0
        %3093 = vmatprep.subr.bf16.mxu0 0
        %3094 = vmatpush1.bf16.msra.mxu0 0
        %3095 = vmatprep.subr.bf16.mxu0 0
        %3096 = vmatpush1.bf16.msra.mxu0 0
        %3097 = vmatprep.subr.bf16.mxu0 0
        %3098 = vmatpush1.bf16.msra.mxu0 0
        %3099 = vmatprep.subr.bf16.mxu0 0
        %3100 = vmatpush1.bf16.msra.mxu0 0
        %3101 = vmatprep.subr.bf16.mxu0 0
        %3102 = vmatpush1.bf16.msra.mxu0 0
        %3103 = vmatprep.subr.bf16.mxu0 0
        %3104 = vmatpush1.bf16.msra.mxu0 0
        %3105 = vmatprep.subr.bf16.mxu0 0
        %3106 = vmatpush1.bf16.msra.mxu0 0
        %3107 = vmatprep.subr.bf16.mxu0 0
        %3108 = vmatpush1.bf16.msra.mxu0 0
        %3109 = vmatprep.subr.bf16.mxu0 0
        %3110 = vmatpush1.bf16.msra.mxu0 0
        %3111 = vmatprep.subr.bf16.mxu0 0
        %3112 = vmatpush1.bf16.msra.mxu0 0
        %3113 = vmatprep.subr.bf16.mxu0 0
        %3114 = vmatpush1.bf16.msra.mxu0 0
        %3115 = vmatprep.subr.bf16.mxu0 0
        %3116 = vmatpush1.bf16.msra.mxu0 0
        %3117 = vmatprep.mubr.bf16.mxu0 0
        %3118 = vmatmul.mubr.bf16.gmra.mrb[0].mxu0 %v3062
        %v3119 = vpop.f32.mrb[0].mxu0
        %v3120 = vadd.f32 %v3023, %v3119
        %v3121 = vpop.f32.mrb[0].mxu0
        %v3122 = vpop.f32.mrb[0].mxu0
        %v3123 = vadd.f32 %v3023, %v3122
        %v3124 = vpop.f32.mrb[0].mxu0
        %3125 = vmatprep.mubr.bf16.mxu0 0
        %3126 = vmatmul.mubr.bf16.gmra.mrb[0].mxu0 %v3065
        %v3127 = vpop.f32.mrb[0].mxu0
        %v3128 = vadd.f32 %v3023, %v3127
        %v3129 = vpop.f32.mrb[0].mxu0
        %v3130 = vpop.f32.mrb[0].mxu0
        %v3131 = vadd.f32 %v3023, %v3130
        %v3132 = vpop.f32.mrb[0].mxu0
        %3133 = vmatprep.mubr.bf16.mxu0 0
        %3134 = vmatmul.mubr.bf16.gmra.mrb[0].mxu0 %v3068
        %v3135 = vpop.f32.mrb[0].mxu0
        %v3136 = vadd.f32 %v3023, %v3135
        %v3137 = vpop.f32.mrb[0].mxu0
        %v3138 = vpop.f32.mrb[0].mxu0
        %v3139 = vadd.f32 %v3023, %v3138
        %v3140 = vpop.f32.mrb[0].mxu0
        %3141 = vmatprep.mubr.bf16.mxu0 0
        %3142 = vmatmul.mubr.bf16.gmra.mrb[0].mxu0 %v3071
        %v3143 = vpop.f32.mrb[0].mxu0
        %v3144 = vadd.f32 %v3023, %v3143
        %v3145 = vpop.f32.mrb[0].mxu0
        %v3146 = vpop.f32.mrb[0].mxu0
        %v3147 = vadd.f32 %v3023, %v3146
        %v3148 = vpop.f32.mrb[0].mxu0
        %3149 = vmatprep.mubr.bf16.mxu0 0
        %3150 = vmatmul.mubr.bf16.gmra.mrb[0].mxu0 %v3074
        %v3151 = vpop.f32.mrb[0].mxu0
        %v3152 = vadd.f32 %v3023, %v3151
        %v3153 = vpop.f32.mrb[0].mxu0
        %v3154 = vpop.f32.mrb[0].mxu0
        %v3155 = vadd.f32 %v3023, %v3154
        %v3156 = vpop.f32.mrb[0].mxu0
        %3157 = vmatprep.mubr.bf16.mxu0 0
        %3158 = vmatmul.mubr.bf16.gmra.mrb[0].mxu0 %v3077
        %v3159 = vpop.f32.mrb[0].mxu0
        %v3160 = vadd.f32 %v3023, %v3159
        %v3161 = vpop.f32.mrb[0].mxu0
        %v3162 = vpop.f32.mrb[0].mxu0
        %v3163 = vadd.f32 %v3023, %v3162
        %v3164 = vpop.f32.mrb[0].mxu0
        %3165 = vmatprep.mubr.bf16.mxu0 0
        %3166 = vmatmul.mubr.bf16.gmra.mrb[0].mxu0 %v3080
        %v3167 = vpop.f32.mrb[0].mxu0
        %v3168 = vadd.f32 %v3023, %v3167
        %v3169 = vpop.f32.mrb[0].mxu0
        %v3170 = vpop.f32.mrb[0].mxu0
        %v3171 = vadd.f32 %v3023, %v3170
        %v3172 = vpop.f32.mrb[0].mxu0
        %3173 = vmatprep.mubr.bf16.mxu0 0
        %3174 = vmatmul.mubr.bf16.gmra.mrb[0].mxu0 %v3083
        %v3175 = vpop.f32.mrb[0].mxu0
        %v3176 = vadd.f32 %v3023, %v3175
        %v3177 = vpop.f32.mrb[0].mxu0
        %v3178 = vpop.f32.mrb[0].mxu0
        %v3179 = vadd.f32 %v3023, %v3178
        %v3180 = vpop.f32.mrb[0].mxu0
        %3181 = vdwg.mxu0
        %vm3182 = vcmp.ge.f32.partialorder %v3120, 0.0
        %vm3183 = vcmp.ge.f32.partialorder %v3123, 0.0
        %vm3184 = vcmp.ge.f32.partialorder %v3128, 0.0
        %vm3185 = vcmp.ge.f32.partialorder %v3131, 0.0
        %vm3186 = vcmp.ge.f32.partialorder %v3136, 0.0
        %vm3187 = vcmp.ge.f32.partialorder %v3139, 0.0
        %vm3188 = vcmp.ge.f32.partialorder %v3144, 0.0
        %vm3189 = vcmp.ge.f32.partialorder %v3147, 0.0
        %vm3190 = vcmp.ge.f32.partialorder %v3152, 0.0
        %vm3191 = vcmp.ge.f32.partialorder %v3155, 0.0
        %vm3192 = vcmp.ge.f32.partialorder %v3160, 0.0
        %vm3193 = vcmp.ge.f32.partialorder %v3163, 0.0
        %vm3194 = vcmp.ge.f32.partialorder %v3168, 0.0
        %vm3195 = vcmp.ge.f32.partialorder %v3171, 0.0
        %vm3196 = vcmp.ge.f32.partialorder %v3176, 0.0
        %vm3197 = vcmp.ge.f32.partialorder %v3179, 0.0
        %v3198 = vmul.f32 %v3120, 0.01
        %v3199 = vmul.f32 %v3123, 0.01
        %v3200 = vmul.f32 %v3128, 0.01
        %v3201 = vmul.f32 %v3131, 0.01
        %v3202 = vmul.f32 %v3136, 0.01
        %v3203 = vmul.f32 %v3139, 0.01
        %v3204 = vmul.f32 %v3144, 0.01
        %v3205 = vmul.f32 %v3147, 0.01
        %v3206 = vmul.f32 %v3152, 0.01
        %v3207 = vmul.f32 %v3155, 0.01
        %v3208 = vmul.f32 %v3160, 0.01
        %v3209 = vmul.f32 %v3163, 0.01
        %v3210 = vmul.f32 %v3168, 0.01
        %v3211 = vmul.f32 %v3171, 0.01
        %v3212 = vmul.f32 %v3176, 0.01
        %v3213 = vmul.f32 %v3179, 0.01
        %v3214 = vsel %vm3182, %v3120, %v3198
        %v3215 = vsel %vm3183, %v3123, %v3199
        %v3216 = vsel %vm3184, %v3128, %v3200
        %v3217 = vsel %vm3185, %v3131, %v3201
        %v3218 = vsel %vm3186, %v3136, %v3202
        %v3219 = vsel %vm3187, %v3139, %v3203
        %v3220 = vsel %vm3188, %v3144, %v3204
        %v3221 = vsel %vm3189, %v3147, %v3205
        %v3222 = vsel %vm3190, %v3152, %v3206
        %v3223 = vsel %vm3191, %v3155, %v3207
        %v3224 = vsel %vm3192, %v3160, %v3208
        %v3225 = vsel %vm3193, %v3163, %v3209
        %v3226 = vsel %vm3194, %v3168, %v3210
        %v3227 = vsel %vm3195, %v3171, %v3211
        %v3228 = vsel %vm3196, %v3176, %v3212
        %v3229 = vsel %vm3197, %v3179, %v3213
        %3230 = vxpose.xlu0.b32.start [1/16] %v3214, 128
        %3231 = vxpose.xlu0.b32.cont [2/16] %v3215, 128
        %3232 = vxpose.xlu0.b32.cont [3/16] %v3216, 128
        %3233 = vxpose.xlu0.b32.cont [4/16] %v3217, 128
        %3234 = vxpose.xlu0.b32.cont [5/16] %v3218, 128
        %3235 = vxpose.xlu0.b32.cont [6/16] %v3219, 128
        %3236 = vxpose.xlu0.b32.cont [7/16] %v3220, 128
        %3237 = vxpose.xlu0.b32.cont [8/16] %v3221, 128
        %3238 = vxpose.xlu0.b32.cont [9/16] %v3222, 128
        %3239 = vxpose.xlu0.b32.cont [10/16] %v3223, 128
        %3240 = vxpose.xlu0.b32.cont [11/16] %v3224, 128
        %3241 = vxpose.xlu0.b32.cont [12/16] %v3225, 128
        %3242 = vxpose.xlu0.b32.cont [13/16] %v3226, 128
        %3243 = vxpose.xlu0.b32.cont [14/16] %v3227, 128
        %3244 = vxpose.xlu0.b32.cont [15/16] %v3228, 128
        %3245 = vxpose.xlu0.b32.end [16/16] %v3229, 128
        %v3246 = vpop.trf.xlu0
        %v3247 = vpop.trf.xlu0
        %v3248 = vpop.trf.xlu0
        %v3249 = vpop.trf.xlu0
        %v3250 = vpop.trf.xlu0
        %v3251 = vpop.trf.xlu0
        %v3252 = vpop.trf.xlu0
        %v3253 = vpop.trf.xlu0
        %v3254 = vpop.trf.xlu0
        %v3255 = vpop.trf.xlu0
        %v3256 = vpop.trf.xlu0
        %v3257 = vpop.trf.xlu0
        %v3258 = vpop.trf.xlu0
        %v3259 = vpop.trf.xlu0
        %v3260 = vpop.trf.xlu0
        %v3261 = vpop.trf.xlu0
        %v3262 = vpack.c.bf16 %v3247, %v3246
        %v3263 = vpack.c.bf16 %v3249, %v3248
        %v3264 = vld [vmem:[%s11] sm:$0xf]
        %v3265 = vld [vmem:[%s12] sm:$0xff]
        %3267 = vset.pattern.permute.xlu0 0
        %3268 = vperm.xlu0 %3267, %v3265
        %v3269 = vpop.permute.xlu0 %3268
        %v3272 = vsel %vm1066, %v3264, 0
        %3274 = vmatprep.subr.bf16.mxu0 0
        %3275 = vmatpush1.bf16.msra.mxu0 %v3262
        %3276 = vmatprep.subr.bf16.mxu0 0
        %3277 = vmatpush1.bf16.msra.mxu0 %v3263
        %3278 = vmatprep.subr.bf16.mxu0 0
        %3279 = vmatpush1.bf16.msra.mxu0 0
        %3280 = vmatprep.subr.bf16.mxu0 0
        %3281 = vmatpush1.bf16.msra.mxu0 0
        %3282 = vmatprep.subr.bf16.mxu0 0
        %3283 = vmatpush1.bf16.msra.mxu0 0
        %3284 = vmatprep.subr.bf16.mxu0 0
        %3285 = vmatpush1.bf16.msra.mxu0 0
        %3286 = vmatprep.subr.bf16.mxu0 0
        %3287 = vmatpush1.bf16.msra.mxu0 0
        %3288 = vmatprep.subr.bf16.mxu0 0
        %3289 = vmatpush1.bf16.msra.mxu0 0
        %3290 = vmatprep.subr.bf16.mxu0 0
        %3291 = vmatpush1.bf16.msra.mxu0 0
        %3292 = vmatprep.subr.bf16.mxu0 0
        %3293 = vmatpush1.bf16.msra.mxu0 0
        %3294 = vmatprep.subr.bf16.mxu0 0
        %3295 = vmatpush1.bf16.msra.mxu0 0
        %3296 = vmatprep.subr.bf16.mxu0 0
        %3297 = vmatpush1.bf16.msra.mxu0 0
        %3298 = vmatprep.subr.bf16.mxu0 0
        %3299 = vmatpush1.bf16.msra.mxu0 0
        %3300 = vmatprep.subr.bf16.mxu0 0
        %3301 = vmatpush1.bf16.msra.mxu0 0
        %3302 = vmatprep.subr.bf16.mxu0 0
        %3303 = vmatpush1.bf16.msra.mxu0 0
        %3304 = vmatprep.subr.bf16.mxu0 0
        %3305 = vmatpush1.bf16.msra.mxu0 0
        %3306 = vmatprep.mubr.bf16.mxu0 0
        %3307 = vmatmul.mubr.bf16.gmra.mrb[0].mxu0 %v3272
        %v3308 = vpop.f32.mrb[0].mxu0
        %v3309 = vadd.f32 %v3269, %v3308
        %v3310 = vpop.f32.mrb[0].mxu0
        %v3311 = vpop.f32.mrb[0].mxu0
        %v3312 = vpop.f32.mrb[0].mxu0
        %3313 = vdwg.mxu0
        %3314 = vst [vmem:[%s463] sm:$0xff] %v3309
        %s3315 = sand.u32 %s323, 1
        %s3316 = scalar_lea.sflag [#allocation3], %s3315
        %s3317 = sand.u32 %s323, 1
        %s3318 = smul.addr %s3317, 8
        %s3319 = scalar_lea.vmem [#allocation2], %s3318
        // Predicated region
        $region73: #{tpu_custom_call.1} parent=71 // pred_check
          %p3320 = pneg %p333
        $region74: #{tpu_custom_call.1} parent=71 // pred_check_branch
          %3322 = sbr.rel (%p3320) target = $region76
        $region75: #{tpu_custom_call.1} parent=71 // pred_region
          %s3324 = ssub.s32 128, 128
          %3325 = vsyncadd %s3316, %s3324
          %s3326 = smul.addr %s27, 128
          %s3327 = scalar_lea.hbm %s13, %s3326
          %s3329 = sshll.u32 %s3319, 4
          %s3330 = int_to_ptr.vmem [resolvable:$true] %s3329
          %3332 = dma.vmem_to_hbm [thread:$0]  %s3330, 128, %s3327, %s3316
        $region76: #{tpu_custom_call.1} parent=71 // pred_fallthru
          _
      $region72: #{tpu_custom_call.1} parent=5 // pred_fallthru
        _
      %p3333 = scmp.le.s32.totalorder 2, %s22
      // Predicated region
      $region77: #{tpu_custom_call.1} parent=5 // pred_check
        %p3334 = pneg %p3333
      $region78: #{tpu_custom_call.1} parent=5 // pred_check_branch
        %3336 = sbr.rel (%p3334) target = $region80
      $region79: #{tpu_custom_call.1} parent=5 // pred_region
        %s3337 = ssub.s32 %s22, 2
        // Predicated region
        $region81: #{tpu_custom_call.1} parent=79 // pred_check
          %p3338 = pneg %p339
        $region82: #{tpu_custom_call.1} parent=79 // pred_check_branch
          %3340 = sbr.rel (%p3338) target = $region84
        $region83: #{tpu_custom_call.1} parent=79 // pred_region
          %s3341 = sand.u32 %s324, 1
          %s3342 = scalar_lea.sflag [#allocation3], %s3341
          %s3343 = sand.u32 %s324, 1
          %s3344 = smul.addr %s3343, 8
          %s3345 = scalar_lea.vmem [#allocation2], %s3344
          %3346 = dma.done %s3342, 128
        $region84: #{tpu_custom_call.1} parent=79 // pred_fallthru
          _
      $region80: #{tpu_custom_call.1} parent=5 // pred_fallthru
        _
    $region6: #{tpu_custom_call.1} parent=1 // loop_footer
      %s26 = sadd.s32 1, %s22
    $region7: #{tpu_custom_call.1} parent=1 // loop_footer_branch
      %21 = sbr.rel target = $region3
    $region8: #{tpu_custom_call.1} parent=1 // loop_exit
      _
    %3347 = vsyncpa [#allocation3], 1
    %s3348 = scalar_lea.sflag [#allocation3], 1
    %3349 = vsyncpa %s3348, 1

</llo_original>
